<compile_context>
chip_gen: v7x
topology: tpu7x:2x2x1
jax: 0.10.0
libtpu: 0.0.40
codegen_flags: <defaults>
</compile_context>

<pallas_src>
import functools
import math

import jax
import jax.numpy as jnp
from jax.experimental import pallas as pl
from jax.experimental.pallas import tpu as pltpu


def _proj_kernel(x_ref, w_ref, b_ref, o_ref, *, channels, compute_dtype):
    # x_ref: (TB, C, N)  w_ref: (C, N, M)  b_ref: (1, C*M)  o_ref: (TB, C*M)
    bias_row = b_ref[...].astype(jnp.float32)  # hoisted once, outside channel loop
    outs = []
    # C is a small static constant -> this Python loop is fully unrolled at trace time.
    for c in range(channels):
        xc = x_ref[:, c, :].astype(compute_dtype)   # (TB, N)
        wc = w_ref[c].astype(compute_dtype)         # (N, M)
        outs.append(jnp.dot(xc, wc, preferred_element_type=jnp.float32))
    acc = jnp.concatenate(outs, axis=-1) + bias_row  # (TB, C*M) lane-dense slab
    o_ref[...] = acc.astype(o_ref.dtype)             # single unmasked-friendly store


def _choose_block_b(batch, channels, n, m, itemsize, budget_bytes=20 * 1024 * 1024):
    """Largest B-tile (<=512, multiple of 8) dividing B that fits double-buffered VMEM."""
    for tb in (512, 256, 128, 64, 32, 16, 8):
        if tb <= batch and batch % tb == 0:
            # double-buffered x block + out block (weight/bias are tiny & resident)
            if 2 * tb * channels * (n + m) * itemsize <= budget_bytes:
                return tb
    return batch  # block equals full leading dim -> always layout-legal


def multi_channel_proj(x, weight, bias, *, block_b=None, compute_dtype=jnp.bfloat16):
    """x: (B, C, N), weight: (C, N, M), bias: (C, M) -> (B, C, M)."""
    B, C, N = x.shape
    Cw, Nw, M = weight.shape
    assert (C, N) == (Cw, Nw) and bias.shape == (C, M)

    itemsize = jnp.dtype(x.dtype).itemsize
    if block_b is None:
        block_b = _choose_block_b(B, C, N, M, itemsize)
    assert B % block_b == 0, "block_b must divide the batch dimension"
    grid = (B // block_b,)

    bias_flat = bias.reshape(1, C * M)  # contiguous flatten, no transpose

    kernel = functools.partial(_proj_kernel, channels=C, compute_dtype=compute_dtype)

    out_flat = pl.pallas_call(
        kernel,
        out_shape=jax.ShapeDtypeStruct((B, C * M), x.dtype),
        grid_spec=pltpu.PrefetchScalarGridSpec(
            num_scalar_prefetch=0,
            grid=grid,
            in_specs=[
                # x: tile over B, full (C, N) trailing dims (layout-legal).
                pl.BlockSpec((block_b, C, N), lambda i: (i, 0, 0)),
                # weight: constant block index -> resident in VMEM across the grid.
                pl.BlockSpec((C, N, M), lambda i: (0, 0, 0)),
                # bias: constant block index -> resident, no per-step tiny DMA.
                pl.BlockSpec((1, C * M), lambda i: (0, 0)),
            ],
            out_specs=pl.BlockSpec((block_b, C * M), lambda i: (i, 0)),
        ),
        compiler_params=pltpu.CompilerParams(
            dimension_semantics=("parallel",),          # B-tiles shard across cores
            vmem_limit_bytes=40 * 1024 * 1024,          # above default scoped limit,
                                                        # below v7x 64 MiB physical
        ),
    )(x, weight, bias_flat)

    return out_flat.reshape(B, C, M)  # contiguous unflatten, no transpose


def init_params(key, channels, in_dim, out_dim, dtype=jnp.float32):
    """Matches reset_parameters: xavier_uniform over last two dims with
    relu gain (sqrt(2)), bias zeros."""
    gain = math.sqrt(2.0)  # calculate_gain('relu')
    std = gain * math.sqrt(2.0 / float(in_dim + out_dim))
    a = math.sqrt(3.0) * std
    weight = jax.random.uniform(
        key, (channels, in_dim, out_dim), dtype=dtype, minval=-a, maxval=a)
    bias = jnp.zeros((channels, out_dim), dtype=dtype)
    return weight, bias


if __name__ == "__main__":
    B, C, N, M = 256, 4, 32, 16

    key = jax.random.PRNGKey(0)
    kx, kw, kb = jax.random.split(key, 3)

    x = jax.random.normal(kx, (B, C, N), dtype=jnp.float32)
    weight, _ = init_params(kw, C, N, M)
    # non-zero bias so the bias path is actually exercised in the check
    bias = 0.1 * jax.random.normal(kb, (C, M), dtype=jnp.float32)

    out = multi_channel_proj(x, weight, bias)                    # auto B-tile
    out_tiled = multi_channel_proj(x, weight, bias, block_b=64)  # multi-step grid path
    out = jax.block_until_ready(out)
    out_tiled = jax.block_until_ready(out_tiled)

    # Reference with the same bf16 MXU operand rounding + f32 accumulation.
    x_r = x.astype(jnp.bfloat16).astype(jnp.float32)
    w_r = weight.astype(jnp.bfloat16).astype(jnp.float32)
    ref = jnp.einsum("bcn,cnm->bcm", x_r, w_r) + bias

    assert out.shape == (B, C, M)
    assert jnp.allclose(out, ref, atol=1e-3, rtol=1e-3)
    assert jnp.allclose(out_tiled, ref, atol=1e-3, rtol=1e-3)

    print("KERNEL_OK")
</pallas_src>

<mosaic_0001>
module attributes {stable_mosaic.version = 11 : i64} {
  func.func @_proj_kernel(%arg0: i32, %arg1: memref<256x4x32xf32, #tpu.memory_space<vmem>>, %arg2: memref<4x32x16xf32, #tpu.memory_space<vmem>>, %arg3: memref<1x64xf32, #tpu.memory_space<vmem>>, %arg4: memref<256x64xf32, #tpu.memory_space<vmem>>) attributes {dimension_semantics = [#tpu.dimension_semantics<parallel>], iteration_bounds = array<i64: 1>, scalar_prefetch = 0 : i64, scratch_operands = 0 : i64, tpu.core_type = #tpu.core_type<tc>, window_params = [{transform_indices = @transform_0, window_bounds = array<i64: 256, 4, 32>}, {pipeline_mode = #tpu.pipeline_mode<synchronous>, transform_indices = @transform_1, window_bounds = array<i64: 4, 32, 16>}, {pipeline_mode = #tpu.pipeline_mode<synchronous>, transform_indices = @transform_2, window_bounds = array<i64: 1, 64>}, {transform_indices = @transform_3, window_bounds = array<i64: 256, 64>}]} {
    %c0 = arith.constant 0 : index
    %c0_0 = arith.constant 0 : index
    %0 = vector.load %arg3[%c0, %c0_0] : memref<1x64xf32, #tpu.memory_space<vmem>>, vector<1x64xf32>
    %c0_1 = arith.constant 0 : index
    %c0_2 = arith.constant 0 : index
    %c0_3 = arith.constant 0 : index
    %1 = vector.load %arg1[%c0_1, %c0_2, %c0_3] : memref<256x4x32xf32, #tpu.memory_space<vmem>>, vector<256x1x32xf32>
    %2 = vector.shape_cast %1 : vector<256x1x32xf32> to vector<256x32xf32>
    %3 = arith.truncf %2 : vector<256x32xf32> to vector<256x32xbf16>
    %c0_4 = arith.constant 0 : index
    %c0_5 = arith.constant 0 : index
    %c0_6 = arith.constant 0 : index
    %4 = vector.load %arg2[%c0_4, %c0_5, %c0_6] : memref<4x32x16xf32, #tpu.memory_space<vmem>>, vector<1x32x16xf32>
    %5 = vector.shape_cast %4 : vector<1x32x16xf32> to vector<32x16xf32>
    %6 = arith.truncf %5 : vector<32x16xf32> to vector<32x16xbf16>
    %cst = arith.constant dense<0.000000e+00> : vector<256x16xf32>
    %7 = tpu.matmul %3, %6, %cst {dimension_numbers = #tpu.dot_dimension_numbers<[1], [0], [0], [1], [0, 0, 1, 1], [], []>} : vector<256x32xbf16>, vector<32x16xbf16>, vector<256x16xf32> -> vector<256x16xf32>
    %c0_7 = arith.constant 0 : index
    %c1 = arith.constant 1 : index
    %c0_8 = arith.constant 0 : index
    %8 = vector.load %arg1[%c0_7, %c1, %c0_8] : memref<256x4x32xf32, #tpu.memory_space<vmem>>, vector<256x1x32xf32>
    %9 = vector.shape_cast %8 : vector<256x1x32xf32> to vector<256x32xf32>
    %10 = arith.truncf %9 : vector<256x32xf32> to vector<256x32xbf16>
    %c1_9 = arith.constant 1 : index
    %c0_10 = arith.constant 0 : index
    %c0_11 = arith.constant 0 : index
    %11 = vector.load %arg2[%c1_9, %c0_10, %c0_11] : memref<4x32x16xf32, #tpu.memory_space<vmem>>, vector<1x32x16xf32>
    %12 = vector.shape_cast %11 : vector<1x32x16xf32> to vector<32x16xf32>
    %13 = arith.truncf %12 : vector<32x16xf32> to vector<32x16xbf16>
    %cst_12 = arith.constant dense<0.000000e+00> : vector<256x16xf32>
    %14 = tpu.matmul %10, %13, %cst_12 {dimension_numbers = #tpu.dot_dimension_numbers<[1], [0], [0], [1], [0, 0, 1, 1], [], []>} : vector<256x32xbf16>, vector<32x16xbf16>, vector<256x16xf32> -> vector<256x16xf32>
    %c0_13 = arith.constant 0 : index
    %c2 = arith.constant 2 : index
    %c0_14 = arith.constant 0 : index
    %15 = vector.load %arg1[%c0_13, %c2, %c0_14] : memref<256x4x32xf32, #tpu.memory_space<vmem>>, vector<256x1x32xf32>
    %16 = vector.shape_cast %15 : vector<256x1x32xf32> to vector<256x32xf32>
    %17 = arith.truncf %16 : vector<256x32xf32> to vector<256x32xbf16>
    %c2_15 = arith.constant 2 : index
    %c0_16 = arith.constant 0 : index
    %c0_17 = arith.constant 0 : index
    %18 = vector.load %arg2[%c2_15, %c0_16, %c0_17] : memref<4x32x16xf32, #tpu.memory_space<vmem>>, vector<1x32x16xf32>
    %19 = vector.shape_cast %18 : vector<1x32x16xf32> to vector<32x16xf32>
    %20 = arith.truncf %19 : vector<32x16xf32> to vector<32x16xbf16>
    %cst_18 = arith.constant dense<0.000000e+00> : vector<256x16xf32>
    %21 = tpu.matmul %17, %20, %cst_18 {dimension_numbers = #tpu.dot_dimension_numbers<[1], [0], [0], [1], [0, 0, 1, 1], [], []>} : vector<256x32xbf16>, vector<32x16xbf16>, vector<256x16xf32> -> vector<256x16xf32>
    %c0_19 = arith.constant 0 : index
    %c3 = arith.constant 3 : index
    %c0_20 = arith.constant 0 : index
    %22 = vector.load %arg1[%c0_19, %c3, %c0_20] : memref<256x4x32xf32, #tpu.memory_space<vmem>>, vector<256x1x32xf32>
    %23 = vector.shape_cast %22 : vector<256x1x32xf32> to vector<256x32xf32>
    %24 = arith.truncf %23 : vector<256x32xf32> to vector<256x32xbf16>
    %c3_21 = arith.constant 3 : index
    %c0_22 = arith.constant 0 : index
    %c0_23 = arith.constant 0 : index
    %25 = vector.load %arg2[%c3_21, %c0_22, %c0_23] : memref<4x32x16xf32, #tpu.memory_space<vmem>>, vector<1x32x16xf32>
    %26 = vector.shape_cast %25 : vector<1x32x16xf32> to vector<32x16xf32>
    %27 = arith.truncf %26 : vector<32x16xf32> to vector<32x16xbf16>
    %cst_24 = arith.constant dense<0.000000e+00> : vector<256x16xf32>
    %28 = tpu.matmul %24, %27, %cst_24 {dimension_numbers = #tpu.dot_dimension_numbers<[1], [0], [0], [1], [0, 0, 1, 1], [], []>} : vector<256x32xbf16>, vector<32x16xbf16>, vector<256x16xf32> -> vector<256x16xf32>
    %29 = tpu.concatenate %7, %14, %21, %28 in 1 : vector<256x16xf32>, vector<256x16xf32>, vector<256x16xf32>, vector<256x16xf32> -> vector<256x64xf32>
    %30 = vector.broadcast %0 : vector<1x64xf32> to vector<256x64xf32>
    %31 = arith.addf %29, %30 : vector<256x64xf32>
    %c0_25 = arith.constant 0 : index
    %c0_26 = arith.constant 0 : index
    %32 = vector.load %arg4[%c0_25, %c0_26] : memref<256x64xf32, #tpu.memory_space<vmem>>, vector<256x64xf32>
    tpu.vector_store %arg4[%c0_25, %c0_26], %31 {strides = array<i32>} : memref<256x64xf32, #tpu.memory_space<vmem>>, vector<256x64xf32>,
    return
  }
  func.func @transform_0(%arg0: i32) -> (i32, i32, i32) {
    %c0_i32 = arith.constant 0 : i32
    %c0_i32_0 = arith.constant 0 : i32
    %c0_i32_1 = arith.constant 0 : i32
    return %arg0, %c0_i32, %c0_i32_0 : i32, i32, i32
  }
  func.func @transform_1(%arg0: i32) -> (i32, i32, i32) {
    %c0_i32 = arith.constant 0 : i32
    %c0_i32_0 = arith.constant 0 : i32
    %c0_i32_1 = arith.constant 0 : i32
    %c0_i32_2 = arith.constant 0 : i32
    return %c0_i32, %c0_i32_0, %c0_i32_1 : i32, i32, i32
  }
  func.func @transform_2(%arg0: i32) -> (i32, i32) {
    %c0_i32 = arith.constant 0 : i32
    %c0_i32_0 = arith.constant 0 : i32
    %c0_i32_1 = arith.constant 0 : i32
    return %c0_i32, %c0_i32_0 : i32, i32
  }
  func.func @transform_3(%arg0: i32) -> (i32, i32) {
    %c0_i32 = arith.constant 0 : i32
    %c0_i32_0 = arith.constant 0 : i32
    return %arg0, %c0_i32 : i32, i32
  }
}

</mosaic_0001>

<llo_original>
// kernel: tpu_custom_call.1
$region0: #{tpu_custom_call.1}
  #allocation0 [shape = 'u32[]', space=smem, size = 0x4, offset = 0x4, fixed_abs, tag = 'smem constant byte address 0x4 - core index']
  #allocation1 [shape = 'u32[144,128]{1,0:T(1,128)}', space=vmem, size = 0x12000, scoped, tag = 'internal scratch']
  %s0 = inlined_call_operand.vmem [shape: f32[256,4,32], index: 0, kind: input, shape index: {}]
  %s1 = inlined_call_operand.vmem [shape: f32[4,32,16], index: 1, kind: input, shape index: {}]
  %s2 = inlined_call_operand.vmem [shape: f32[1,64], index: 2, kind: input, shape index: {}]
  %s3 = inlined_call_operand.vmem [shape: f32[256,64], index: 3, kind: output, shape index: {}]
  %s4 = sld [smem:[#allocation0]]
  $region22: #{tpu_custom_call.1} parent=0
    _
  %s6 = ssub.s32 1, %s4
  %s7 = scalar_select 0, %s6, %s4
  // Predicated region
  $region2: #{tpu_custom_call.1} parent=0 // pred_check
    _
  $region3: #{tpu_custom_call.1} parent=0 // pred_check_branch
    %9 = sbr.rel (0) target = $region5
  $region4: #{tpu_custom_call.1} parent=0 // pred_region
    _
  $region5: #{tpu_custom_call.1} parent=0 // pred_fallthru
    _
  // Predicated region
  $region6: #{tpu_custom_call.1} parent=0 // pred_check
    _
  $region7: #{tpu_custom_call.1} parent=0 // pred_check_branch
    %11 = sbr.rel (0) target = $region9
  $region8: #{tpu_custom_call.1} parent=0 // pred_region
    _
  $region9: #{tpu_custom_call.1} parent=0 // pred_fallthru
    _
  // Predicated region
  $region10: #{tpu_custom_call.1} parent=0 // pred_check
    _
  $region11: #{tpu_custom_call.1} parent=0 // pred_check_branch
    %13 = sbr.rel (0) target = $region13
  $region12: #{tpu_custom_call.1} parent=0 // pred_region
    _
  $region13: #{tpu_custom_call.1} parent=0 // pred_fallthru
    _
  %v15 = vld [vmem:[%s2] sm:$0x1]
  %v16 = vld [vmem:[%s0] sm:$0x1]
  %v17 = vld [vmem:[%s0 + $0x4] sm:$0x1]
  %v18 = vld [vmem:[%s0 + $0x8] sm:$0x1]
  %v19 = vld [vmem:[%s0 + $0xc] sm:$0x1]
  %v20 = vld [vmem:[%s0 + $0x10] sm:$0x1]
  %v21 = vld [vmem:[%s0 + $0x14] sm:$0x1]
  %v22 = vld [vmem:[%s0 + $0x18] sm:$0x1]
  %v23 = vld [vmem:[%s0 + $0x1c] sm:$0x1]
  %v24 = vld [vmem:[%s0 + $0x20] sm:$0x1]
  %v25 = vld [vmem:[%s0 + $0x24] sm:$0x1]
  %v26 = vld [vmem:[%s0 + $0x28] sm:$0x1]
  %v27 = vld [vmem:[%s0 + $0x2c] sm:$0x1]
  %v28 = vld [vmem:[%s0 + $0x30] sm:$0x1]
  %v29 = vld [vmem:[%s0 + $0x34] sm:$0x1]
  %v30 = vld [vmem:[%s0 + $0x38] sm:$0x1]
  %v31 = vld [vmem:[%s0 + $0x3c] sm:$0x1]
  %v32 = vld [vmem:[%s0 + $0x40] sm:$0x1]
  %v33 = vld [vmem:[%s0 + $0x44] sm:$0x1]
  %v34 = vld [vmem:[%s0 + $0x48] sm:$0x1]
  %v35 = vld [vmem:[%s0 + $0x4c] sm:$0x1]
  %v36 = vld [vmem:[%s0 + $0x50] sm:$0x1]
  %v37 = vld [vmem:[%s0 + $0x54] sm:$0x1]
  %v38 = vld [vmem:[%s0 + $0x58] sm:$0x1]
  %v39 = vld [vmem:[%s0 + $0x5c] sm:$0x1]
  %v40 = vld [vmem:[%s0 + $0x60] sm:$0x1]
  %v41 = vld [vmem:[%s0 + $0x64] sm:$0x1]
  %v42 = vld [vmem:[%s0 + $0x68] sm:$0x1]
  %v43 = vld [vmem:[%s0 + $0x6c] sm:$0x1]
  %v44 = vld [vmem:[%s0 + $0x70] sm:$0x1]
  %v45 = vld [vmem:[%s0 + $0x74] sm:$0x1]
  %v46 = vld [vmem:[%s0 + $0x78] sm:$0x1]
  %v47 = vld [vmem:[%s0 + $0x7c] sm:$0x1]
  %v48 = vld [vmem:[%s0 + $0x80] sm:$0x1]
  %v49 = vld [vmem:[%s0 + $0x84] sm:$0x1]
  %v50 = vld [vmem:[%s0 + $0x88] sm:$0x1]
  %v51 = vld [vmem:[%s0 + $0x8c] sm:$0x1]
  %v52 = vld [vmem:[%s0 + $0x90] sm:$0x1]
  %v53 = vld [vmem:[%s0 + $0x94] sm:$0x1]
  %v54 = vld [vmem:[%s0 + $0x98] sm:$0x1]
  %v55 = vld [vmem:[%s0 + $0x9c] sm:$0x1]
  %v56 = vld [vmem:[%s0 + $0xa0] sm:$0x1]
  %v57 = vld [vmem:[%s0 + $0xa4] sm:$0x1]
  %v58 = vld [vmem:[%s0 + $0xa8] sm:$0x1]
  %v59 = vld [vmem:[%s0 + $0xac] sm:$0x1]
  %v60 = vld [vmem:[%s0 + $0xb0] sm:$0x1]
  %v61 = vld [vmem:[%s0 + $0xb4] sm:$0x1]
  %v62 = vld [vmem:[%s0 + $0xb8] sm:$0x1]
  %v63 = vld [vmem:[%s0 + $0xbc] sm:$0x1]
  %v64 = vld [vmem:[%s0 + $0xc0] sm:$0x1]
  %v65 = vld [vmem:[%s0 + $0xc4] sm:$0x1]
  %v66 = vld [vmem:[%s0 + $0xc8] sm:$0x1]
  %v67 = vld [vmem:[%s0 + $0xcc] sm:$0x1]
  %v68 = vld [vmem:[%s0 + $0xd0] sm:$0x1]
  %v69 = vld [vmem:[%s0 + $0xd4] sm:$0x1]
  %v70 = vld [vmem:[%s0 + $0xd8] sm:$0x1]
  %v71 = vld [vmem:[%s0 + $0xdc] sm:$0x1]
  %v72 = vld [vmem:[%s0 + $0xe0] sm:$0x1]
  %v73 = vld [vmem:[%s0 + $0xe4] sm:$0x1]
  %v74 = vld [vmem:[%s0 + $0xe8] sm:$0x1]
  %v75 = vld [vmem:[%s0 + $0xec] sm:$0x1]
  %v76 = vld [vmem:[%s0 + $0xf0] sm:$0x1]
  %v77 = vld [vmem:[%s0 + $0xf4] sm:$0x1]
  %v78 = vld [vmem:[%s0 + $0xf8] sm:$0x1]
  %v79 = vld [vmem:[%s0 + $0xfc] sm:$0x1]
  %v80 = vld [vmem:[%s0 + $0x100] sm:$0x1]
  %v81 = vld [vmem:[%s0 + $0x104] sm:$0x1]
  %v82 = vld [vmem:[%s0 + $0x108] sm:$0x1]
  %v83 = vld [vmem:[%s0 + $0x10c] sm:$0x1]
  %v84 = vld [vmem:[%s0 + $0x110] sm:$0x1]
  %v85 = vld [vmem:[%s0 + $0x114] sm:$0x1]
  %v86 = vld [vmem:[%s0 + $0x118] sm:$0x1]
  %v87 = vld [vmem:[%s0 + $0x11c] sm:$0x1]
  %v88 = vld [vmem:[%s0 + $0x120] sm:$0x1]
  %v89 = vld [vmem:[%s0 + $0x124] sm:$0x1]
  %v90 = vld [vmem:[%s0 + $0x128] sm:$0x1]
  %v91 = vld [vmem:[%s0 + $0x12c] sm:$0x1]
  %v92 = vld [vmem:[%s0 + $0x130] sm:$0x1]
  %v93 = vld [vmem:[%s0 + $0x134] sm:$0x1]
  %v94 = vld [vmem:[%s0 + $0x138] sm:$0x1]
  %v95 = vld [vmem:[%s0 + $0x13c] sm:$0x1]
  %v96 = vld [vmem:[%s0 + $0x140] sm:$0x1]
  %v97 = vld [vmem:[%s0 + $0x144] sm:$0x1]
  %v98 = vld [vmem:[%s0 + $0x148] sm:$0x1]
  %v99 = vld [vmem:[%s0 + $0x14c] sm:$0x1]
  %v100 = vld [vmem:[%s0 + $0x150] sm:$0x1]
  %v101 = vld [vmem:[%s0 + $0x154] sm:$0x1]
  %v102 = vld [vmem:[%s0 + $0x158] sm:$0x1]
  %v103 = vld [vmem:[%s0 + $0x15c] sm:$0x1]
  %v104 = vld [vmem:[%s0 + $0x160] sm:$0x1]
  %v105 = vld [vmem:[%s0 + $0x164] sm:$0x1]
  %v106 = vld [vmem:[%s0 + $0x168] sm:$0x1]
  %v107 = vld [vmem:[%s0 + $0x16c] sm:$0x1]
  %v108 = vld [vmem:[%s0 + $0x170] sm:$0x1]
  %v109 = vld [vmem:[%s0 + $0x174] sm:$0x1]
  %v110 = vld [vmem:[%s0 + $0x178] sm:$0x1]
  %v111 = vld [vmem:[%s0 + $0x17c] sm:$0x1]
  %v112 = vld [vmem:[%s0 + $0x180] sm:$0x1]
  %v113 = vld [vmem:[%s0 + $0x184] sm:$0x1]
  %v114 = vld [vmem:[%s0 + $0x188] sm:$0x1]
  %v115 = vld [vmem:[%s0 + $0x18c] sm:$0x1]
  %v116 = vld [vmem:[%s0 + $0x190] sm:$0x1]
  %v117 = vld [vmem:[%s0 + $0x194] sm:$0x1]
  %v118 = vld [vmem:[%s0 + $0x198] sm:$0x1]
  %v119 = vld [vmem:[%s0 + $0x19c] sm:$0x1]
  %v120 = vld [vmem:[%s0 + $0x1a0] sm:$0x1]
  %v121 = vld [vmem:[%s0 + $0x1a4] sm:$0x1]
  %v122 = vld [vmem:[%s0 + $0x1a8] sm:$0x1]
  %v123 = vld [vmem:[%s0 + $0x1ac] sm:$0x1]
  %v124 = vld [vmem:[%s0 + $0x1b0] sm:$0x1]
  %v125 = vld [vmem:[%s0 + $0x1b4] sm:$0x1]
  %v126 = vld [vmem:[%s0 + $0x1b8] sm:$0x1]
  %v127 = vld [vmem:[%s0 + $0x1bc] sm:$0x1]
  %v128 = vld [vmem:[%s0 + $0x1c0] sm:$0x1]
  %v129 = vld [vmem:[%s0 + $0x1c4] sm:$0x1]
  %v130 = vld [vmem:[%s0 + $0x1c8] sm:$0x1]
  %v131 = vld [vmem:[%s0 + $0x1cc] sm:$0x1]
  %v132 = vld [vmem:[%s0 + $0x1d0] sm:$0x1]
  %v133 = vld [vmem:[%s0 + $0x1d4] sm:$0x1]
  %v134 = vld [vmem:[%s0 + $0x1d8] sm:$0x1]
  %v135 = vld [vmem:[%s0 + $0x1dc] sm:$0x1]
  %v136 = vld [vmem:[%s0 + $0x1e0] sm:$0x1]
  %v137 = vld [vmem:[%s0 + $0x1e4] sm:$0x1]
  %v138 = vld [vmem:[%s0 + $0x1e8] sm:$0x1]
  %v139 = vld [vmem:[%s0 + $0x1ec] sm:$0x1]
  %v140 = vld [vmem:[%s0 + $0x1f0] sm:$0x1]
  %v141 = vld [vmem:[%s0 + $0x1f4] sm:$0x1]
  %v142 = vld [vmem:[%s0 + $0x1f8] sm:$0x1]
  %v143 = vld [vmem:[%s0 + $0x1fc] sm:$0x1]
  %v144 = vld [vmem:[%s0 + $0x200] sm:$0x1]
  %v145 = vld [vmem:[%s0 + $0x204] sm:$0x1]
  %v146 = vld [vmem:[%s0 + $0x208] sm:$0x1]
  %v147 = vld [vmem:[%s0 + $0x20c] sm:$0x1]
  %v148 = vld [vmem:[%s0 + $0x210] sm:$0x1]
  %v149 = vld [vmem:[%s0 + $0x214] sm:$0x1]
  %v150 = vld [vmem:[%s0 + $0x218] sm:$0x1]
  %v151 = vld [vmem:[%s0 + $0x21c] sm:$0x1]
  %v152 = vld [vmem:[%s0 + $0x220] sm:$0x1]
  %v153 = vld [vmem:[%s0 + $0x224] sm:$0x1]
  %v154 = vld [vmem:[%s0 + $0x228] sm:$0x1]
  %v155 = vld [vmem:[%s0 + $0x22c] sm:$0x1]
  %v156 = vld [vmem:[%s0 + $0x230] sm:$0x1]
  %v157 = vld [vmem:[%s0 + $0x234] sm:$0x1]
  %v158 = vld [vmem:[%s0 + $0x238] sm:$0x1]
  %v159 = vld [vmem:[%s0 + $0x23c] sm:$0x1]
  %v160 = vld [vmem:[%s0 + $0x240] sm:$0x1]
  %v161 = vld [vmem:[%s0 + $0x244] sm:$0x1]
  %v162 = vld [vmem:[%s0 + $0x248] sm:$0x1]
  %v163 = vld [vmem:[%s0 + $0x24c] sm:$0x1]
  %v164 = vld [vmem:[%s0 + $0x250] sm:$0x1]
  %v165 = vld [vmem:[%s0 + $0x254] sm:$0x1]
  %v166 = vld [vmem:[%s0 + $0x258] sm:$0x1]
  %v167 = vld [vmem:[%s0 + $0x25c] sm:$0x1]
  %v168 = vld [vmem:[%s0 + $0x260] sm:$0x1]
  %v169 = vld [vmem:[%s0 + $0x264] sm:$0x1]
  %v170 = vld [vmem:[%s0 + $0x268] sm:$0x1]
  %v171 = vld [vmem:[%s0 + $0x26c] sm:$0x1]
  %v172 = vld [vmem:[%s0 + $0x270] sm:$0x1]
  %v173 = vld [vmem:[%s0 + $0x274] sm:$0x1]
  %v174 = vld [vmem:[%s0 + $0x278] sm:$0x1]
  %v175 = vld [vmem:[%s0 + $0x27c] sm:$0x1]
  %v176 = vld [vmem:[%s0 + $0x280] sm:$0x1]
  %v177 = vld [vmem:[%s0 + $0x284] sm:$0x1]
  %v178 = vld [vmem:[%s0 + $0x288] sm:$0x1]
  %v179 = vld [vmem:[%s0 + $0x28c] sm:$0x1]
  %v180 = vld [vmem:[%s0 + $0x290] sm:$0x1]
  %v181 = vld [vmem:[%s0 + $0x294] sm:$0x1]
  %v182 = vld [vmem:[%s0 + $0x298] sm:$0x1]
  %v183 = vld [vmem:[%s0 + $0x29c] sm:$0x1]
  %v184 = vld [vmem:[%s0 + $0x2a0] sm:$0x1]
  %v185 = vld [vmem:[%s0 + $0x2a4] sm:$0x1]
  %v186 = vld [vmem:[%s0 + $0x2a8] sm:$0x1]
  %v187 = vld [vmem:[%s0 + $0x2ac] sm:$0x1]
  %v188 = vld [vmem:[%s0 + $0x2b0] sm:$0x1]
  %v189 = vld [vmem:[%s0 + $0x2b4] sm:$0x1]
  %v190 = vld [vmem:[%s0 + $0x2b8] sm:$0x1]
  %v191 = vld [vmem:[%s0 + $0x2bc] sm:$0x1]
  %v192 = vld [vmem:[%s0 + $0x2c0] sm:$0x1]
  %v193 = vld [vmem:[%s0 + $0x2c4] sm:$0x1]
  %v194 = vld [vmem:[%s0 + $0x2c8] sm:$0x1]
  %v195 = vld [vmem:[%s0 + $0x2cc] sm:$0x1]
  %v196 = vld [vmem:[%s0 + $0x2d0] sm:$0x1]
  %v197 = vld [vmem:[%s0 + $0x2d4] sm:$0x1]
  %v198 = vld [vmem:[%s0 + $0x2d8] sm:$0x1]
  %v199 = vld [vmem:[%s0 + $0x2dc] sm:$0x1]
  %v200 = vld [vmem:[%s0 + $0x2e0] sm:$0x1]
  %v201 = vld [vmem:[%s0 + $0x2e4] sm:$0x1]
  %v202 = vld [vmem:[%s0 + $0x2e8] sm:$0x1]
  %v203 = vld [vmem:[%s0 + $0x2ec] sm:$0x1]
  %v204 = vld [vmem:[%s0 + $0x2f0] sm:$0x1]
  %v205 = vld [vmem:[%s0 + $0x2f4] sm:$0x1]
  %v206 = vld [vmem:[%s0 + $0x2f8] sm:$0x1]
  %v207 = vld [vmem:[%s0 + $0x2fc] sm:$0x1]
  %v208 = vld [vmem:[%s0 + $0x300] sm:$0x1]
  %v209 = vld [vmem:[%s0 + $0x304] sm:$0x1]
  %v210 = vld [vmem:[%s0 + $0x308] sm:$0x1]
  %v211 = vld [vmem:[%s0 + $0x30c] sm:$0x1]
  %v212 = vld [vmem:[%s0 + $0x310] sm:$0x1]
  %v213 = vld [vmem:[%s0 + $0x314] sm:$0x1]
  %v214 = vld [vmem:[%s0 + $0x318] sm:$0x1]
  %v215 = vld [vmem:[%s0 + $0x31c] sm:$0x1]
  %v216 = vld [vmem:[%s0 + $0x320] sm:$0x1]
  %v217 = vld [vmem:[%s0 + $0x324] sm:$0x1]
  %v218 = vld [vmem:[%s0 + $0x328] sm:$0x1]
  %v219 = vld [vmem:[%s0 + $0x32c] sm:$0x1]
  %v220 = vld [vmem:[%s0 + $0x330] sm:$0x1]
  %v221 = vld [vmem:[%s0 + $0x334] sm:$0x1]
  %v222 = vld [vmem:[%s0 + $0x338] sm:$0x1]
  %v223 = vld [vmem:[%s0 + $0x33c] sm:$0x1]
  %v224 = vld [vmem:[%s0 + $0x340] sm:$0x1]
  %v225 = vld [vmem:[%s0 + $0x344] sm:$0x1]
  %v226 = vld [vmem:[%s0 + $0x348] sm:$0x1]
  %v227 = vld [vmem:[%s0 + $0x34c] sm:$0x1]
  %v228 = vld [vmem:[%s0 + $0x350] sm:$0x1]
  %v229 = vld [vmem:[%s0 + $0x354] sm:$0x1]
  %v230 = vld [vmem:[%s0 + $0x358] sm:$0x1]
  %v231 = vld [vmem:[%s0 + $0x35c] sm:$0x1]
  %v232 = vld [vmem:[%s0 + $0x360] sm:$0x1]
  %v233 = vld [vmem:[%s0 + $0x364] sm:$0x1]
  %v234 = vld [vmem:[%s0 + $0x368] sm:$0x1]
  %v235 = vld [vmem:[%s0 + $0x36c] sm:$0x1]
  %v236 = vld [vmem:[%s0 + $0x370] sm:$0x1]
  %v237 = vld [vmem:[%s0 + $0x374] sm:$0x1]
  %v238 = vld [vmem:[%s0 + $0x378] sm:$0x1]
  %v239 = vld [vmem:[%s0 + $0x37c] sm:$0x1]
  %v240 = vld [vmem:[%s0 + $0x380] sm:$0x1]
  %v241 = vld [vmem:[%s0 + $0x384] sm:$0x1]
  %v242 = vld [vmem:[%s0 + $0x388] sm:$0x1]
  %v243 = vld [vmem:[%s0 + $0x38c] sm:$0x1]
  %v244 = vld [vmem:[%s0 + $0x390] sm:$0x1]
  %v245 = vld [vmem:[%s0 + $0x394] sm:$0x1]
  %v246 = vld [vmem:[%s0 + $0x398] sm:$0x1]
  %v247 = vld [vmem:[%s0 + $0x39c] sm:$0x1]
  %v248 = vld [vmem:[%s0 + $0x3a0] sm:$0x1]
  %v249 = vld [vmem:[%s0 + $0x3a4] sm:$0x1]
  %v250 = vld [vmem:[%s0 + $0x3a8] sm:$0x1]
  %v251 = vld [vmem:[%s0 + $0x3ac] sm:$0x1]
  %v252 = vld [vmem:[%s0 + $0x3b0] sm:$0x1]
  %v253 = vld [vmem:[%s0 + $0x3b4] sm:$0x1]
  %v254 = vld [vmem:[%s0 + $0x3b8] sm:$0x1]
  %v255 = vld [vmem:[%s0 + $0x3bc] sm:$0x1]
  %v256 = vld [vmem:[%s0 + $0x3c0] sm:$0x1]
  %v257 = vld [vmem:[%s0 + $0x3c4] sm:$0x1]
  %v258 = vld [vmem:[%s0 + $0x3c8] sm:$0x1]
  %v259 = vld [vmem:[%s0 + $0x3cc] sm:$0x1]
  %v260 = vld [vmem:[%s0 + $0x3d0] sm:$0x1]
  %v261 = vld [vmem:[%s0 + $0x3d4] sm:$0x1]
  %v262 = vld [vmem:[%s0 + $0x3d8] sm:$0x1]
  %v263 = vld [vmem:[%s0 + $0x3dc] sm:$0x1]
  %v264 = vld [vmem:[%s0 + $0x3e0] sm:$0x1]
  %v265 = vld [vmem:[%s0 + $0x3e4] sm:$0x1]
  %v266 = vld [vmem:[%s0 + $0x3e8] sm:$0x1]
  %v267 = vld [vmem:[%s0 + $0x3ec] sm:$0x1]
  %v268 = vld [vmem:[%s0 + $0x3f0] sm:$0x1]
  %v269 = vld [vmem:[%s0 + $0x3f4] sm:$0x1]
  %v270 = vld [vmem:[%s0 + $0x3f8] sm:$0x1]
  %v271 = vld [vmem:[%s0 + $0x3fc] sm:$0x1]
  %v272 = vpack.c.bf16 %v16, %v16
  %v273 = vpack.c.bf16 %v17, %v17
  %v274 = vpack.c.bf16 %v18, %v18
  %v275 = vpack.c.bf16 %v19, %v19
  %v276 = vpack.c.bf16 %v20, %v20
  %v277 = vpack.c.bf16 %v21, %v21
  %v278 = vpack.c.bf16 %v22, %v22
  %v279 = vpack.c.bf16 %v23, %v23
  %v280 = vpack.c.bf16 %v24, %v24
  %v281 = vpack.c.bf16 %v25, %v25
  %v282 = vpack.c.bf16 %v26, %v26
  %v283 = vpack.c.bf16 %v27, %v27
  %v284 = vpack.c.bf16 %v28, %v28
  %v285 = vpack.c.bf16 %v29, %v29
  %v286 = vpack.c.bf16 %v30, %v30
  %v287 = vpack.c.bf16 %v31, %v31
  %v288 = vpack.c.bf16 %v32, %v32
  %v289 = vpack.c.bf16 %v33, %v33
  %v290 = vpack.c.bf16 %v34, %v34
  %v291 = vpack.c.bf16 %v35, %v35
  %v292 = vpack.c.bf16 %v36, %v36
  %v293 = vpack.c.bf16 %v37, %v37
  %v294 = vpack.c.bf16 %v38, %v38
  %v295 = vpack.c.bf16 %v39, %v39
  %v296 = vpack.c.bf16 %v40, %v40
  %v297 = vpack.c.bf16 %v41, %v41
  %v298 = vpack.c.bf16 %v42, %v42
  %v299 = vpack.c.bf16 %v43, %v43
  %v300 = vpack.c.bf16 %v44, %v44
  %v301 = vpack.c.bf16 %v45, %v45
  %v302 = vpack.c.bf16 %v46, %v46
  %v303 = vpack.c.bf16 %v47, %v47
  %v304 = vpack.c.bf16 %v48, %v48
  %v305 = vpack.c.bf16 %v49, %v49
  %v306 = vpack.c.bf16 %v50, %v50
  %v307 = vpack.c.bf16 %v51, %v51
  %v308 = vpack.c.bf16 %v52, %v52
  %v309 = vpack.c.bf16 %v53, %v53
  %v310 = vpack.c.bf16 %v54, %v54
  %v311 = vpack.c.bf16 %v55, %v55
  %v312 = vpack.c.bf16 %v56, %v56
  %v313 = vpack.c.bf16 %v57, %v57
  %v314 = vpack.c.bf16 %v58, %v58
  %v315 = vpack.c.bf16 %v59, %v59
  %v316 = vpack.c.bf16 %v60, %v60
  %v317 = vpack.c.bf16 %v61, %v61
  %v318 = vpack.c.bf16 %v62, %v62
  %v319 = vpack.c.bf16 %v63, %v63
  %v320 = vpack.c.bf16 %v64, %v64
  %v321 = vpack.c.bf16 %v65, %v65
  %v322 = vpack.c.bf16 %v66, %v66
  %v323 = vpack.c.bf16 %v67, %v67
  %v324 = vpack.c.bf16 %v68, %v68
  %v325 = vpack.c.bf16 %v69, %v69
  %v326 = vpack.c.bf16 %v70, %v70
  %v327 = vpack.c.bf16 %v71, %v71
  %v328 = vpack.c.bf16 %v72, %v72
  %v329 = vpack.c.bf16 %v73, %v73
  %v330 = vpack.c.bf16 %v74, %v74
  %v331 = vpack.c.bf16 %v75, %v75
  %v332 = vpack.c.bf16 %v76, %v76
  %v333 = vpack.c.bf16 %v77, %v77
  %v334 = vpack.c.bf16 %v78, %v78
  %v335 = vpack.c.bf16 %v79, %v79
  %v336 = vpack.c.bf16 %v80, %v80
  %v337 = vpack.c.bf16 %v81, %v81
  %v338 = vpack.c.bf16 %v82, %v82
  %v339 = vpack.c.bf16 %v83, %v83
  %v340 = vpack.c.bf16 %v84, %v84
  %v341 = vpack.c.bf16 %v85, %v85
  %v342 = vpack.c.bf16 %v86, %v86
  %v343 = vpack.c.bf16 %v87, %v87
  %v344 = vpack.c.bf16 %v88, %v88
  %v345 = vpack.c.bf16 %v89, %v89
  %v346 = vpack.c.bf16 %v90, %v90
  %v347 = vpack.c.bf16 %v91, %v91
  %v348 = vpack.c.bf16 %v92, %v92
  %v349 = vpack.c.bf16 %v93, %v93
  %v350 = vpack.c.bf16 %v94, %v94
  %v351 = vpack.c.bf16 %v95, %v95
  %v352 = vpack.c.bf16 %v96, %v96
  %v353 = vpack.c.bf16 %v97, %v97
  %v354 = vpack.c.bf16 %v98, %v98
  %v355 = vpack.c.bf16 %v99, %v99
  %v356 = vpack.c.bf16 %v100, %v100
  %v357 = vpack.c.bf16 %v101, %v101
  %v358 = vpack.c.bf16 %v102, %v102
  %v359 = vpack.c.bf16 %v103, %v103
  %v360 = vpack.c.bf16 %v104, %v104
  %v361 = vpack.c.bf16 %v105, %v105
  %v362 = vpack.c.bf16 %v106, %v106
  %v363 = vpack.c.bf16 %v107, %v107
  %v364 = vpack.c.bf16 %v108, %v108
  %v365 = vpack.c.bf16 %v109, %v109
  %v366 = vpack.c.bf16 %v110, %v110
  %v367 = vpack.c.bf16 %v111, %v111
  %v368 = vpack.c.bf16 %v112, %v112
  %v369 = vpack.c.bf16 %v113, %v113
  %v370 = vpack.c.bf16 %v114, %v114
  %v371 = vpack.c.bf16 %v115, %v115
  %v372 = vpack.c.bf16 %v116, %v116
  %v373 = vpack.c.bf16 %v117, %v117
  %v374 = vpack.c.bf16 %v118, %v118
  %v375 = vpack.c.bf16 %v119, %v119
  %v376 = vpack.c.bf16 %v120, %v120
  %v377 = vpack.c.bf16 %v121, %v121
  %v378 = vpack.c.bf16 %v122, %v122
  %v379 = vpack.c.bf16 %v123, %v123
  %v380 = vpack.c.bf16 %v124, %v124
  %v381 = vpack.c.bf16 %v125, %v125
  %v382 = vpack.c.bf16 %v126, %v126
  %v383 = vpack.c.bf16 %v127, %v127
  %v384 = vpack.c.bf16 %v128, %v128
  %v385 = vpack.c.bf16 %v129, %v129
  %v386 = vpack.c.bf16 %v130, %v130
  %v387 = vpack.c.bf16 %v131, %v131
  %v388 = vpack.c.bf16 %v132, %v132
  %v389 = vpack.c.bf16 %v133, %v133
  %v390 = vpack.c.bf16 %v134, %v134
  %v391 = vpack.c.bf16 %v135, %v135
  %v392 = vpack.c.bf16 %v136, %v136
  %v393 = vpack.c.bf16 %v137, %v137
  %v394 = vpack.c.bf16 %v138, %v138
  %v395 = vpack.c.bf16 %v139, %v139
  %v396 = vpack.c.bf16 %v140, %v140
  %v397 = vpack.c.bf16 %v141, %v141
  %v398 = vpack.c.bf16 %v142, %v142
  %v399 = vpack.c.bf16 %v143, %v143
  %v400 = vpack.c.bf16 %v144, %v144
  %v401 = vpack.c.bf16 %v145, %v145
  %v402 = vpack.c.bf16 %v146, %v146
  %v403 = vpack.c.bf16 %v147, %v147
  %v404 = vpack.c.bf16 %v148, %v148
  %v405 = vpack.c.bf16 %v149, %v149
  %v406 = vpack.c.bf16 %v150, %v150
  %v407 = vpack.c.bf16 %v151, %v151
  %v408 = vpack.c.bf16 %v152, %v152
  %v409 = vpack.c.bf16 %v153, %v153
  %v410 = vpack.c.bf16 %v154, %v154
  %v411 = vpack.c.bf16 %v155, %v155
  %v412 = vpack.c.bf16 %v156, %v156
  %v413 = vpack.c.bf16 %v157, %v157
  %v414 = vpack.c.bf16 %v158, %v158
  %v415 = vpack.c.bf16 %v159, %v159
  %v416 = vpack.c.bf16 %v160, %v160
  %v417 = vpack.c.bf16 %v161, %v161
  %v418 = vpack.c.bf16 %v162, %v162
  %v419 = vpack.c.bf16 %v163, %v163
  %v420 = vpack.c.bf16 %v164, %v164
  %v421 = vpack.c.bf16 %v165, %v165
  %v422 = vpack.c.bf16 %v166, %v166
  %v423 = vpack.c.bf16 %v167, %v167
  %v424 = vpack.c.bf16 %v168, %v168
  %v425 = vpack.c.bf16 %v169, %v169
  %v426 = vpack.c.bf16 %v170, %v170
  %v427 = vpack.c.bf16 %v171, %v171
  %v428 = vpack.c.bf16 %v172, %v172
  %v429 = vpack.c.bf16 %v173, %v173
  %v430 = vpack.c.bf16 %v174, %v174
  %v431 = vpack.c.bf16 %v175, %v175
  %v432 = vpack.c.bf16 %v176, %v176
  %v433 = vpack.c.bf16 %v177, %v177
  %v434 = vpack.c.bf16 %v178, %v178
  %v435 = vpack.c.bf16 %v179, %v179
  %v436 = vpack.c.bf16 %v180, %v180
  %v437 = vpack.c.bf16 %v181, %v181
  %v438 = vpack.c.bf16 %v182, %v182
  %v439 = vpack.c.bf16 %v183, %v183
  %v440 = vpack.c.bf16 %v184, %v184
  %v441 = vpack.c.bf16 %v185, %v185
  %v442 = vpack.c.bf16 %v186, %v186
  %v443 = vpack.c.bf16 %v187, %v187
  %v444 = vpack.c.bf16 %v188, %v188
  %v445 = vpack.c.bf16 %v189, %v189
  %v446 = vpack.c.bf16 %v190, %v190
  %v447 = vpack.c.bf16 %v191, %v191
  %v448 = vpack.c.bf16 %v192, %v192
  %v449 = vpack.c.bf16 %v193, %v193
  %v450 = vpack.c.bf16 %v194, %v194
  %v451 = vpack.c.bf16 %v195, %v195
  %v452 = vpack.c.bf16 %v196, %v196
  %v453 = vpack.c.bf16 %v197, %v197
  %v454 = vpack.c.bf16 %v198, %v198
  %v455 = vpack.c.bf16 %v199, %v199
  %v456 = vpack.c.bf16 %v200, %v200
  %v457 = vpack.c.bf16 %v201, %v201
  %v458 = vpack.c.bf16 %v202, %v202
  %v459 = vpack.c.bf16 %v203, %v203
  %v460 = vpack.c.bf16 %v204, %v204
  %v461 = vpack.c.bf16 %v205, %v205
  %v462 = vpack.c.bf16 %v206, %v206
  %v463 = vpack.c.bf16 %v207, %v207
  %v464 = vpack.c.bf16 %v208, %v208
  %v465 = vpack.c.bf16 %v209, %v209
  %v466 = vpack.c.bf16 %v210, %v210
  %v467 = vpack.c.bf16 %v211, %v211
  %v468 = vpack.c.bf16 %v212, %v212
  %v469 = vpack.c.bf16 %v213, %v213
  %v470 = vpack.c.bf16 %v214, %v214
  %v471 = vpack.c.bf16 %v215, %v215
  %v472 = vpack.c.bf16 %v216, %v216
  %v473 = vpack.c.bf16 %v217, %v217
  %v474 = vpack.c.bf16 %v218, %v218
  %v475 = vpack.c.bf16 %v219, %v219
  %v476 = vpack.c.bf16 %v220, %v220
  %v477 = vpack.c.bf16 %v221, %v221
  %v478 = vpack.c.bf16 %v222, %v222
  %v479 = vpack.c.bf16 %v223, %v223
  %v480 = vpack.c.bf16 %v224, %v224
  %v481 = vpack.c.bf16 %v225, %v225
  %v482 = vpack.c.bf16 %v226, %v226
  %v483 = vpack.c.bf16 %v227, %v227
  %v484 = vpack.c.bf16 %v228, %v228
  %v485 = vpack.c.bf16 %v229, %v229
  %v486 = vpack.c.bf16 %v230, %v230
  %v487 = vpack.c.bf16 %v231, %v231
  %v488 = vpack.c.bf16 %v232, %v232
  %v489 = vpack.c.bf16 %v233, %v233
  %v490 = vpack.c.bf16 %v234, %v234
  %v491 = vpack.c.bf16 %v235, %v235
  %v492 = vpack.c.bf16 %v236, %v236
  %v493 = vpack.c.bf16 %v237, %v237
  %v494 = vpack.c.bf16 %v238, %v238
  %v495 = vpack.c.bf16 %v239, %v239
  %v496 = vpack.c.bf16 %v240, %v240
  %v497 = vpack.c.bf16 %v241, %v241
  %v498 = vpack.c.bf16 %v242, %v242
  %v499 = vpack.c.bf16 %v243, %v243
  %v500 = vpack.c.bf16 %v244, %v244
  %v501 = vpack.c.bf16 %v245, %v245
  %v502 = vpack.c.bf16 %v246, %v246
  %v503 = vpack.c.bf16 %v247, %v247
  %v504 = vpack.c.bf16 %v248, %v248
  %v505 = vpack.c.bf16 %v249, %v249
  %v506 = vpack.c.bf16 %v250, %v250
  %v507 = vpack.c.bf16 %v251, %v251
  %v508 = vpack.c.bf16 %v252, %v252
  %v509 = vpack.c.bf16 %v253, %v253
  %v510 = vpack.c.bf16 %v254, %v254
  %v511 = vpack.c.bf16 %v255, %v255
  %v512 = vpack.c.bf16 %v256, %v256
  %v513 = vpack.c.bf16 %v257, %v257
  %v514 = vpack.c.bf16 %v258, %v258
  %v515 = vpack.c.bf16 %v259, %v259
  %v516 = vpack.c.bf16 %v260, %v260
  %v517 = vpack.c.bf16 %v261, %v261
  %v518 = vpack.c.bf16 %v262, %v262
  %v519 = vpack.c.bf16 %v263, %v263
  %v520 = vpack.c.bf16 %v264, %v264
  %v521 = vpack.c.bf16 %v265, %v265
  %v522 = vpack.c.bf16 %v266, %v266
  %v523 = vpack.c.bf16 %v267, %v267
  %v524 = vpack.c.bf16 %v268, %v268
  %v525 = vpack.c.bf16 %v269, %v269
  %v526 = vpack.c.bf16 %v270, %v270
  %v527 = vpack.c.bf16 %v271, %v271
  %v528 = vld [vmem:[%s1] sm:$0xff]
  %v529 = vld [vmem:[%s1 + $0x8] sm:$0xff]
  %v530 = vld [vmem:[%s1 + $0x10] sm:$0xff]
  %v531 = vld [vmem:[%s1 + $0x18] sm:$0xff]
  %v532 = vpack.c.bf16 %v529, %v528
  %v533 = vpack.c.bf16 %v531, %v530
  %v790 = vunpack.c.l.b16 %v272
  %v791 = vunpack.c.l.b16 %v273
  %v792 = vunpack.c.l.b16 %v274
  %v793 = vunpack.c.l.b16 %v275
  %v794 = vunpack.c.l.b16 %v276
  %v795 = vunpack.c.l.b16 %v277
  %v796 = vunpack.c.l.b16 %v278
  %v797 = vunpack.c.l.b16 %v279
  %v798 = vunpack.c.l.b16 %v280
  %v799 = vunpack.c.l.b16 %v281
  %v800 = vunpack.c.l.b16 %v282
  %v801 = vunpack.c.l.b16 %v283
  %v802 = vunpack.c.l.b16 %v284
  %v803 = vunpack.c.l.b16 %v285
  %v804 = vunpack.c.l.b16 %v286
  %v805 = vunpack.c.l.b16 %v287
  %v806 = vunpack.c.l.b16 %v288
  %v807 = vunpack.c.l.b16 %v289
  %v808 = vunpack.c.l.b16 %v290
  %v809 = vunpack.c.l.b16 %v291
  %v810 = vunpack.c.l.b16 %v292
  %v811 = vunpack.c.l.b16 %v293
  %v812 = vunpack.c.l.b16 %v294
  %v813 = vunpack.c.l.b16 %v295
  %v814 = vunpack.c.l.b16 %v296
  %v815 = vunpack.c.l.b16 %v297
  %v816 = vunpack.c.l.b16 %v298
  %v817 = vunpack.c.l.b16 %v299
  %v818 = vunpack.c.l.b16 %v300
  %v819 = vunpack.c.l.b16 %v301
  %v820 = vunpack.c.l.b16 %v302
  %v821 = vunpack.c.l.b16 %v303
  %v822 = vunpack.c.l.b16 %v304
  %v823 = vunpack.c.l.b16 %v305
  %v824 = vunpack.c.l.b16 %v306
  %v825 = vunpack.c.l.b16 %v307
  %v826 = vunpack.c.l.b16 %v308
  %v827 = vunpack.c.l.b16 %v309
  %v828 = vunpack.c.l.b16 %v310
  %v829 = vunpack.c.l.b16 %v311
  %v830 = vunpack.c.l.b16 %v312
  %v831 = vunpack.c.l.b16 %v313
  %v832 = vunpack.c.l.b16 %v314
  %v833 = vunpack.c.l.b16 %v315
  %v834 = vunpack.c.l.b16 %v316
  %v835 = vunpack.c.l.b16 %v317
  %v836 = vunpack.c.l.b16 %v318
  %v837 = vunpack.c.l.b16 %v319
  %v838 = vunpack.c.l.b16 %v320
  %v839 = vunpack.c.l.b16 %v321
  %v840 = vunpack.c.l.b16 %v322
  %v841 = vunpack.c.l.b16 %v323
  %v842 = vunpack.c.l.b16 %v324
  %v843 = vunpack.c.l.b16 %v325
  %v844 = vunpack.c.l.b16 %v326
  %v845 = vunpack.c.l.b16 %v327
  %v846 = vunpack.c.l.b16 %v328
  %v847 = vunpack.c.l.b16 %v329
  %v848 = vunpack.c.l.b16 %v330
  %v849 = vunpack.c.l.b16 %v331
  %v850 = vunpack.c.l.b16 %v332
  %v851 = vunpack.c.l.b16 %v333
  %v852 = vunpack.c.l.b16 %v334
  %v853 = vunpack.c.l.b16 %v335
  %v854 = vunpack.c.l.b16 %v336
  %v855 = vunpack.c.l.b16 %v337
  %v856 = vunpack.c.l.b16 %v338
  %v857 = vunpack.c.l.b16 %v339
  %v858 = vunpack.c.l.b16 %v340
  %v859 = vunpack.c.l.b16 %v341
  %v860 = vunpack.c.l.b16 %v342
  %v861 = vunpack.c.l.b16 %v343
  %v862 = vunpack.c.l.b16 %v344
  %v863 = vunpack.c.l.b16 %v345
  %v864 = vunpack.c.l.b16 %v346
  %v865 = vunpack.c.l.b16 %v347
  %v866 = vunpack.c.l.b16 %v348
  %v867 = vunpack.c.l.b16 %v349
  %v868 = vunpack.c.l.b16 %v350
  %v869 = vunpack.c.l.b16 %v351
  %v870 = vunpack.c.l.b16 %v352
  %v871 = vunpack.c.l.b16 %v353
  %v872 = vunpack.c.l.b16 %v354
  %v873 = vunpack.c.l.b16 %v355
  %v874 = vunpack.c.l.b16 %v356
  %v875 = vunpack.c.l.b16 %v357
  %v876 = vunpack.c.l.b16 %v358
  %v877 = vunpack.c.l.b16 %v359
  %v878 = vunpack.c.l.b16 %v360
  %v879 = vunpack.c.l.b16 %v361
  %v880 = vunpack.c.l.b16 %v362
  %v881 = vunpack.c.l.b16 %v363
  %v882 = vunpack.c.l.b16 %v364
  %v883 = vunpack.c.l.b16 %v365
  %v884 = vunpack.c.l.b16 %v366
  %v885 = vunpack.c.l.b16 %v367
  %v886 = vunpack.c.l.b16 %v368
  %v887 = vunpack.c.l.b16 %v369
  %v888 = vunpack.c.l.b16 %v370
  %v889 = vunpack.c.l.b16 %v371
  %v890 = vunpack.c.l.b16 %v372
  %v891 = vunpack.c.l.b16 %v373
  %v892 = vunpack.c.l.b16 %v374
  %v893 = vunpack.c.l.b16 %v375
  %v894 = vunpack.c.l.b16 %v376
  %v895 = vunpack.c.l.b16 %v377
  %v896 = vunpack.c.l.b16 %v378
  %v897 = vunpack.c.l.b16 %v379
  %v898 = vunpack.c.l.b16 %v380
  %v899 = vunpack.c.l.b16 %v381
  %v900 = vunpack.c.l.b16 %v382
  %v901 = vunpack.c.l.b16 %v383
  %v902 = vunpack.c.l.b16 %v384
  %v903 = vunpack.c.l.b16 %v385
  %v904 = vunpack.c.l.b16 %v386
  %v905 = vunpack.c.l.b16 %v387
  %v906 = vunpack.c.l.b16 %v388
  %v907 = vunpack.c.l.b16 %v389
  %v908 = vunpack.c.l.b16 %v390
  %v909 = vunpack.c.l.b16 %v391
  %v910 = vunpack.c.l.b16 %v392
  %v911 = vunpack.c.l.b16 %v393
  %v912 = vunpack.c.l.b16 %v394
  %v913 = vunpack.c.l.b16 %v395
  %v914 = vunpack.c.l.b16 %v396
  %v915 = vunpack.c.l.b16 %v397
  %v916 = vunpack.c.l.b16 %v398
  %v917 = vunpack.c.l.b16 %v399
  %v918 = vunpack.c.l.b16 %v400
  %v919 = vunpack.c.l.b16 %v401
  %v920 = vunpack.c.l.b16 %v402
  %v921 = vunpack.c.l.b16 %v403
  %v922 = vunpack.c.l.b16 %v404
  %v923 = vunpack.c.l.b16 %v405
  %v924 = vunpack.c.l.b16 %v406
  %v925 = vunpack.c.l.b16 %v407
  %v926 = vunpack.c.l.b16 %v408
  %v927 = vunpack.c.l.b16 %v409
  %v928 = vunpack.c.l.b16 %v410
  %v929 = vunpack.c.l.b16 %v411
  %v930 = vunpack.c.l.b16 %v412
  %v931 = vunpack.c.l.b16 %v413
  %v932 = vunpack.c.l.b16 %v414
  %v933 = vunpack.c.l.b16 %v415
  %v934 = vunpack.c.l.b16 %v416
  %v935 = vunpack.c.l.b16 %v417
  %v936 = vunpack.c.l.b16 %v418
  %v937 = vunpack.c.l.b16 %v419
  %v938 = vunpack.c.l.b16 %v420
  %v939 = vunpack.c.l.b16 %v421
  %v940 = vunpack.c.l.b16 %v422
  %v941 = vunpack.c.l.b16 %v423
  %v942 = vunpack.c.l.b16 %v424
  %v943 = vunpack.c.l.b16 %v425
  %v944 = vunpack.c.l.b16 %v426
  %v945 = vunpack.c.l.b16 %v427
  %v946 = vunpack.c.l.b16 %v428
  %v947 = vunpack.c.l.b16 %v429
  %v948 = vunpack.c.l.b16 %v430
  %v949 = vunpack.c.l.b16 %v431
  %v950 = vunpack.c.l.b16 %v432
  %v951 = vunpack.c.l.b16 %v433
  %v952 = vunpack.c.l.b16 %v434
  %v953 = vunpack.c.l.b16 %v435
  %v954 = vunpack.c.l.b16 %v436
  %v955 = vunpack.c.l.b16 %v437
  %v956 = vunpack.c.l.b16 %v438
  %v957 = vunpack.c.l.b16 %v439
  %v958 = vunpack.c.l.b16 %v440
  %v959 = vunpack.c.l.b16 %v441
  %v960 = vunpack.c.l.b16 %v442
  %v961 = vunpack.c.l.b16 %v443
  %v962 = vunpack.c.l.b16 %v444
  %v963 = vunpack.c.l.b16 %v445
  %v964 = vunpack.c.l.b16 %v446
  %v965 = vunpack.c.l.b16 %v447
  %v966 = vunpack.c.l.b16 %v448
  %v967 = vunpack.c.l.b16 %v449
  %v968 = vunpack.c.l.b16 %v450
  %v969 = vunpack.c.l.b16 %v451
  %v970 = vunpack.c.l.b16 %v452
  %v971 = vunpack.c.l.b16 %v453
  %v972 = vunpack.c.l.b16 %v454
  %v973 = vunpack.c.l.b16 %v455
  %v974 = vunpack.c.l.b16 %v456
  %v975 = vunpack.c.l.b16 %v457
  %v976 = vunpack.c.l.b16 %v458
  %v977 = vunpack.c.l.b16 %v459
  %v978 = vunpack.c.l.b16 %v460
  %v979 = vunpack.c.l.b16 %v461
  %v980 = vunpack.c.l.b16 %v462
  %v981 = vunpack.c.l.b16 %v463
  %v982 = vunpack.c.l.b16 %v464
  %v983 = vunpack.c.l.b16 %v465
  %v984 = vunpack.c.l.b16 %v466
  %v985 = vunpack.c.l.b16 %v467
  %v986 = vunpack.c.l.b16 %v468
  %v987 = vunpack.c.l.b16 %v469
  %v988 = vunpack.c.l.b16 %v470
  %v989 = vunpack.c.l.b16 %v471
  %v990 = vunpack.c.l.b16 %v472
  %v991 = vunpack.c.l.b16 %v473
  %v992 = vunpack.c.l.b16 %v474
  %v993 = vunpack.c.l.b16 %v475
  %v994 = vunpack.c.l.b16 %v476
  %v995 = vunpack.c.l.b16 %v477
  %v996 = vunpack.c.l.b16 %v478
  %v997 = vunpack.c.l.b16 %v479
  %v998 = vunpack.c.l.b16 %v480
  %v999 = vunpack.c.l.b16 %v481
  %v1000 = vunpack.c.l.b16 %v482
  %v1001 = vunpack.c.l.b16 %v483
  %v1002 = vunpack.c.l.b16 %v484
  %v1003 = vunpack.c.l.b16 %v485
  %v1004 = vunpack.c.l.b16 %v486
  %v1005 = vunpack.c.l.b16 %v487
  %v1006 = vunpack.c.l.b16 %v488
  %v1007 = vunpack.c.l.b16 %v489
  %v1008 = vunpack.c.l.b16 %v490
  %v1009 = vunpack.c.l.b16 %v491
  %v1010 = vunpack.c.l.b16 %v492
  %v1011 = vunpack.c.l.b16 %v493
  %v1012 = vunpack.c.l.b16 %v494
  %v1013 = vunpack.c.l.b16 %v495
  %v1014 = vunpack.c.l.b16 %v496
  %v1015 = vunpack.c.l.b16 %v497
  %v1016 = vunpack.c.l.b16 %v498
  %v1017 = vunpack.c.l.b16 %v499
  %v1018 = vunpack.c.l.b16 %v500
  %v1019 = vunpack.c.l.b16 %v501
  %v1020 = vunpack.c.l.b16 %v502
  %v1021 = vunpack.c.l.b16 %v503
  %v1022 = vunpack.c.l.b16 %v504
  %v1023 = vunpack.c.l.b16 %v505
  %v1024 = vunpack.c.l.b16 %v506
  %v1025 = vunpack.c.l.b16 %v507
  %v1026 = vunpack.c.l.b16 %v508
  %v1027 = vunpack.c.l.b16 %v509
  %v1028 = vunpack.c.l.b16 %v510
  %v1029 = vunpack.c.l.b16 %v511
  %v1030 = vunpack.c.l.b16 %v512
  %v1031 = vunpack.c.l.b16 %v513
  %v1032 = vunpack.c.l.b16 %v514
  %v1033 = vunpack.c.l.b16 %v515
  %v1034 = vunpack.c.l.b16 %v516
  %v1035 = vunpack.c.l.b16 %v517
  %v1036 = vunpack.c.l.b16 %v518
  %v1037 = vunpack.c.l.b16 %v519
  %v1038 = vunpack.c.l.b16 %v520
  %v1039 = vunpack.c.l.b16 %v521
  %v1040 = vunpack.c.l.b16 %v522
  %v1041 = vunpack.c.l.b16 %v523
  %v1042 = vunpack.c.l.b16 %v524
  %v1043 = vunpack.c.l.b16 %v525
  %v1044 = vunpack.c.l.b16 %v526
  %v1045 = vunpack.c.l.b16 %v527
  %v1046 = vrot.slane %v791, 7
  %vm1047 = vcmask 1041409
  %v1048 = vsel %vm1047, %v1046, %v790
  %v1049 = vrot.slane %v792, 6
  %vm1050 = vcmask 1042434
  %v1051 = vsel %vm1050, %v1049, %v1048
  %v1052 = vrot.slane %v793, 5
  %vm1053 = vcmask 1043459
  %v1054 = vsel %vm1053, %v1052, %v1051
  %v1055 = vrot.slane %v794, 4
  %vm1056 = vcmask 1044484
  %v1057 = vsel %vm1056, %v1055, %v1054
  %v1058 = vrot.slane %v795, 3
  %vm1059 = vcmask 1045509
  %v1060 = vsel %vm1059, %v1058, %v1057
  %v1061 = vrot.slane %v796, 2
  %vm1062 = vcmask 1046534
  %v1063 = vsel %vm1062, %v1061, %v1060
  %v1064 = vrot.slane %v797, 1
  %vm1065 = vcmask 1047559
  %v1066 = vsel %vm1065, %v1064, %v1063
  %v1067 = vrot.slane %v799, 7
  %v1068 = vsel %vm1047, %v1067, %v798
  %v1069 = vrot.slane %v800, 6
  %v1070 = vsel %vm1050, %v1069, %v1068
  %v1071 = vrot.slane %v801, 5
  %v1072 = vsel %vm1053, %v1071, %v1070
  %v1073 = vrot.slane %v802, 4
  %v1074 = vsel %vm1056, %v1073, %v1072
  %v1075 = vrot.slane %v803, 3
  %v1076 = vsel %vm1059, %v1075, %v1074
  %v1077 = vrot.slane %v804, 2
  %v1078 = vsel %vm1062, %v1077, %v1076
  %v1079 = vrot.slane %v805, 1
  %v1080 = vsel %vm1065, %v1079, %v1078
  %v1081 = vrot.slane %v807, 7
  %v1082 = vsel %vm1047, %v1081, %v806
  %v1083 = vrot.slane %v808, 6
  %v1084 = vsel %vm1050, %v1083, %v1082
  %v1085 = vrot.slane %v809, 5
  %v1086 = vsel %vm1053, %v1085, %v1084
  %v1087 = vrot.slane %v810, 4
  %v1088 = vsel %vm1056, %v1087, %v1086
  %v1089 = vrot.slane %v811, 3
  %v1090 = vsel %vm1059, %v1089, %v1088
  %v1091 = vrot.slane %v812, 2
  %v1092 = vsel %vm1062, %v1091, %v1090
  %v1093 = vrot.slane %v813, 1
  %v1094 = vsel %vm1065, %v1093, %v1092
  %v1095 = vrot.slane %v815, 7
  %v1096 = vsel %vm1047, %v1095, %v814
  %v1097 = vrot.slane %v816, 6
  %v1098 = vsel %vm1050, %v1097, %v1096
  %v1099 = vrot.slane %v817, 5
  %v1100 = vsel %vm1053, %v1099, %v1098
  %v1101 = vrot.slane %v818, 4
  %v1102 = vsel %vm1056, %v1101, %v1100
  %v1103 = vrot.slane %v819, 3
  %v1104 = vsel %vm1059, %v1103, %v1102
  %v1105 = vrot.slane %v820, 2
  %v1106 = vsel %vm1062, %v1105, %v1104
  %v1107 = vrot.slane %v821, 1
  %v1108 = vsel %vm1065, %v1107, %v1106
  %v1109 = vrot.slane %v823, 7
  %v1110 = vsel %vm1047, %v1109, %v822
  %v1111 = vrot.slane %v824, 6
  %v1112 = vsel %vm1050, %v1111, %v1110
  %v1113 = vrot.slane %v825, 5
  %v1114 = vsel %vm1053, %v1113, %v1112
  %v1115 = vrot.slane %v826, 4
  %v1116 = vsel %vm1056, %v1115, %v1114
  %v1117 = vrot.slane %v827, 3
  %v1118 = vsel %vm1059, %v1117, %v1116
  %v1119 = vrot.slane %v828, 2
  %v1120 = vsel %vm1062, %v1119, %v1118
  %v1121 = vrot.slane %v829, 1
  %v1122 = vsel %vm1065, %v1121, %v1120
  %v1123 = vrot.slane %v831, 7
  %v1124 = vsel %vm1047, %v1123, %v830
  %v1125 = vrot.slane %v832, 6
  %v1126 = vsel %vm1050, %v1125, %v1124
  %v1127 = vrot.slane %v833, 5
  %v1128 = vsel %vm1053, %v1127, %v1126
  %v1129 = vrot.slane %v834, 4
  %v1130 = vsel %vm1056, %v1129, %v1128
  %v1131 = vrot.slane %v835, 3
  %v1132 = vsel %vm1059, %v1131, %v1130
  %v1133 = vrot.slane %v836, 2
  %v1134 = vsel %vm1062, %v1133, %v1132
  %v1135 = vrot.slane %v837, 1
  %v1136 = vsel %vm1065, %v1135, %v1134
  %v1137 = vrot.slane %v839, 7
  %v1138 = vsel %vm1047, %v1137, %v838
  %v1139 = vrot.slane %v840, 6
  %v1140 = vsel %vm1050, %v1139, %v1138
  %v1141 = vrot.slane %v841, 5
  %v1142 = vsel %vm1053, %v1141, %v1140
  %v1143 = vrot.slane %v842, 4
  %v1144 = vsel %vm1056, %v1143, %v1142
  %v1145 = vrot.slane %v843, 3
  %v1146 = vsel %vm1059, %v1145, %v1144
  %v1147 = vrot.slane %v844, 2
  %v1148 = vsel %vm1062, %v1147, %v1146
  %v1149 = vrot.slane %v845, 1
  %v1150 = vsel %vm1065, %v1149, %v1148
  %v1151 = vrot.slane %v847, 7
  %v1152 = vsel %vm1047, %v1151, %v846
  %v1153 = vrot.slane %v848, 6
  %v1154 = vsel %vm1050, %v1153, %v1152
  %v1155 = vrot.slane %v849, 5
  %v1156 = vsel %vm1053, %v1155, %v1154
  %v1157 = vrot.slane %v850, 4
  %v1158 = vsel %vm1056, %v1157, %v1156
  %v1159 = vrot.slane %v851, 3
  %v1160 = vsel %vm1059, %v1159, %v1158
  %v1161 = vrot.slane %v852, 2
  %v1162 = vsel %vm1062, %v1161, %v1160
  %v1163 = vrot.slane %v853, 1
  %v1164 = vsel %vm1065, %v1163, %v1162
  %v1165 = vrot.slane %v855, 7
  %v1166 = vsel %vm1047, %v1165, %v854
  %v1167 = vrot.slane %v856, 6
  %v1168 = vsel %vm1050, %v1167, %v1166
  %v1169 = vrot.slane %v857, 5
  %v1170 = vsel %vm1053, %v1169, %v1168
  %v1171 = vrot.slane %v858, 4
  %v1172 = vsel %vm1056, %v1171, %v1170
  %v1173 = vrot.slane %v859, 3
  %v1174 = vsel %vm1059, %v1173, %v1172
  %v1175 = vrot.slane %v860, 2
  %v1176 = vsel %vm1062, %v1175, %v1174
  %v1177 = vrot.slane %v861, 1
  %v1178 = vsel %vm1065, %v1177, %v1176
  %v1179 = vrot.slane %v863, 7
  %v1180 = vsel %vm1047, %v1179, %v862
  %v1181 = vrot.slane %v864, 6
  %v1182 = vsel %vm1050, %v1181, %v1180
  %v1183 = vrot.slane %v865, 5
  %v1184 = vsel %vm1053, %v1183, %v1182
  %v1185 = vrot.slane %v866, 4
  %v1186 = vsel %vm1056, %v1185, %v1184
  %v1187 = vrot.slane %v867, 3
  %v1188 = vsel %vm1059, %v1187, %v1186
  %v1189 = vrot.slane %v868, 2
  %v1190 = vsel %vm1062, %v1189, %v1188
  %v1191 = vrot.slane %v869, 1
  %v1192 = vsel %vm1065, %v1191, %v1190
  %v1193 = vrot.slane %v871, 7
  %v1194 = vsel %vm1047, %v1193, %v870
  %v1195 = vrot.slane %v872, 6
  %v1196 = vsel %vm1050, %v1195, %v1194
  %v1197 = vrot.slane %v873, 5
  %v1198 = vsel %vm1053, %v1197, %v1196
  %v1199 = vrot.slane %v874, 4
  %v1200 = vsel %vm1056, %v1199, %v1198
  %v1201 = vrot.slane %v875, 3
  %v1202 = vsel %vm1059, %v1201, %v1200
  %v1203 = vrot.slane %v876, 2
  %v1204 = vsel %vm1062, %v1203, %v1202
  %v1205 = vrot.slane %v877, 1
  %v1206 = vsel %vm1065, %v1205, %v1204
  %v1207 = vrot.slane %v879, 7
  %v1208 = vsel %vm1047, %v1207, %v878
  %v1209 = vrot.slane %v880, 6
  %v1210 = vsel %vm1050, %v1209, %v1208
  %v1211 = vrot.slane %v881, 5
  %v1212 = vsel %vm1053, %v1211, %v1210
  %v1213 = vrot.slane %v882, 4
  %v1214 = vsel %vm1056, %v1213, %v1212
  %v1215 = vrot.slane %v883, 3
  %v1216 = vsel %vm1059, %v1215, %v1214
  %v1217 = vrot.slane %v884, 2
  %v1218 = vsel %vm1062, %v1217, %v1216
  %v1219 = vrot.slane %v885, 1
  %v1220 = vsel %vm1065, %v1219, %v1218
  %v1221 = vrot.slane %v887, 7
  %v1222 = vsel %vm1047, %v1221, %v886
  %v1223 = vrot.slane %v888, 6
  %v1224 = vsel %vm1050, %v1223, %v1222
  %v1225 = vrot.slane %v889, 5
  %v1226 = vsel %vm1053, %v1225, %v1224
  %v1227 = vrot.slane %v890, 4
  %v1228 = vsel %vm1056, %v1227, %v1226
  %v1229 = vrot.slane %v891, 3
  %v1230 = vsel %vm1059, %v1229, %v1228
  %v1231 = vrot.slane %v892, 2
  %v1232 = vsel %vm1062, %v1231, %v1230
  %v1233 = vrot.slane %v893, 1
  %v1234 = vsel %vm1065, %v1233, %v1232
  %v1235 = vrot.slane %v895, 7
  %v1236 = vsel %vm1047, %v1235, %v894
  %v1237 = vrot.slane %v896, 6
  %v1238 = vsel %vm1050, %v1237, %v1236
  %v1239 = vrot.slane %v897, 5
  %v1240 = vsel %vm1053, %v1239, %v1238
  %v1241 = vrot.slane %v898, 4
  %v1242 = vsel %vm1056, %v1241, %v1240
  %v1243 = vrot.slane %v899, 3
  %v1244 = vsel %vm1059, %v1243, %v1242
  %v1245 = vrot.slane %v900, 2
  %v1246 = vsel %vm1062, %v1245, %v1244
  %v1247 = vrot.slane %v901, 1
  %v1248 = vsel %vm1065, %v1247, %v1246
  %v1249 = vrot.slane %v903, 7
  %v1250 = vsel %vm1047, %v1249, %v902
  %v1251 = vrot.slane %v904, 6
  %v1252 = vsel %vm1050, %v1251, %v1250
  %v1253 = vrot.slane %v905, 5
  %v1254 = vsel %vm1053, %v1253, %v1252
  %v1255 = vrot.slane %v906, 4
  %v1256 = vsel %vm1056, %v1255, %v1254
  %v1257 = vrot.slane %v907, 3
  %v1258 = vsel %vm1059, %v1257, %v1256
  %v1259 = vrot.slane %v908, 2
  %v1260 = vsel %vm1062, %v1259, %v1258
  %v1261 = vrot.slane %v909, 1
  %v1262 = vsel %vm1065, %v1261, %v1260
  %v1263 = vrot.slane %v911, 7
  %v1264 = vsel %vm1047, %v1263, %v910
  %v1265 = vrot.slane %v912, 6
  %v1266 = vsel %vm1050, %v1265, %v1264
  %v1267 = vrot.slane %v913, 5
  %v1268 = vsel %vm1053, %v1267, %v1266
  %v1269 = vrot.slane %v914, 4
  %v1270 = vsel %vm1056, %v1269, %v1268
  %v1271 = vrot.slane %v915, 3
  %v1272 = vsel %vm1059, %v1271, %v1270
  %v1273 = vrot.slane %v916, 2
  %v1274 = vsel %vm1062, %v1273, %v1272
  %v1275 = vrot.slane %v917, 1
  %v1276 = vsel %vm1065, %v1275, %v1274
  %v1277 = vrot.slane %v919, 7
  %v1278 = vsel %vm1047, %v1277, %v918
  %v1279 = vrot.slane %v920, 6
  %v1280 = vsel %vm1050, %v1279, %v1278
  %v1281 = vrot.slane %v921, 5
  %v1282 = vsel %vm1053, %v1281, %v1280
  %v1283 = vrot.slane %v922, 4
  %v1284 = vsel %vm1056, %v1283, %v1282
  %v1285 = vrot.slane %v923, 3
  %v1286 = vsel %vm1059, %v1285, %v1284
  %v1287 = vrot.slane %v924, 2
  %v1288 = vsel %vm1062, %v1287, %v1286
  %v1289 = vrot.slane %v925, 1
  %v1290 = vsel %vm1065, %v1289, %v1288
  %v1291 = vrot.slane %v927, 7
  %v1292 = vsel %vm1047, %v1291, %v926
  %v1293 = vrot.slane %v928, 6
  %v1294 = vsel %vm1050, %v1293, %v1292
  %v1295 = vrot.slane %v929, 5
  %v1296 = vsel %vm1053, %v1295, %v1294
  %v1297 = vrot.slane %v930, 4
  %v1298 = vsel %vm1056, %v1297, %v1296
  %v1299 = vrot.slane %v931, 3
  %v1300 = vsel %vm1059, %v1299, %v1298
  %v1301 = vrot.slane %v932, 2
  %v1302 = vsel %vm1062, %v1301, %v1300
  %v1303 = vrot.slane %v933, 1
  %v1304 = vsel %vm1065, %v1303, %v1302
  %v1305 = vrot.slane %v935, 7
  %v1306 = vsel %vm1047, %v1305, %v934
  %v1307 = vrot.slane %v936, 6
  %v1308 = vsel %vm1050, %v1307, %v1306
  %v1309 = vrot.slane %v937, 5
  %v1310 = vsel %vm1053, %v1309, %v1308
  %v1311 = vrot.slane %v938, 4
  %v1312 = vsel %vm1056, %v1311, %v1310
  %v1313 = vrot.slane %v939, 3
  %v1314 = vsel %vm1059, %v1313, %v1312
  %v1315 = vrot.slane %v940, 2
  %v1316 = vsel %vm1062, %v1315, %v1314
  %v1317 = vrot.slane %v941, 1
  %v1318 = vsel %vm1065, %v1317, %v1316
  %v1319 = vrot.slane %v943, 7
  %v1320 = vsel %vm1047, %v1319, %v942
  %v1321 = vrot.slane %v944, 6
  %v1322 = vsel %vm1050, %v1321, %v1320
  %v1323 = vrot.slane %v945, 5
  %v1324 = vsel %vm1053, %v1323, %v1322
  %v1325 = vrot.slane %v946, 4
  %v1326 = vsel %vm1056, %v1325, %v1324
  %v1327 = vrot.slane %v947, 3
  %v1328 = vsel %vm1059, %v1327, %v1326
  %v1329 = vrot.slane %v948, 2
  %v1330 = vsel %vm1062, %v1329, %v1328
  %v1331 = vrot.slane %v949, 1
  %v1332 = vsel %vm1065, %v1331, %v1330
  %v1333 = vrot.slane %v951, 7
  %v1334 = vsel %vm1047, %v1333, %v950
  %v1335 = vrot.slane %v952, 6
  %v1336 = vsel %vm1050, %v1335, %v1334
  %v1337 = vrot.slane %v953, 5
  %v1338 = vsel %vm1053, %v1337, %v1336
  %v1339 = vrot.slane %v954, 4
  %v1340 = vsel %vm1056, %v1339, %v1338
  %v1341 = vrot.slane %v955, 3
  %v1342 = vsel %vm1059, %v1341, %v1340
  %v1343 = vrot.slane %v956, 2
  %v1344 = vsel %vm1062, %v1343, %v1342
  %v1345 = vrot.slane %v957, 1
  %v1346 = vsel %vm1065, %v1345, %v1344
  %v1347 = vrot.slane %v959, 7
  %v1348 = vsel %vm1047, %v1347, %v958
  %v1349 = vrot.slane %v960, 6
  %v1350 = vsel %vm1050, %v1349, %v1348
  %v1351 = vrot.slane %v961, 5
  %v1352 = vsel %vm1053, %v1351, %v1350
  %v1353 = vrot.slane %v962, 4
  %v1354 = vsel %vm1056, %v1353, %v1352
  %v1355 = vrot.slane %v963, 3
  %v1356 = vsel %vm1059, %v1355, %v1354
  %v1357 = vrot.slane %v964, 2
  %v1358 = vsel %vm1062, %v1357, %v1356
  %v1359 = vrot.slane %v965, 1
  %v1360 = vsel %vm1065, %v1359, %v1358
  %v1361 = vrot.slane %v967, 7
  %v1362 = vsel %vm1047, %v1361, %v966
  %v1363 = vrot.slane %v968, 6
  %v1364 = vsel %vm1050, %v1363, %v1362
  %v1365 = vrot.slane %v969, 5
  %v1366 = vsel %vm1053, %v1365, %v1364
  %v1367 = vrot.slane %v970, 4
  %v1368 = vsel %vm1056, %v1367, %v1366
  %v1369 = vrot.slane %v971, 3
  %v1370 = vsel %vm1059, %v1369, %v1368
  %v1371 = vrot.slane %v972, 2
  %v1372 = vsel %vm1062, %v1371, %v1370
  %v1373 = vrot.slane %v973, 1
  %v1374 = vsel %vm1065, %v1373, %v1372
  %v1375 = vrot.slane %v975, 7
  %v1376 = vsel %vm1047, %v1375, %v974
  %v1377 = vrot.slane %v976, 6
  %v1378 = vsel %vm1050, %v1377, %v1376
  %v1379 = vrot.slane %v977, 5
  %v1380 = vsel %vm1053, %v1379, %v1378
  %v1381 = vrot.slane %v978, 4
  %v1382 = vsel %vm1056, %v1381, %v1380
  %v1383 = vrot.slane %v979, 3
  %v1384 = vsel %vm1059, %v1383, %v1382
  %v1385 = vrot.slane %v980, 2
  %v1386 = vsel %vm1062, %v1385, %v1384
  %v1387 = vrot.slane %v981, 1
  %v1388 = vsel %vm1065, %v1387, %v1386
  %v1389 = vrot.slane %v983, 7
  %v1390 = vsel %vm1047, %v1389, %v982
  %v1391 = vrot.slane %v984, 6
  %v1392 = vsel %vm1050, %v1391, %v1390
  %v1393 = vrot.slane %v985, 5
  %v1394 = vsel %vm1053, %v1393, %v1392
  %v1395 = vrot.slane %v986, 4
  %v1396 = vsel %vm1056, %v1395, %v1394
  %v1397 = vrot.slane %v987, 3
  %v1398 = vsel %vm1059, %v1397, %v1396
  %v1399 = vrot.slane %v988, 2
  %v1400 = vsel %vm1062, %v1399, %v1398
  %v1401 = vrot.slane %v989, 1
  %v1402 = vsel %vm1065, %v1401, %v1400
  %v1403 = vrot.slane %v991, 7
  %v1404 = vsel %vm1047, %v1403, %v990
  %v1405 = vrot.slane %v992, 6
  %v1406 = vsel %vm1050, %v1405, %v1404
  %v1407 = vrot.slane %v993, 5
  %v1408 = vsel %vm1053, %v1407, %v1406
  %v1409 = vrot.slane %v994, 4
  %v1410 = vsel %vm1056, %v1409, %v1408
  %v1411 = vrot.slane %v995, 3
  %v1412 = vsel %vm1059, %v1411, %v1410
  %v1413 = vrot.slane %v996, 2
  %v1414 = vsel %vm1062, %v1413, %v1412
  %v1415 = vrot.slane %v997, 1
  %v1416 = vsel %vm1065, %v1415, %v1414
  %v1417 = vrot.slane %v999, 7
  %v1418 = vsel %vm1047, %v1417, %v998
  %v1419 = vrot.slane %v1000, 6
  %v1420 = vsel %vm1050, %v1419, %v1418
  %v1421 = vrot.slane %v1001, 5
  %v1422 = vsel %vm1053, %v1421, %v1420
  %v1423 = vrot.slane %v1002, 4
  %v1424 = vsel %vm1056, %v1423, %v1422
  %v1425 = vrot.slane %v1003, 3
  %v1426 = vsel %vm1059, %v1425, %v1424
  %v1427 = vrot.slane %v1004, 2
  %v1428 = vsel %vm1062, %v1427, %v1426
  %v1429 = vrot.slane %v1005, 1
  %v1430 = vsel %vm1065, %v1429, %v1428
  %v1431 = vrot.slane %v1007, 7
  %v1432 = vsel %vm1047, %v1431, %v1006
  %v1433 = vrot.slane %v1008, 6
  %v1434 = vsel %vm1050, %v1433, %v1432
  %v1435 = vrot.slane %v1009, 5
  %v1436 = vsel %vm1053, %v1435, %v1434
  %v1437 = vrot.slane %v1010, 4
  %v1438 = vsel %vm1056, %v1437, %v1436
  %v1439 = vrot.slane %v1011, 3
  %v1440 = vsel %vm1059, %v1439, %v1438
  %v1441 = vrot.slane %v1012, 2
  %v1442 = vsel %vm1062, %v1441, %v1440
  %v1443 = vrot.slane %v1013, 1
  %v1444 = vsel %vm1065, %v1443, %v1442
  %v1445 = vrot.slane %v1015, 7
  %v1446 = vsel %vm1047, %v1445, %v1014
  %v1447 = vrot.slane %v1016, 6
  %v1448 = vsel %vm1050, %v1447, %v1446
  %v1449 = vrot.slane %v1017, 5
  %v1450 = vsel %vm1053, %v1449, %v1448
  %v1451 = vrot.slane %v1018, 4
  %v1452 = vsel %vm1056, %v1451, %v1450
  %v1453 = vrot.slane %v1019, 3
  %v1454 = vsel %vm1059, %v1453, %v1452
  %v1455 = vrot.slane %v1020, 2
  %v1456 = vsel %vm1062, %v1455, %v1454
  %v1457 = vrot.slane %v1021, 1
  %v1458 = vsel %vm1065, %v1457, %v1456
  %v1459 = vrot.slane %v1023, 7
  %v1460 = vsel %vm1047, %v1459, %v1022
  %v1461 = vrot.slane %v1024, 6
  %v1462 = vsel %vm1050, %v1461, %v1460
  %v1463 = vrot.slane %v1025, 5
  %v1464 = vsel %vm1053, %v1463, %v1462
  %v1465 = vrot.slane %v1026, 4
  %v1466 = vsel %vm1056, %v1465, %v1464
  %v1467 = vrot.slane %v1027, 3
  %v1468 = vsel %vm1059, %v1467, %v1466
  %v1469 = vrot.slane %v1028, 2
  %v1470 = vsel %vm1062, %v1469, %v1468
  %v1471 = vrot.slane %v1029, 1
  %v1472 = vsel %vm1065, %v1471, %v1470
  %v1473 = vrot.slane %v1031, 7
  %v1474 = vsel %vm1047, %v1473, %v1030
  %v1475 = vrot.slane %v1032, 6
  %v1476 = vsel %vm1050, %v1475, %v1474
  %v1477 = vrot.slane %v1033, 5
  %v1478 = vsel %vm1053, %v1477, %v1476
  %v1479 = vrot.slane %v1034, 4
  %v1480 = vsel %vm1056, %v1479, %v1478
  %v1481 = vrot.slane %v1035, 3
  %v1482 = vsel %vm1059, %v1481, %v1480
  %v1483 = vrot.slane %v1036, 2
  %v1484 = vsel %vm1062, %v1483, %v1482
  %v1485 = vrot.slane %v1037, 1
  %v1486 = vsel %vm1065, %v1485, %v1484
  %v1487 = vrot.slane %v1039, 7
  %v1488 = vsel %vm1047, %v1487, %v1038
  %v1489 = vrot.slane %v1040, 6
  %v1490 = vsel %vm1050, %v1489, %v1488
  %v1491 = vrot.slane %v1041, 5
  %v1492 = vsel %vm1053, %v1491, %v1490
  %v1493 = vrot.slane %v1042, 4
  %v1494 = vsel %vm1056, %v1493, %v1492
  %v1495 = vrot.slane %v1043, 3
  %v1496 = vsel %vm1059, %v1495, %v1494
  %v1497 = vrot.slane %v1044, 2
  %v1498 = vsel %vm1062, %v1497, %v1496
  %v1499 = vrot.slane %v1045, 1
  %v1500 = vsel %vm1065, %v1499, %v1498
  %v1501 = vpack.c.b16 %v1080, %v1066
  %v1502 = vpack.c.b16 %v1108, %v1094
  %v1503 = vpack.c.b16 %v1136, %v1122
  %v1504 = vpack.c.b16 %v1164, %v1150
  %v1505 = vpack.c.b16 %v1192, %v1178
  %v1506 = vpack.c.b16 %v1220, %v1206
  %v1507 = vpack.c.b16 %v1248, %v1234
  %v1508 = vpack.c.b16 %v1276, %v1262
  %v1509 = vpack.c.b16 %v1304, %v1290
  %v1510 = vpack.c.b16 %v1332, %v1318
  %v1511 = vpack.c.b16 %v1360, %v1346
  %v1512 = vpack.c.b16 %v1388, %v1374
  %v1513 = vpack.c.b16 %v1416, %v1402
  %v1514 = vpack.c.b16 %v1444, %v1430
  %v1515 = vpack.c.b16 %v1472, %v1458
  %v1516 = vpack.c.b16 %v1500, %v1486
  %vm1517 = vcmask 261120
  %v1519 = vsel %vm1517, %v1501, 0
  %v1522 = vsel %vm1517, %v1502, 0
  %v1525 = vsel %vm1517, %v1503, 0
  %v1528 = vsel %vm1517, %v1504, 0
  %v1531 = vsel %vm1517, %v1505, 0
  %v1534 = vsel %vm1517, %v1506, 0
  %v1537 = vsel %vm1517, %v1507, 0
  %v1540 = vsel %vm1517, %v1508, 0
  %v1543 = vsel %vm1517, %v1509, 0
  %v1546 = vsel %vm1517, %v1510, 0
  %v1549 = vsel %vm1517, %v1511, 0
  %v1552 = vsel %vm1517, %v1512, 0
  %v1555 = vsel %vm1517, %v1513, 0
  %v1558 = vsel %vm1517, %v1514, 0
  %v1561 = vsel %vm1517, %v1515, 0
  %v1564 = vsel %vm1517, %v1516, 0
  %1566 = vmatprep.subr.bf16.mxu0 0
  %1567 = vmatpush1.bf16.msra.mxu0 %v532
  %1568 = vmatprep.subr.bf16.mxu0 0
  %1569 = vmatpush1.bf16.msra.mxu0 %v533
  %1570 = vmatprep.subr.bf16.mxu0 0
  %1571 = vmatpush1.bf16.msra.mxu0 0
  %1572 = vmatprep.subr.bf16.mxu0 0
  %1573 = vmatpush1.bf16.msra.mxu0 0
  %1574 = vmatprep.subr.bf16.mxu0 0
  %1575 = vmatpush1.bf16.msra.mxu0 0
  %1576 = vmatprep.subr.bf16.mxu0 0
  %1577 = vmatpush1.bf16.msra.mxu0 0
  %1578 = vmatprep.subr.bf16.mxu0 0
  %1579 = vmatpush1.bf16.msra.mxu0 0
  %1580 = vmatprep.subr.bf16.mxu0 0
  %1581 = vmatpush1.bf16.msra.mxu0 0
  %1582 = vmatprep.subr.bf16.mxu0 0
  %1583 = vmatpush1.bf16.msra.mxu0 0
  %1584 = vmatprep.subr.bf16.mxu0 0
  %1585 = vmatpush1.bf16.msra.mxu0 0
  %1586 = vmatprep.subr.bf16.mxu0 0
  %1587 = vmatpush1.bf16.msra.mxu0 0
  %1588 = vmatprep.subr.bf16.mxu0 0
  %1589 = vmatpush1.bf16.msra.mxu0 0
  %1590 = vmatprep.subr.bf16.mxu0 0
  %1591 = vmatpush1.bf16.msra.mxu0 0
  %1592 = vmatprep.subr.bf16.mxu0 0
  %1593 = vmatpush1.bf16.msra.mxu0 0
  %1594 = vmatprep.subr.bf16.mxu0 0
  %1595 = vmatpush1.bf16.msra.mxu0 0
  %1596 = vmatprep.subr.bf16.mxu0 0
  %1597 = vmatpush1.bf16.msra.mxu0 0
  %1598 = vmatprep.mubr.bf16.mxu0 0
  %1599 = vmatmul.mubr.bf16.gmra.mrb[0].mxu0 %v1519
  %v1600 = vpop.f32.mrb[0].mxu0
  %v1601 = vadd.f32 0.0, %v1600
  %v1602 = vpop.f32.mrb[0].mxu0
  %v1603 = vpop.f32.mrb[0].mxu0
  %v1604 = vadd.f32 0.0, %v1603
  %v1605 = vpop.f32.mrb[0].mxu0
  %1606 = vmatprep.mubr.bf16.mxu0 0
  %1607 = vmatmul.mubr.bf16.gmra.mrb[0].mxu0 %v1522
  %v1608 = vpop.f32.mrb[0].mxu0
  %v1609 = vadd.f32 0.0, %v1608
  %v1610 = vpop.f32.mrb[0].mxu0
  %v1611 = vpop.f32.mrb[0].mxu0
  %v1612 = vadd.f32 0.0, %v1611
  %v1613 = vpop.f32.mrb[0].mxu0
  %1614 = vmatprep.mubr.bf16.mxu0 0
  %1615 = vmatmul.mubr.bf16.gmra.mrb[0].mxu0 %v1525
  %v1616 = vpop.f32.mrb[0].mxu0
  %v1617 = vadd.f32 0.0, %v1616
  %v1618 = vpop.f32.mrb[0].mxu0
  %v1619 = vpop.f32.mrb[0].mxu0
  %v1620 = vadd.f32 0.0, %v1619
  %v1621 = vpop.f32.mrb[0].mxu0
  %1622 = vmatprep.mubr.bf16.mxu0 0
  %1623 = vmatmul.mubr.bf16.gmra.mrb[0].mxu0 %v1528
  %v1624 = vpop.f32.mrb[0].mxu0
  %v1625 = vadd.f32 0.0, %v1624
  %v1626 = vpop.f32.mrb[0].mxu0
  %v1627 = vpop.f32.mrb[0].mxu0
  %v1628 = vadd.f32 0.0, %v1627
  %v1629 = vpop.f32.mrb[0].mxu0
  %1630 = vmatprep.mubr.bf16.mxu0 0
  %1631 = vmatmul.mubr.bf16.gmra.mrb[0].mxu0 %v1531
  %v1632 = vpop.f32.mrb[0].mxu0
  %v1633 = vadd.f32 0.0, %v1632
  %v1634 = vpop.f32.mrb[0].mxu0
  %v1635 = vpop.f32.mrb[0].mxu0
  %v1636 = vadd.f32 0.0, %v1635
  %v1637 = vpop.f32.mrb[0].mxu0
  %1638 = vmatprep.mubr.bf16.mxu0 0
  %1639 = vmatmul.mubr.bf16.gmra.mrb[0].mxu0 %v1534
  %v1640 = vpop.f32.mrb[0].mxu0
  %v1641 = vadd.f32 0.0, %v1640
  %v1642 = vpop.f32.mrb[0].mxu0
  %v1643 = vpop.f32.mrb[0].mxu0
  %v1644 = vadd.f32 0.0, %v1643
  %v1645 = vpop.f32.mrb[0].mxu0
  %1646 = vmatprep.mubr.bf16.mxu0 0
  %1647 = vmatmul.mubr.bf16.gmra.mrb[0].mxu0 %v1537
  %v1648 = vpop.f32.mrb[0].mxu0
  %v1649 = vadd.f32 0.0, %v1648
  %v1650 = vpop.f32.mrb[0].mxu0
  %v1651 = vpop.f32.mrb[0].mxu0
  %v1652 = vadd.f32 0.0, %v1651
  %v1653 = vpop.f32.mrb[0].mxu0
  %1654 = vmatprep.mubr.bf16.mxu0 0
  %1655 = vmatmul.mubr.bf16.gmra.mrb[0].mxu0 %v1540
  %v1656 = vpop.f32.mrb[0].mxu0
  %v1657 = vadd.f32 0.0, %v1656
  %v1658 = vpop.f32.mrb[0].mxu0
  %v1659 = vpop.f32.mrb[0].mxu0
  %v1660 = vadd.f32 0.0, %v1659
  %v1661 = vpop.f32.mrb[0].mxu0
  %1662 = vmatprep.mubr.bf16.mxu0 0
  %1663 = vmatmul.mubr.bf16.gmra.mrb[0].mxu0 %v1543
  %v1664 = vpop.f32.mrb[0].mxu0
  %v1665 = vadd.f32 0.0, %v1664
  %v1666 = vpop.f32.mrb[0].mxu0
  %v1667 = vpop.f32.mrb[0].mxu0
  %v1668 = vadd.f32 0.0, %v1667
  %v1669 = vpop.f32.mrb[0].mxu0
  %1670 = vmatprep.mubr.bf16.mxu0 0
  %1671 = vmatmul.mubr.bf16.gmra.mrb[0].mxu0 %v1546
  %v1672 = vpop.f32.mrb[0].mxu0
  %v1673 = vadd.f32 0.0, %v1672
  %v1674 = vpop.f32.mrb[0].mxu0
  %v1675 = vpop.f32.mrb[0].mxu0
  %v1676 = vadd.f32 0.0, %v1675
  %v1677 = vpop.f32.mrb[0].mxu0
  %1678 = vmatprep.mubr.bf16.mxu0 0
  %1679 = vmatmul.mubr.bf16.gmra.mrb[0].mxu0 %v1549
  %v1680 = vpop.f32.mrb[0].mxu0
  %v1681 = vadd.f32 0.0, %v1680
  %v1682 = vpop.f32.mrb[0].mxu0
  %v1683 = vpop.f32.mrb[0].mxu0
  %v1684 = vadd.f32 0.0, %v1683
  %v1685 = vpop.f32.mrb[0].mxu0
  %1686 = vmatprep.mubr.bf16.mxu0 0
  %1687 = vmatmul.mubr.bf16.gmra.mrb[0].mxu0 %v1552
  %v1688 = vpop.f32.mrb[0].mxu0
  %v1689 = vadd.f32 0.0, %v1688
  %v1690 = vpop.f32.mrb[0].mxu0
  %v1691 = vpop.f32.mrb[0].mxu0
  %v1692 = vadd.f32 0.0, %v1691
  %v1693 = vpop.f32.mrb[0].mxu0
  %1694 = vmatprep.mubr.bf16.mxu0 0
  %1695 = vmatmul.mubr.bf16.gmra.mrb[0].mxu0 %v1555
  %v1696 = vpop.f32.mrb[0].mxu0
  %v1697 = vadd.f32 0.0, %v1696
  %v1698 = vpop.f32.mrb[0].mxu0
  %v1699 = vpop.f32.mrb[0].mxu0
  %v1700 = vadd.f32 0.0, %v1699
  %v1701 = vpop.f32.mrb[0].mxu0
  %1702 = vmatprep.mubr.bf16.mxu0 0
  %1703 = vmatmul.mubr.bf16.gmra.mrb[0].mxu0 %v1558
  %v1704 = vpop.f32.mrb[0].mxu0
  %v1705 = vadd.f32 0.0, %v1704
  %v1706 = vpop.f32.mrb[0].mxu0
  %v1707 = vpop.f32.mrb[0].mxu0
  %v1708 = vadd.f32 0.0, %v1707
  %v1709 = vpop.f32.mrb[0].mxu0
  %1710 = vmatprep.mubr.bf16.mxu0 0
  %1711 = vmatmul.mubr.bf16.gmra.mrb[0].mxu0 %v1561
  %v1712 = vpop.f32.mrb[0].mxu0
  %v1713 = vadd.f32 0.0, %v1712
  %v1714 = vpop.f32.mrb[0].mxu0
  %v1715 = vpop.f32.mrb[0].mxu0
  %v1716 = vadd.f32 0.0, %v1715
  %v1717 = vpop.f32.mrb[0].mxu0
  %1718 = vmatprep.mubr.bf16.mxu0 0
  %1719 = vmatmul.mubr.bf16.gmra.mrb[0].mxu0 %v1564
  %v1720 = vpop.f32.mrb[0].mxu0
  %v1721 = vadd.f32 0.0, %v1720
  %v1722 = vpop.f32.mrb[0].mxu0
  %v1723 = vpop.f32.mrb[0].mxu0
  %v1724 = vadd.f32 0.0, %v1723
  %v1725 = vpop.f32.mrb[0].mxu0
  %1726 = vdwg.mxu0
  %v1727 = vld [vmem:[%s0 + $0x1] sm:$0x1]
  %v1728 = vld [vmem:[%s0 + $0x5] sm:$0x1]
  %v1729 = vld [vmem:[%s0 + $0x9] sm:$0x1]
  %v1730 = vld [vmem:[%s0 + $0xd] sm:$0x1]
  %v1731 = vld [vmem:[%s0 + $0x11] sm:$0x1]
  %v1732 = vld [vmem:[%s0 + $0x15] sm:$0x1]
  %v1733 = vld [vmem:[%s0 + $0x19] sm:$0x1]
  %v1734 = vld [vmem:[%s0 + $0x1d] sm:$0x1]
  %v1735 = vld [vmem:[%s0 + $0x21] sm:$0x1]
  %v1736 = vld [vmem:[%s0 + $0x25] sm:$0x1]
  %v1737 = vld [vmem:[%s0 + $0x29] sm:$0x1]
  %v1738 = vld [vmem:[%s0 + $0x2d] sm:$0x1]
  %v1739 = vld [vmem:[%s0 + $0x31] sm:$0x1]
  %v1740 = vld [vmem:[%s0 + $0x35] sm:$0x1]
  %v1741 = vld [vmem:[%s0 + $0x39] sm:$0x1]
  %v1742 = vld [vmem:[%s0 + $0x3d] sm:$0x1]
  %v1743 = vld [vmem:[%s0 + $0x41] sm:$0x1]
  %v1744 = vld [vmem:[%s0 + $0x45] sm:$0x1]
  %v1745 = vld [vmem:[%s0 + $0x49] sm:$0x1]
  %v1746 = vld [vmem:[%s0 + $0x4d] sm:$0x1]
  %v1747 = vld [vmem:[%s0 + $0x51] sm:$0x1]
  %v1748 = vld [vmem:[%s0 + $0x55] sm:$0x1]
  %v1749 = vld [vmem:[%s0 + $0x59] sm:$0x1]
  %v1750 = vld [vmem:[%s0 + $0x5d] sm:$0x1]
  %v1751 = vld [vmem:[%s0 + $0x61] sm:$0x1]
  %v1752 = vld [vmem:[%s0 + $0x65] sm:$0x1]
  %v1753 = vld [vmem:[%s0 + $0x69] sm:$0x1]
  %v1754 = vld [vmem:[%s0 + $0x6d] sm:$0x1]
  %v1755 = vld [vmem:[%s0 + $0x71] sm:$0x1]
  %v1756 = vld [vmem:[%s0 + $0x75] sm:$0x1]
  %v1757 = vld [vmem:[%s0 + $0x79] sm:$0x1]
  %v1758 = vld [vmem:[%s0 + $0x7d] sm:$0x1]
  %v1759 = vld [vmem:[%s0 + $0x81] sm:$0x1]
  %v1760 = vld [vmem:[%s0 + $0x85] sm:$0x1]
  %v1761 = vld [vmem:[%s0 + $0x89] sm:$0x1]
  %v1762 = vld [vmem:[%s0 + $0x8d] sm:$0x1]
  %v1763 = vld [vmem:[%s0 + $0x91] sm:$0x1]
  %v1764 = vld [vmem:[%s0 + $0x95] sm:$0x1]
  %v1765 = vld [vmem:[%s0 + $0x99] sm:$0x1]
  %v1766 = vld [vmem:[%s0 + $0x9d] sm:$0x1]
  %v1767 = vld [vmem:[%s0 + $0xa1] sm:$0x1]
  %v1768 = vld [vmem:[%s0 + $0xa5] sm:$0x1]
  %v1769 = vld [vmem:[%s0 + $0xa9] sm:$0x1]
  %v1770 = vld [vmem:[%s0 + $0xad] sm:$0x1]
  %v1771 = vld [vmem:[%s0 + $0xb1] sm:$0x1]
  %v1772 = vld [vmem:[%s0 + $0xb5] sm:$0x1]
  %v1773 = vld [vmem:[%s0 + $0xb9] sm:$0x1]
  %v1774 = vld [vmem:[%s0 + $0xbd] sm:$0x1]
  %v1775 = vld [vmem:[%s0 + $0xc1] sm:$0x1]
  %v1776 = vld [vmem:[%s0 + $0xc5] sm:$0x1]
  %v1777 = vld [vmem:[%s0 + $0xc9] sm:$0x1]
  %v1778 = vld [vmem:[%s0 + $0xcd] sm:$0x1]
  %v1779 = vld [vmem:[%s0 + $0xd1] sm:$0x1]
  %v1780 = vld [vmem:[%s0 + $0xd5] sm:$0x1]
  %v1781 = vld [vmem:[%s0 + $0xd9] sm:$0x1]
  %v1782 = vld [vmem:[%s0 + $0xdd] sm:$0x1]
  %v1783 = vld [vmem:[%s0 + $0xe1] sm:$0x1]
  %v1784 = vld [vmem:[%s0 + $0xe5] sm:$0x1]
  %v1785 = vld [vmem:[%s0 + $0xe9] sm:$0x1]
  %v1786 = vld [vmem:[%s0 + $0xed] sm:$0x1]
  %v1787 = vld [vmem:[%s0 + $0xf1] sm:$0x1]
  %v1788 = vld [vmem:[%s0 + $0xf5] sm:$0x1]
  %v1789 = vld [vmem:[%s0 + $0xf9] sm:$0x1]
  %v1790 = vld [vmem:[%s0 + $0xfd] sm:$0x1]
  %v1791 = vld [vmem:[%s0 + $0x101] sm:$0x1]
  %v1792 = vld [vmem:[%s0 + $0x105] sm:$0x1]
  %v1793 = vld [vmem:[%s0 + $0x109] sm:$0x1]
  %v1794 = vld [vmem:[%s0 + $0x10d] sm:$0x1]
  %v1795 = vld [vmem:[%s0 + $0x111] sm:$0x1]
  %v1796 = vld [vmem:[%s0 + $0x115] sm:$0x1]
  %v1797 = vld [vmem:[%s0 + $0x119] sm:$0x1]
  %v1798 = vld [vmem:[%s0 + $0x11d] sm:$0x1]
  %v1799 = vld [vmem:[%s0 + $0x121] sm:$0x1]
  %v1800 = vld [vmem:[%s0 + $0x125] sm:$0x1]
  %v1801 = vld [vmem:[%s0 + $0x129] sm:$0x1]
  %v1802 = vld [vmem:[%s0 + $0x12d] sm:$0x1]
  %v1803 = vld [vmem:[%s0 + $0x131] sm:$0x1]
  %v1804 = vld [vmem:[%s0 + $0x135] sm:$0x1]
  %v1805 = vld [vmem:[%s0 + $0x139] sm:$0x1]
  %v1806 = vld [vmem:[%s0 + $0x13d] sm:$0x1]
  %v1807 = vld [vmem:[%s0 + $0x141] sm:$0x1]
  %v1808 = vld [vmem:[%s0 + $0x145] sm:$0x1]
  %v1809 = vld [vmem:[%s0 + $0x149] sm:$0x1]
  %v1810 = vld [vmem:[%s0 + $0x14d] sm:$0x1]
  %v1811 = vld [vmem:[%s0 + $0x151] sm:$0x1]
  %v1812 = vld [vmem:[%s0 + $0x155] sm:$0x1]
  %v1813 = vld [vmem:[%s0 + $0x159] sm:$0x1]
  %v1814 = vld [vmem:[%s0 + $0x15d] sm:$0x1]
  %v1815 = vld [vmem:[%s0 + $0x161] sm:$0x1]
  %v1816 = vld [vmem:[%s0 + $0x165] sm:$0x1]
  %v1817 = vld [vmem:[%s0 + $0x169] sm:$0x1]
  %v1818 = vld [vmem:[%s0 + $0x16d] sm:$0x1]
  %v1819 = vld [vmem:[%s0 + $0x171] sm:$0x1]
  %v1820 = vld [vmem:[%s0 + $0x175] sm:$0x1]
  %v1821 = vld [vmem:[%s0 + $0x179] sm:$0x1]
  %v1822 = vld [vmem:[%s0 + $0x17d] sm:$0x1]
  %v1823 = vld [vmem:[%s0 + $0x181] sm:$0x1]
  %v1824 = vld [vmem:[%s0 + $0x185] sm:$0x1]
  %v1825 = vld [vmem:[%s0 + $0x189] sm:$0x1]
  %v1826 = vld [vmem:[%s0 + $0x18d] sm:$0x1]
  %v1827 = vld [vmem:[%s0 + $0x191] sm:$0x1]
  %v1828 = vld [vmem:[%s0 + $0x195] sm:$0x1]
  %v1829 = vld [vmem:[%s0 + $0x199] sm:$0x1]
  %v1830 = vld [vmem:[%s0 + $0x19d] sm:$0x1]
  %v1831 = vld [vmem:[%s0 + $0x1a1] sm:$0x1]
  %v1832 = vld [vmem:[%s0 + $0x1a5] sm:$0x1]
  %v1833 = vld [vmem:[%s0 + $0x1a9] sm:$0x1]
  %v1834 = vld [vmem:[%s0 + $0x1ad] sm:$0x1]
  %v1835 = vld [vmem:[%s0 + $0x1b1] sm:$0x1]
  %v1836 = vld [vmem:[%s0 + $0x1b5] sm:$0x1]
  %v1837 = vld [vmem:[%s0 + $0x1b9] sm:$0x1]
  %v1838 = vld [vmem:[%s0 + $0x1bd] sm:$0x1]
  %v1839 = vld [vmem:[%s0 + $0x1c1] sm:$0x1]
  %v1840 = vld [vmem:[%s0 + $0x1c5] sm:$0x1]
  %v1841 = vld [vmem:[%s0 + $0x1c9] sm:$0x1]
  %v1842 = vld [vmem:[%s0 + $0x1cd] sm:$0x1]
  %v1843 = vld [vmem:[%s0 + $0x1d1] sm:$0x1]
  %v1844 = vld [vmem:[%s0 + $0x1d5] sm:$0x1]
  %v1845 = vld [vmem:[%s0 + $0x1d9] sm:$0x1]
  %v1846 = vld [vmem:[%s0 + $0x1dd] sm:$0x1]
  %v1847 = vld [vmem:[%s0 + $0x1e1] sm:$0x1]
  %v1848 = vld [vmem:[%s0 + $0x1e5] sm:$0x1]
  %v1849 = vld [vmem:[%s0 + $0x1e9] sm:$0x1]
  %v1850 = vld [vmem:[%s0 + $0x1ed] sm:$0x1]
  %v1851 = vld [vmem:[%s0 + $0x1f1] sm:$0x1]
  %v1852 = vld [vmem:[%s0 + $0x1f5] sm:$0x1]
  %v1853 = vld [vmem:[%s0 + $0x1f9] sm:$0x1]
  %v1854 = vld [vmem:[%s0 + $0x1fd] sm:$0x1]
  %v1855 = vld [vmem:[%s0 + $0x201] sm:$0x1]
  %v1856 = vld [vmem:[%s0 + $0x205] sm:$0x1]
  %v1857 = vld [vmem:[%s0 + $0x209] sm:$0x1]
  %v1858 = vld [vmem:[%s0 + $0x20d] sm:$0x1]
  %v1859 = vld [vmem:[%s0 + $0x211] sm:$0x1]
  %v1860 = vld [vmem:[%s0 + $0x215] sm:$0x1]
  %v1861 = vld [vmem:[%s0 + $0x219] sm:$0x1]
  %v1862 = vld [vmem:[%s0 + $0x21d] sm:$0x1]
  %v1863 = vld [vmem:[%s0 + $0x221] sm:$0x1]
  %v1864 = vld [vmem:[%s0 + $0x225] sm:$0x1]
  %v1865 = vld [vmem:[%s0 + $0x229] sm:$0x1]
  %v1866 = vld [vmem:[%s0 + $0x22d] sm:$0x1]
  %v1867 = vld [vmem:[%s0 + $0x231] sm:$0x1]
  %v1868 = vld [vmem:[%s0 + $0x235] sm:$0x1]
  %v1869 = vld [vmem:[%s0 + $0x239] sm:$0x1]
  %v1870 = vld [vmem:[%s0 + $0x23d] sm:$0x1]
  %v1871 = vld [vmem:[%s0 + $0x241] sm:$0x1]
  %v1872 = vld [vmem:[%s0 + $0x245] sm:$0x1]
  %v1873 = vld [vmem:[%s0 + $0x249] sm:$0x1]
  %v1874 = vld [vmem:[%s0 + $0x24d] sm:$0x1]
  %v1875 = vld [vmem:[%s0 + $0x251] sm:$0x1]
  %v1876 = vld [vmem:[%s0 + $0x255] sm:$0x1]
  %v1877 = vld [vmem:[%s0 + $0x259] sm:$0x1]
  %v1878 = vld [vmem:[%s0 + $0x25d] sm:$0x1]
  %v1879 = vld [vmem:[%s0 + $0x261] sm:$0x1]
  %v1880 = vld [vmem:[%s0 + $0x265] sm:$0x1]
  %v1881 = vld [vmem:[%s0 + $0x269] sm:$0x1]
  %v1882 = vld [vmem:[%s0 + $0x26d] sm:$0x1]
  %v1883 = vld [vmem:[%s0 + $0x271] sm:$0x1]
  %v1884 = vld [vmem:[%s0 + $0x275] sm:$0x1]
  %v1885 = vld [vmem:[%s0 + $0x279] sm:$0x1]
  %v1886 = vld [vmem:[%s0 + $0x27d] sm:$0x1]
  %v1887 = vld [vmem:[%s0 + $0x281] sm:$0x1]
  %v1888 = vld [vmem:[%s0 + $0x285] sm:$0x1]
  %v1889 = vld [vmem:[%s0 + $0x289] sm:$0x1]
  %v1890 = vld [vmem:[%s0 + $0x28d] sm:$0x1]
  %v1891 = vld [vmem:[%s0 + $0x291] sm:$0x1]
  %v1892 = vld [vmem:[%s0 + $0x295] sm:$0x1]
  %v1893 = vld [vmem:[%s0 + $0x299] sm:$0x1]
  %v1894 = vld [vmem:[%s0 + $0x29d] sm:$0x1]
  %v1895 = vld [vmem:[%s0 + $0x2a1] sm:$0x1]
  %v1896 = vld [vmem:[%s0 + $0x2a5] sm:$0x1]
  %v1897 = vld [vmem:[%s0 + $0x2a9] sm:$0x1]
  %v1898 = vld [vmem:[%s0 + $0x2ad] sm:$0x1]
  %v1899 = vld [vmem:[%s0 + $0x2b1] sm:$0x1]
  %v1900 = vld [vmem:[%s0 + $0x2b5] sm:$0x1]
  %v1901 = vld [vmem:[%s0 + $0x2b9] sm:$0x1]
  %v1902 = vld [vmem:[%s0 + $0x2bd] sm:$0x1]
  %v1903 = vld [vmem:[%s0 + $0x2c1] sm:$0x1]
  %v1904 = vld [vmem:[%s0 + $0x2c5] sm:$0x1]
  %v1905 = vld [vmem:[%s0 + $0x2c9] sm:$0x1]
  %v1906 = vld [vmem:[%s0 + $0x2cd] sm:$0x1]
  %v1907 = vld [vmem:[%s0 + $0x2d1] sm:$0x1]
  %v1908 = vld [vmem:[%s0 + $0x2d5] sm:$0x1]
  %v1909 = vld [vmem:[%s0 + $0x2d9] sm:$0x1]
  %v1910 = vld [vmem:[%s0 + $0x2dd] sm:$0x1]
  %v1911 = vld [vmem:[%s0 + $0x2e1] sm:$0x1]
  %v1912 = vld [vmem:[%s0 + $0x2e5] sm:$0x1]
  %v1913 = vld [vmem:[%s0 + $0x2e9] sm:$0x1]
  %v1914 = vld [vmem:[%s0 + $0x2ed] sm:$0x1]
  %v1915 = vld [vmem:[%s0 + $0x2f1] sm:$0x1]
  %v1916 = vld [vmem:[%s0 + $0x2f5] sm:$0x1]
  %v1917 = vld [vmem:[%s0 + $0x2f9] sm:$0x1]
  %v1918 = vld [vmem:[%s0 + $0x2fd] sm:$0x1]
  %v1919 = vld [vmem:[%s0 + $0x301] sm:$0x1]
  %v1920 = vld [vmem:[%s0 + $0x305] sm:$0x1]
  %v1921 = vld [vmem:[%s0 + $0x309] sm:$0x1]
  %v1922 = vld [vmem:[%s0 + $0x30d] sm:$0x1]
  %v1923 = vld [vmem:[%s0 + $0x311] sm:$0x1]
  %v1924 = vld [vmem:[%s0 + $0x315] sm:$0x1]
  %v1925 = vld [vmem:[%s0 + $0x319] sm:$0x1]
  %v1926 = vld [vmem:[%s0 + $0x31d] sm:$0x1]
  %v1927 = vld [vmem:[%s0 + $0x321] sm:$0x1]
  %v1928 = vld [vmem:[%s0 + $0x325] sm:$0x1]
  %v1929 = vld [vmem:[%s0 + $0x329] sm:$0x1]
  %v1930 = vld [vmem:[%s0 + $0x32d] sm:$0x1]
  %v1931 = vld [vmem:[%s0 + $0x331] sm:$0x1]
  %v1932 = vld [vmem:[%s0 + $0x335] sm:$0x1]
  %v1933 = vld [vmem:[%s0 + $0x339] sm:$0x1]
  %v1934 = vld [vmem:[%s0 + $0x33d] sm:$0x1]
  %v1935 = vld [vmem:[%s0 + $0x341] sm:$0x1]
  %v1936 = vld [vmem:[%s0 + $0x345] sm:$0x1]
  %v1937 = vld [vmem:[%s0 + $0x349] sm:$0x1]
  %v1938 = vld [vmem:[%s0 + $0x34d] sm:$0x1]
  %v1939 = vld [vmem:[%s0 + $0x351] sm:$0x1]
  %v1940 = vld [vmem:[%s0 + $0x355] sm:$0x1]
  %v1941 = vld [vmem:[%s0 + $0x359] sm:$0x1]
  %v1942 = vld [vmem:[%s0 + $0x35d] sm:$0x1]
  %v1943 = vld [vmem:[%s0 + $0x361] sm:$0x1]
  %v1944 = vld [vmem:[%s0 + $0x365] sm:$0x1]
  %v1945 = vld [vmem:[%s0 + $0x369] sm:$0x1]
  %v1946 = vld [vmem:[%s0 + $0x36d] sm:$0x1]
  %v1947 = vld [vmem:[%s0 + $0x371] sm:$0x1]
  %v1948 = vld [vmem:[%s0 + $0x375] sm:$0x1]
  %v1949 = vld [vmem:[%s0 + $0x379] sm:$0x1]
  %v1950 = vld [vmem:[%s0 + $0x37d] sm:$0x1]
  %v1951 = vld [vmem:[%s0 + $0x381] sm:$0x1]
  %v1952 = vld [vmem:[%s0 + $0x385] sm:$0x1]
  %v1953 = vld [vmem:[%s0 + $0x389] sm:$0x1]
  %v1954 = vld [vmem:[%s0 + $0x38d] sm:$0x1]
  %v1955 = vld [vmem:[%s0 + $0x391] sm:$0x1]
  %v1956 = vld [vmem:[%s0 + $0x395] sm:$0x1]
  %v1957 = vld [vmem:[%s0 + $0x399] sm:$0x1]
  %v1958 = vld [vmem:[%s0 + $0x39d] sm:$0x1]
  %v1959 = vld [vmem:[%s0 + $0x3a1] sm:$0x1]
  %v1960 = vld [vmem:[%s0 + $0x3a5] sm:$0x1]
  %v1961 = vld [vmem:[%s0 + $0x3a9] sm:$0x1]
  %v1962 = vld [vmem:[%s0 + $0x3ad] sm:$0x1]
  %v1963 = vld [vmem:[%s0 + $0x3b1] sm:$0x1]
  %v1964 = vld [vmem:[%s0 + $0x3b5] sm:$0x1]
  %v1965 = vld [vmem:[%s0 + $0x3b9] sm:$0x1]
  %v1966 = vld [vmem:[%s0 + $0x3bd] sm:$0x1]
  %v1967 = vld [vmem:[%s0 + $0x3c1] sm:$0x1]
  %v1968 = vld [vmem:[%s0 + $0x3c5] sm:$0x1]
  %v1969 = vld [vmem:[%s0 + $0x3c9] sm:$0x1]
  %v1970 = vld [vmem:[%s0 + $0x3cd] sm:$0x1]
  %v1971 = vld [vmem:[%s0 + $0x3d1] sm:$0x1]
  %v1972 = vld [vmem:[%s0 + $0x3d5] sm:$0x1]
  %v1973 = vld [vmem:[%s0 + $0x3d9] sm:$0x1]
  %v1974 = vld [vmem:[%s0 + $0x3dd] sm:$0x1]
  %v1975 = vld [vmem:[%s0 + $0x3e1] sm:$0x1]
  %v1976 = vld [vmem:[%s0 + $0x3e5] sm:$0x1]
  %v1977 = vld [vmem:[%s0 + $0x3e9] sm:$0x1]
  %v1978 = vld [vmem:[%s0 + $0x3ed] sm:$0x1]
  %v1979 = vld [vmem:[%s0 + $0x3f1] sm:$0x1]
  %v1980 = vld [vmem:[%s0 + $0x3f5] sm:$0x1]
  %v1981 = vld [vmem:[%s0 + $0x3f9] sm:$0x1]
  %v1982 = vld [vmem:[%s0 + $0x3fd] sm:$0x1]
  %v1983 = vpack.c.bf16 %v1727, %v1727
  %v1984 = vpack.c.bf16 %v1728, %v1728
  %v1985 = vpack.c.bf16 %v1729, %v1729
  %v1986 = vpack.c.bf16 %v1730, %v1730
  %v1987 = vpack.c.bf16 %v1731, %v1731
  %v1988 = vpack.c.bf16 %v1732, %v1732
  %v1989 = vpack.c.bf16 %v1733, %v1733
  %v1990 = vpack.c.bf16 %v1734, %v1734
  %v1991 = vpack.c.bf16 %v1735, %v1735
  %v1992 = vpack.c.bf16 %v1736, %v1736
  %v1993 = vpack.c.bf16 %v1737, %v1737
  %v1994 = vpack.c.bf16 %v1738, %v1738
  %v1995 = vpack.c.bf16 %v1739, %v1739
  %v1996 = vpack.c.bf16 %v1740, %v1740
  %v1997 = vpack.c.bf16 %v1741, %v1741
  %v1998 = vpack.c.bf16 %v1742, %v1742
  %v1999 = vpack.c.bf16 %v1743, %v1743
  %v2000 = vpack.c.bf16 %v1744, %v1744
  %v2001 = vpack.c.bf16 %v1745, %v1745
  %v2002 = vpack.c.bf16 %v1746, %v1746
  %v2003 = vpack.c.bf16 %v1747, %v1747
  %v2004 = vpack.c.bf16 %v1748, %v1748
  %v2005 = vpack.c.bf16 %v1749, %v1749
  %v2006 = vpack.c.bf16 %v1750, %v1750
  %v2007 = vpack.c.bf16 %v1751, %v1751
  %v2008 = vpack.c.bf16 %v1752, %v1752
  %v2009 = vpack.c.bf16 %v1753, %v1753
  %v2010 = vpack.c.bf16 %v1754, %v1754
  %v2011 = vpack.c.bf16 %v1755, %v1755
  %v2012 = vpack.c.bf16 %v1756, %v1756
  %v2013 = vpack.c.bf16 %v1757, %v1757
  %v2014 = vpack.c.bf16 %v1758, %v1758
  %v2015 = vpack.c.bf16 %v1759, %v1759
  %v2016 = vpack.c.bf16 %v1760, %v1760
  %v2017 = vpack.c.bf16 %v1761, %v1761
  %v2018 = vpack.c.bf16 %v1762, %v1762
  %v2019 = vpack.c.bf16 %v1763, %v1763
  %v2020 = vpack.c.bf16 %v1764, %v1764
  %v2021 = vpack.c.bf16 %v1765, %v1765
  %v2022 = vpack.c.bf16 %v1766, %v1766
  %v2023 = vpack.c.bf16 %v1767, %v1767
  %v2024 = vpack.c.bf16 %v1768, %v1768
  %v2025 = vpack.c.bf16 %v1769, %v1769
  %v2026 = vpack.c.bf16 %v1770, %v1770
  %v2027 = vpack.c.bf16 %v1771, %v1771
  %v2028 = vpack.c.bf16 %v1772, %v1772
  %v2029 = vpack.c.bf16 %v1773, %v1773
  %v2030 = vpack.c.bf16 %v1774, %v1774
  %v2031 = vpack.c.bf16 %v1775, %v1775
  %v2032 = vpack.c.bf16 %v1776, %v1776
  %v2033 = vpack.c.bf16 %v1777, %v1777
  %v2034 = vpack.c.bf16 %v1778, %v1778
  %v2035 = vpack.c.bf16 %v1779, %v1779
  %v2036 = vpack.c.bf16 %v1780, %v1780
  %v2037 = vpack.c.bf16 %v1781, %v1781
  %v2038 = vpack.c.bf16 %v1782, %v1782
  %v2039 = vpack.c.bf16 %v1783, %v1783
  %v2040 = vpack.c.bf16 %v1784, %v1784
  %v2041 = vpack.c.bf16 %v1785, %v1785
  %v2042 = vpack.c.bf16 %v1786, %v1786
  %v2043 = vpack.c.bf16 %v1787, %v1787
  %v2044 = vpack.c.bf16 %v1788, %v1788
  %v2045 = vpack.c.bf16 %v1789, %v1789
  %v2046 = vpack.c.bf16 %v1790, %v1790
  %v2047 = vpack.c.bf16 %v1791, %v1791
  %v2048 = vpack.c.bf16 %v1792, %v1792
  %v2049 = vpack.c.bf16 %v1793, %v1793
  %v2050 = vpack.c.bf16 %v1794, %v1794
  %v2051 = vpack.c.bf16 %v1795, %v1795
  %v2052 = vpack.c.bf16 %v1796, %v1796
  %v2053 = vpack.c.bf16 %v1797, %v1797
  %v2054 = vpack.c.bf16 %v1798, %v1798
  %v2055 = vpack.c.bf16 %v1799, %v1799
  %v2056 = vpack.c.bf16 %v1800, %v1800
  %v2057 = vpack.c.bf16 %v1801, %v1801
  %v2058 = vpack.c.bf16 %v1802, %v1802
  %v2059 = vpack.c.bf16 %v1803, %v1803
  %v2060 = vpack.c.bf16 %v1804, %v1804
  %v2061 = vpack.c.bf16 %v1805, %v1805
  %v2062 = vpack.c.bf16 %v1806, %v1806
  %v2063 = vpack.c.bf16 %v1807, %v1807
  %v2064 = vpack.c.bf16 %v1808, %v1808
  %v2065 = vpack.c.bf16 %v1809, %v1809
  %v2066 = vpack.c.bf16 %v1810, %v1810
  %v2067 = vpack.c.bf16 %v1811, %v1811
  %v2068 = vpack.c.bf16 %v1812, %v1812
  %v2069 = vpack.c.bf16 %v1813, %v1813
  %v2070 = vpack.c.bf16 %v1814, %v1814
  %v2071 = vpack.c.bf16 %v1815, %v1815
  %v2072 = vpack.c.bf16 %v1816, %v1816
  %v2073 = vpack.c.bf16 %v1817, %v1817
  %v2074 = vpack.c.bf16 %v1818, %v1818
  %v2075 = vpack.c.bf16 %v1819, %v1819
  %v2076 = vpack.c.bf16 %v1820, %v1820
  %v2077 = vpack.c.bf16 %v1821, %v1821
  %v2078 = vpack.c.bf16 %v1822, %v1822
  %v2079 = vpack.c.bf16 %v1823, %v1823
  %v2080 = vpack.c.bf16 %v1824, %v1824
  %v2081 = vpack.c.bf16 %v1825, %v1825
  %v2082 = vpack.c.bf16 %v1826, %v1826
  %v2083 = vpack.c.bf16 %v1827, %v1827
  %v2084 = vpack.c.bf16 %v1828, %v1828
  %v2085 = vpack.c.bf16 %v1829, %v1829
  %v2086 = vpack.c.bf16 %v1830, %v1830
  %v2087 = vpack.c.bf16 %v1831, %v1831
  %v2088 = vpack.c.bf16 %v1832, %v1832
  %v2089 = vpack.c.bf16 %v1833, %v1833
  %v2090 = vpack.c.bf16 %v1834, %v1834
  %v2091 = vpack.c.bf16 %v1835, %v1835
  %v2092 = vpack.c.bf16 %v1836, %v1836
  %v2093 = vpack.c.bf16 %v1837, %v1837
  %v2094 = vpack.c.bf16 %v1838, %v1838
  %v2095 = vpack.c.bf16 %v1839, %v1839
  %v2096 = vpack.c.bf16 %v1840, %v1840
  %v2097 = vpack.c.bf16 %v1841, %v1841
  %v2098 = vpack.c.bf16 %v1842, %v1842
  %v2099 = vpack.c.bf16 %v1843, %v1843
  %v2100 = vpack.c.bf16 %v1844, %v1844
  %v2101 = vpack.c.bf16 %v1845, %v1845
  %v2102 = vpack.c.bf16 %v1846, %v1846
  %v2103 = vpack.c.bf16 %v1847, %v1847
  %v2104 = vpack.c.bf16 %v1848, %v1848
  %v2105 = vpack.c.bf16 %v1849, %v1849
  %v2106 = vpack.c.bf16 %v1850, %v1850
  %v2107 = vpack.c.bf16 %v1851, %v1851
  %v2108 = vpack.c.bf16 %v1852, %v1852
  %v2109 = vpack.c.bf16 %v1853, %v1853
  %v2110 = vpack.c.bf16 %v1854, %v1854
  %v2111 = vpack.c.bf16 %v1855, %v1855
  %v2112 = vpack.c.bf16 %v1856, %v1856
  %v2113 = vpack.c.bf16 %v1857, %v1857
  %v2114 = vpack.c.bf16 %v1858, %v1858
  %v2115 = vpack.c.bf16 %v1859, %v1859
  %v2116 = vpack.c.bf16 %v1860, %v1860
  %v2117 = vpack.c.bf16 %v1861, %v1861
  %v2118 = vpack.c.bf16 %v1862, %v1862
  %v2119 = vpack.c.bf16 %v1863, %v1863
  %v2120 = vpack.c.bf16 %v1864, %v1864
  %v2121 = vpack.c.bf16 %v1865, %v1865
  %v2122 = vpack.c.bf16 %v1866, %v1866
  %v2123 = vpack.c.bf16 %v1867, %v1867
  %v2124 = vpack.c.bf16 %v1868, %v1868
  %v2125 = vpack.c.bf16 %v1869, %v1869
  %v2126 = vpack.c.bf16 %v1870, %v1870
  %v2127 = vpack.c.bf16 %v1871, %v1871
  %v2128 = vpack.c.bf16 %v1872, %v1872
  %v2129 = vpack.c.bf16 %v1873, %v1873
  %v2130 = vpack.c.bf16 %v1874, %v1874
  %v2131 = vpack.c.bf16 %v1875, %v1875
  %v2132 = vpack.c.bf16 %v1876, %v1876
  %v2133 = vpack.c.bf16 %v1877, %v1877
  %v2134 = vpack.c.bf16 %v1878, %v1878
  %v2135 = vpack.c.bf16 %v1879, %v1879
  %v2136 = vpack.c.bf16 %v1880, %v1880
  %v2137 = vpack.c.bf16 %v1881, %v1881
  %v2138 = vpack.c.bf16 %v1882, %v1882
  %v2139 = vpack.c.bf16 %v1883, %v1883
  %v2140 = vpack.c.bf16 %v1884, %v1884
  %v2141 = vpack.c.bf16 %v1885, %v1885
  %v2142 = vpack.c.bf16 %v1886, %v1886
  %v2143 = vpack.c.bf16 %v1887, %v1887
  %v2144 = vpack.c.bf16 %v1888, %v1888
  %v2145 = vpack.c.bf16 %v1889, %v1889
  %v2146 = vpack.c.bf16 %v1890, %v1890
  %v2147 = vpack.c.bf16 %v1891, %v1891
  %v2148 = vpack.c.bf16 %v1892, %v1892
  %v2149 = vpack.c.bf16 %v1893, %v1893
  %v2150 = vpack.c.bf16 %v1894, %v1894
  %v2151 = vpack.c.bf16 %v1895, %v1895
  %v2152 = vpack.c.bf16 %v1896, %v1896
  %v2153 = vpack.c.bf16 %v1897, %v1897
  %v2154 = vpack.c.bf16 %v1898, %v1898
  %v2155 = vpack.c.bf16 %v1899, %v1899
  %v2156 = vpack.c.bf16 %v1900, %v1900
  %v2157 = vpack.c.bf16 %v1901, %v1901
  %v2158 = vpack.c.bf16 %v1902, %v1902
  %v2159 = vpack.c.bf16 %v1903, %v1903
  %v2160 = vpack.c.bf16 %v1904, %v1904
  %v2161 = vpack.c.bf16 %v1905, %v1905
  %v2162 = vpack.c.bf16 %v1906, %v1906
  %v2163 = vpack.c.bf16 %v1907, %v1907
  %v2164 = vpack.c.bf16 %v1908, %v1908
  %v2165 = vpack.c.bf16 %v1909, %v1909
  %v2166 = vpack.c.bf16 %v1910, %v1910
  %v2167 = vpack.c.bf16 %v1911, %v1911
  %v2168 = vpack.c.bf16 %v1912, %v1912
  %v2169 = vpack.c.bf16 %v1913, %v1913
  %v2170 = vpack.c.bf16 %v1914, %v1914
  %v2171 = vpack.c.bf16 %v1915, %v1915
  %v2172 = vpack.c.bf16 %v1916, %v1916
  %v2173 = vpack.c.bf16 %v1917, %v1917
  %v2174 = vpack.c.bf16 %v1918, %v1918
  %v2175 = vpack.c.bf16 %v1919, %v1919
  %v2176 = vpack.c.bf16 %v1920, %v1920
  %v2177 = vpack.c.bf16 %v1921, %v1921
  %v2178 = vpack.c.bf16 %v1922, %v1922
  %v2179 = vpack.c.bf16 %v1923, %v1923
  %v2180 = vpack.c.bf16 %v1924, %v1924
  %v2181 = vpack.c.bf16 %v1925, %v1925
  %v2182 = vpack.c.bf16 %v1926, %v1926
  %v2183 = vpack.c.bf16 %v1927, %v1927
  %v2184 = vpack.c.bf16 %v1928, %v1928
  %v2185 = vpack.c.bf16 %v1929, %v1929
  %v2186 = vpack.c.bf16 %v1930, %v1930
  %v2187 = vpack.c.bf16 %v1931, %v1931
  %v2188 = vpack.c.bf16 %v1932, %v1932
  %v2189 = vpack.c.bf16 %v1933, %v1933
  %v2190 = vpack.c.bf16 %v1934, %v1934
  %v2191 = vpack.c.bf16 %v1935, %v1935
  %v2192 = vpack.c.bf16 %v1936, %v1936
  %v2193 = vpack.c.bf16 %v1937, %v1937
  %v2194 = vpack.c.bf16 %v1938, %v1938
  %v2195 = vpack.c.bf16 %v1939, %v1939
  %v2196 = vpack.c.bf16 %v1940, %v1940
  %v2197 = vpack.c.bf16 %v1941, %v1941
  %v2198 = vpack.c.bf16 %v1942, %v1942
  %v2199 = vpack.c.bf16 %v1943, %v1943
  %v2200 = vpack.c.bf16 %v1944, %v1944
  %v2201 = vpack.c.bf16 %v1945, %v1945
  %v2202 = vpack.c.bf16 %v1946, %v1946
  %v2203 = vpack.c.bf16 %v1947, %v1947
  %v2204 = vpack.c.bf16 %v1948, %v1948
  %v2205 = vpack.c.bf16 %v1949, %v1949
  %v2206 = vpack.c.bf16 %v1950, %v1950
  %v2207 = vpack.c.bf16 %v1951, %v1951
  %v2208 = vpack.c.bf16 %v1952, %v1952
  %v2209 = vpack.c.bf16 %v1953, %v1953
  %v2210 = vpack.c.bf16 %v1954, %v1954
  %v2211 = vpack.c.bf16 %v1955, %v1955
  %v2212 = vpack.c.bf16 %v1956, %v1956
  %v2213 = vpack.c.bf16 %v1957, %v1957
  %v2214 = vpack.c.bf16 %v1958, %v1958
  %v2215 = vpack.c.bf16 %v1959, %v1959
  %v2216 = vpack.c.bf16 %v1960, %v1960
  %v2217 = vpack.c.bf16 %v1961, %v1961
  %v2218 = vpack.c.bf16 %v1962, %v1962
  %v2219 = vpack.c.bf16 %v1963, %v1963
  %v2220 = vpack.c.bf16 %v1964, %v1964
  %v2221 = vpack.c.bf16 %v1965, %v1965
  %v2222 = vpack.c.bf16 %v1966, %v1966
  %v2223 = vpack.c.bf16 %v1967, %v1967
  %v2224 = vpack.c.bf16 %v1968, %v1968
  %v2225 = vpack.c.bf16 %v1969, %v1969
  %v2226 = vpack.c.bf16 %v1970, %v1970
  %v2227 = vpack.c.bf16 %v1971, %v1971
  %v2228 = vpack.c.bf16 %v1972, %v1972
  %v2229 = vpack.c.bf16 %v1973, %v1973
  %v2230 = vpack.c.bf16 %v1974, %v1974
  %v2231 = vpack.c.bf16 %v1975, %v1975
  %v2232 = vpack.c.bf16 %v1976, %v1976
  %v2233 = vpack.c.bf16 %v1977, %v1977
  %v2234 = vpack.c.bf16 %v1978, %v1978
  %v2235 = vpack.c.bf16 %v1979, %v1979
  %v2236 = vpack.c.bf16 %v1980, %v1980
  %v2237 = vpack.c.bf16 %v1981, %v1981
  %v2238 = vpack.c.bf16 %v1982, %v1982
  %s2239 = scalar_lea.vmem %s1, 32
  %v2240 = vld [vmem:[%s2239] sm:$0xff]
  %v2241 = vld [vmem:[%s2239 + $0x8] sm:$0xff]
  %v2242 = vld [vmem:[%s2239 + $0x10] sm:$0xff]
  %v2243 = vld [vmem:[%s2239 + $0x18] sm:$0xff]
  %v2244 = vpack.c.bf16 %v2241, %v2240
  %v2245 = vpack.c.bf16 %v2243, %v2242
  %v2502 = vunpack.c.l.b16 %v1983
  %v2503 = vunpack.c.l.b16 %v1984
  %v2504 = vunpack.c.l.b16 %v1985
  %v2505 = vunpack.c.l.b16 %v1986
  %v2506 = vunpack.c.l.b16 %v1987
  %v2507 = vunpack.c.l.b16 %v1988
  %v2508 = vunpack.c.l.b16 %v1989
  %v2509 = vunpack.c.l.b16 %v1990
  %v2510 = vunpack.c.l.b16 %v1991
  %v2511 = vunpack.c.l.b16 %v1992
  %v2512 = vunpack.c.l.b16 %v1993
  %v2513 = vunpack.c.l.b16 %v1994
  %v2514 = vunpack.c.l.b16 %v1995
  %v2515 = vunpack.c.l.b16 %v1996
  %v2516 = vunpack.c.l.b16 %v1997
  %v2517 = vunpack.c.l.b16 %v1998
  %v2518 = vunpack.c.l.b16 %v1999
  %v2519 = vunpack.c.l.b16 %v2000
  %v2520 = vunpack.c.l.b16 %v2001
  %v2521 = vunpack.c.l.b16 %v2002
  %v2522 = vunpack.c.l.b16 %v2003
  %v2523 = vunpack.c.l.b16 %v2004
  %v2524 = vunpack.c.l.b16 %v2005
  %v2525 = vunpack.c.l.b16 %v2006
  %v2526 = vunpack.c.l.b16 %v2007
  %v2527 = vunpack.c.l.b16 %v2008
  %v2528 = vunpack.c.l.b16 %v2009
  %v2529 = vunpack.c.l.b16 %v2010
  %v2530 = vunpack.c.l.b16 %v2011
  %v2531 = vunpack.c.l.b16 %v2012
  %v2532 = vunpack.c.l.b16 %v2013
  %v2533 = vunpack.c.l.b16 %v2014
  %v2534 = vunpack.c.l.b16 %v2015
  %v2535 = vunpack.c.l.b16 %v2016
  %v2536 = vunpack.c.l.b16 %v2017
  %v2537 = vunpack.c.l.b16 %v2018
  %v2538 = vunpack.c.l.b16 %v2019
  %v2539 = vunpack.c.l.b16 %v2020
  %v2540 = vunpack.c.l.b16 %v2021
  %v2541 = vunpack.c.l.b16 %v2022
  %v2542 = vunpack.c.l.b16 %v2023
  %v2543 = vunpack.c.l.b16 %v2024
  %v2544 = vunpack.c.l.b16 %v2025
  %v2545 = vunpack.c.l.b16 %v2026
  %v2546 = vunpack.c.l.b16 %v2027
  %v2547 = vunpack.c.l.b16 %v2028
  %v2548 = vunpack.c.l.b16 %v2029
  %v2549 = vunpack.c.l.b16 %v2030
  %v2550 = vunpack.c.l.b16 %v2031
  %v2551 = vunpack.c.l.b16 %v2032
  %v2552 = vunpack.c.l.b16 %v2033
  %v2553 = vunpack.c.l.b16 %v2034
  %v2554 = vunpack.c.l.b16 %v2035
  %v2555 = vunpack.c.l.b16 %v2036
  %v2556 = vunpack.c.l.b16 %v2037
  %v2557 = vunpack.c.l.b16 %v2038
  %v2558 = vunpack.c.l.b16 %v2039
  %v2559 = vunpack.c.l.b16 %v2040
  %v2560 = vunpack.c.l.b16 %v2041
  %v2561 = vunpack.c.l.b16 %v2042
  %v2562 = vunpack.c.l.b16 %v2043
  %v2563 = vunpack.c.l.b16 %v2044
  %v2564 = vunpack.c.l.b16 %v2045
  %v2565 = vunpack.c.l.b16 %v2046
  %v2566 = vunpack.c.l.b16 %v2047
  %v2567 = vunpack.c.l.b16 %v2048
  %v2568 = vunpack.c.l.b16 %v2049
  %v2569 = vunpack.c.l.b16 %v2050
  %v2570 = vunpack.c.l.b16 %v2051
  %v2571 = vunpack.c.l.b16 %v2052
  %v2572 = vunpack.c.l.b16 %v2053
  %v2573 = vunpack.c.l.b16 %v2054
  %v2574 = vunpack.c.l.b16 %v2055
  %v2575 = vunpack.c.l.b16 %v2056
  %v2576 = vunpack.c.l.b16 %v2057
  %v2577 = vunpack.c.l.b16 %v2058
  %v2578 = vunpack.c.l.b16 %v2059
  %v2579 = vunpack.c.l.b16 %v2060
  %v2580 = vunpack.c.l.b16 %v2061
  %v2581 = vunpack.c.l.b16 %v2062
  %v2582 = vunpack.c.l.b16 %v2063
  %v2583 = vunpack.c.l.b16 %v2064
  %v2584 = vunpack.c.l.b16 %v2065
  %v2585 = vunpack.c.l.b16 %v2066
  %v2586 = vunpack.c.l.b16 %v2067
  %v2587 = vunpack.c.l.b16 %v2068
  %v2588 = vunpack.c.l.b16 %v2069
  %v2589 = vunpack.c.l.b16 %v2070
  %v2590 = vunpack.c.l.b16 %v2071
  %v2591 = vunpack.c.l.b16 %v2072
  %v2592 = vunpack.c.l.b16 %v2073
  %v2593 = vunpack.c.l.b16 %v2074
  %v2594 = vunpack.c.l.b16 %v2075
  %v2595 = vunpack.c.l.b16 %v2076
  %v2596 = vunpack.c.l.b16 %v2077
  %v2597 = vunpack.c.l.b16 %v2078
  %v2598 = vunpack.c.l.b16 %v2079
  %v2599 = vunpack.c.l.b16 %v2080
  %v2600 = vunpack.c.l.b16 %v2081
  %v2601 = vunpack.c.l.b16 %v2082
  %v2602 = vunpack.c.l.b16 %v2083
  %v2603 = vunpack.c.l.b16 %v2084
  %v2604 = vunpack.c.l.b16 %v2085
  %v2605 = vunpack.c.l.b16 %v2086
  %v2606 = vunpack.c.l.b16 %v2087
  %v2607 = vunpack.c.l.b16 %v2088
  %v2608 = vunpack.c.l.b16 %v2089
  %v2609 = vunpack.c.l.b16 %v2090
  %v2610 = vunpack.c.l.b16 %v2091
  %v2611 = vunpack.c.l.b16 %v2092
  %v2612 = vunpack.c.l.b16 %v2093
  %v2613 = vunpack.c.l.b16 %v2094
  %v2614 = vunpack.c.l.b16 %v2095
  %v2615 = vunpack.c.l.b16 %v2096
  %v2616 = vunpack.c.l.b16 %v2097
  %v2617 = vunpack.c.l.b16 %v2098
  %v2618 = vunpack.c.l.b16 %v2099
  %v2619 = vunpack.c.l.b16 %v2100
  %v2620 = vunpack.c.l.b16 %v2101
  %v2621 = vunpack.c.l.b16 %v2102
  %v2622 = vunpack.c.l.b16 %v2103
  %v2623 = vunpack.c.l.b16 %v2104
  %v2624 = vunpack.c.l.b16 %v2105
  %v2625 = vunpack.c.l.b16 %v2106
  %v2626 = vunpack.c.l.b16 %v2107
  %v2627 = vunpack.c.l.b16 %v2108
  %v2628 = vunpack.c.l.b16 %v2109
  %v2629 = vunpack.c.l.b16 %v2110
  %v2630 = vunpack.c.l.b16 %v2111
  %v2631 = vunpack.c.l.b16 %v2112
  %v2632 = vunpack.c.l.b16 %v2113
  %v2633 = vunpack.c.l.b16 %v2114
  %v2634 = vunpack.c.l.b16 %v2115
  %v2635 = vunpack.c.l.b16 %v2116
  %v2636 = vunpack.c.l.b16 %v2117
  %v2637 = vunpack.c.l.b16 %v2118
  %v2638 = vunpack.c.l.b16 %v2119
  %v2639 = vunpack.c.l.b16 %v2120
  %v2640 = vunpack.c.l.b16 %v2121
  %v2641 = vunpack.c.l.b16 %v2122
  %v2642 = vunpack.c.l.b16 %v2123
  %v2643 = vunpack.c.l.b16 %v2124
  %v2644 = vunpack.c.l.b16 %v2125
  %v2645 = vunpack.c.l.b16 %v2126
  %v2646 = vunpack.c.l.b16 %v2127
  %v2647 = vunpack.c.l.b16 %v2128
  %v2648 = vunpack.c.l.b16 %v2129
  %v2649 = vunpack.c.l.b16 %v2130
  %v2650 = vunpack.c.l.b16 %v2131
  %v2651 = vunpack.c.l.b16 %v2132
  %v2652 = vunpack.c.l.b16 %v2133
  %v2653 = vunpack.c.l.b16 %v2134
  %v2654 = vunpack.c.l.b16 %v2135
  %v2655 = vunpack.c.l.b16 %v2136
  %v2656 = vunpack.c.l.b16 %v2137
  %v2657 = vunpack.c.l.b16 %v2138
  %v2658 = vunpack.c.l.b16 %v2139
  %v2659 = vunpack.c.l.b16 %v2140
  %v2660 = vunpack.c.l.b16 %v2141
  %v2661 = vunpack.c.l.b16 %v2142
  %v2662 = vunpack.c.l.b16 %v2143
  %v2663 = vunpack.c.l.b16 %v2144
  %v2664 = vunpack.c.l.b16 %v2145
  %v2665 = vunpack.c.l.b16 %v2146
  %v2666 = vunpack.c.l.b16 %v2147
  %v2667 = vunpack.c.l.b16 %v2148
  %v2668 = vunpack.c.l.b16 %v2149
  %v2669 = vunpack.c.l.b16 %v2150
  %v2670 = vunpack.c.l.b16 %v2151
  %v2671 = vunpack.c.l.b16 %v2152
  %v2672 = vunpack.c.l.b16 %v2153
  %v2673 = vunpack.c.l.b16 %v2154
  %v2674 = vunpack.c.l.b16 %v2155
  %v2675 = vunpack.c.l.b16 %v2156
  %v2676 = vunpack.c.l.b16 %v2157
  %v2677 = vunpack.c.l.b16 %v2158
  %v2678 = vunpack.c.l.b16 %v2159
  %v2679 = vunpack.c.l.b16 %v2160
  %v2680 = vunpack.c.l.b16 %v2161
  %v2681 = vunpack.c.l.b16 %v2162
  %v2682 = vunpack.c.l.b16 %v2163
  %v2683 = vunpack.c.l.b16 %v2164
  %v2684 = vunpack.c.l.b16 %v2165
  %v2685 = vunpack.c.l.b16 %v2166
  %v2686 = vunpack.c.l.b16 %v2167
  %v2687 = vunpack.c.l.b16 %v2168
  %v2688 = vunpack.c.l.b16 %v2169
  %v2689 = vunpack.c.l.b16 %v2170
  %v2690 = vunpack.c.l.b16 %v2171
  %v2691 = vunpack.c.l.b16 %v2172
  %v2692 = vunpack.c.l.b16 %v2173
  %v2693 = vunpack.c.l.b16 %v2174
  %v2694 = vunpack.c.l.b16 %v2175
  %v2695 = vunpack.c.l.b16 %v2176
  %v2696 = vunpack.c.l.b16 %v2177
  %v2697 = vunpack.c.l.b16 %v2178
  %v2698 = vunpack.c.l.b16 %v2179
  %v2699 = vunpack.c.l.b16 %v2180
  %v2700 = vunpack.c.l.b16 %v2181
  %v2701 = vunpack.c.l.b16 %v2182
  %v2702 = vunpack.c.l.b16 %v2183
  %v2703 = vunpack.c.l.b16 %v2184
  %v2704 = vunpack.c.l.b16 %v2185
  %v2705 = vunpack.c.l.b16 %v2186
  %v2706 = vunpack.c.l.b16 %v2187
  %v2707 = vunpack.c.l.b16 %v2188
  %v2708 = vunpack.c.l.b16 %v2189
  %v2709 = vunpack.c.l.b16 %v2190
  %v2710 = vunpack.c.l.b16 %v2191
  %v2711 = vunpack.c.l.b16 %v2192
  %v2712 = vunpack.c.l.b16 %v2193
  %v2713 = vunpack.c.l.b16 %v2194
  %v2714 = vunpack.c.l.b16 %v2195
  %v2715 = vunpack.c.l.b16 %v2196
  %v2716 = vunpack.c.l.b16 %v2197
  %v2717 = vunpack.c.l.b16 %v2198
  %v2718 = vunpack.c.l.b16 %v2199
  %v2719 = vunpack.c.l.b16 %v2200
  %v2720 = vunpack.c.l.b16 %v2201
  %v2721 = vunpack.c.l.b16 %v2202
  %v2722 = vunpack.c.l.b16 %v2203
  %v2723 = vunpack.c.l.b16 %v2204
  %v2724 = vunpack.c.l.b16 %v2205
  %v2725 = vunpack.c.l.b16 %v2206
  %v2726 = vunpack.c.l.b16 %v2207
  %v2727 = vunpack.c.l.b16 %v2208
  %v2728 = vunpack.c.l.b16 %v2209
  %v2729 = vunpack.c.l.b16 %v2210
  %v2730 = vunpack.c.l.b16 %v2211
  %v2731 = vunpack.c.l.b16 %v2212
  %v2732 = vunpack.c.l.b16 %v2213
  %v2733 = vunpack.c.l.b16 %v2214
  %v2734 = vunpack.c.l.b16 %v2215
  %v2735 = vunpack.c.l.b16 %v2216
  %v2736 = vunpack.c.l.b16 %v2217
  %v2737 = vunpack.c.l.b16 %v2218
  %v2738 = vunpack.c.l.b16 %v2219
  %v2739 = vunpack.c.l.b16 %v2220
  %v2740 = vunpack.c.l.b16 %v2221
  %v2741 = vunpack.c.l.b16 %v2222
  %v2742 = vunpack.c.l.b16 %v2223
  %v2743 = vunpack.c.l.b16 %v2224
  %v2744 = vunpack.c.l.b16 %v2225
  %v2745 = vunpack.c.l.b16 %v2226
  %v2746 = vunpack.c.l.b16 %v2227
  %v2747 = vunpack.c.l.b16 %v2228
  %v2748 = vunpack.c.l.b16 %v2229
  %v2749 = vunpack.c.l.b16 %v2230
  %v2750 = vunpack.c.l.b16 %v2231
  %v2751 = vunpack.c.l.b16 %v2232
  %v2752 = vunpack.c.l.b16 %v2233
  %v2753 = vunpack.c.l.b16 %v2234
  %v2754 = vunpack.c.l.b16 %v2235
  %v2755 = vunpack.c.l.b16 %v2236
  %v2756 = vunpack.c.l.b16 %v2237
  %v2757 = vunpack.c.l.b16 %v2238
  %v2758 = vrot.slane %v2503, 7
  %v2759 = vsel %vm1047, %v2758, %v2502
  %v2760 = vrot.slane %v2504, 6
  %v2761 = vsel %vm1050, %v2760, %v2759
  %v2762 = vrot.slane %v2505, 5
  %v2763 = vsel %vm1053, %v2762, %v2761
  %v2764 = vrot.slane %v2506, 4
  %v2765 = vsel %vm1056, %v2764, %v2763
  %v2766 = vrot.slane %v2507, 3
  %v2767 = vsel %vm1059, %v2766, %v2765
  %v2768 = vrot.slane %v2508, 2
  %v2769 = vsel %vm1062, %v2768, %v2767
  %v2770 = vrot.slane %v2509, 1
  %v2771 = vsel %vm1065, %v2770, %v2769
  %v2772 = vrot.slane %v2511, 7
  %v2773 = vsel %vm1047, %v2772, %v2510
  %v2774 = vrot.slane %v2512, 6
  %v2775 = vsel %vm1050, %v2774, %v2773
  %v2776 = vrot.slane %v2513, 5
  %v2777 = vsel %vm1053, %v2776, %v2775
  %v2778 = vrot.slane %v2514, 4
  %v2779 = vsel %vm1056, %v2778, %v2777
  %v2780 = vrot.slane %v2515, 3
  %v2781 = vsel %vm1059, %v2780, %v2779
  %v2782 = vrot.slane %v2516, 2
  %v2783 = vsel %vm1062, %v2782, %v2781
  %v2784 = vrot.slane %v2517, 1
  %v2785 = vsel %vm1065, %v2784, %v2783
  %v2786 = vrot.slane %v2519, 7
  %v2787 = vsel %vm1047, %v2786, %v2518
  %v2788 = vrot.slane %v2520, 6
  %v2789 = vsel %vm1050, %v2788, %v2787
  %v2790 = vrot.slane %v2521, 5
  %v2791 = vsel %vm1053, %v2790, %v2789
  %v2792 = vrot.slane %v2522, 4
  %v2793 = vsel %vm1056, %v2792, %v2791
  %v2794 = vrot.slane %v2523, 3
  %v2795 = vsel %vm1059, %v2794, %v2793
  %v2796 = vrot.slane %v2524, 2
  %v2797 = vsel %vm1062, %v2796, %v2795
  %v2798 = vrot.slane %v2525, 1
  %v2799 = vsel %vm1065, %v2798, %v2797
  %v2800 = vrot.slane %v2527, 7
  %v2801 = vsel %vm1047, %v2800, %v2526
  %v2802 = vrot.slane %v2528, 6
  %v2803 = vsel %vm1050, %v2802, %v2801
  %v2804 = vrot.slane %v2529, 5
  %v2805 = vsel %vm1053, %v2804, %v2803
  %v2806 = vrot.slane %v2530, 4
  %v2807 = vsel %vm1056, %v2806, %v2805
  %v2808 = vrot.slane %v2531, 3
  %v2809 = vsel %vm1059, %v2808, %v2807
  %v2810 = vrot.slane %v2532, 2
  %v2811 = vsel %vm1062, %v2810, %v2809
  %v2812 = vrot.slane %v2533, 1
  %v2813 = vsel %vm1065, %v2812, %v2811
  %v2814 = vrot.slane %v2535, 7
  %v2815 = vsel %vm1047, %v2814, %v2534
  %v2816 = vrot.slane %v2536, 6
  %v2817 = vsel %vm1050, %v2816, %v2815
  %v2818 = vrot.slane %v2537, 5
  %v2819 = vsel %vm1053, %v2818, %v2817
  %v2820 = vrot.slane %v2538, 4
  %v2821 = vsel %vm1056, %v2820, %v2819
  %v2822 = vrot.slane %v2539, 3
  %v2823 = vsel %vm1059, %v2822, %v2821
  %v2824 = vrot.slane %v2540, 2
  %v2825 = vsel %vm1062, %v2824, %v2823
  %v2826 = vrot.slane %v2541, 1
  %v2827 = vsel %vm1065, %v2826, %v2825
  %v2828 = vrot.slane %v2543, 7
  %v2829 = vsel %vm1047, %v2828, %v2542
  %v2830 = vrot.slane %v2544, 6
  %v2831 = vsel %vm1050, %v2830, %v2829
  %v2832 = vrot.slane %v2545, 5
  %v2833 = vsel %vm1053, %v2832, %v2831
  %v2834 = vrot.slane %v2546, 4
  %v2835 = vsel %vm1056, %v2834, %v2833
  %v2836 = vrot.slane %v2547, 3
  %v2837 = vsel %vm1059, %v2836, %v2835
  %v2838 = vrot.slane %v2548, 2
  %v2839 = vsel %vm1062, %v2838, %v2837
  %v2840 = vrot.slane %v2549, 1
  %v2841 = vsel %vm1065, %v2840, %v2839
  %v2842 = vrot.slane %v2551, 7
  %v2843 = vsel %vm1047, %v2842, %v2550
  %v2844 = vrot.slane %v2552, 6
  %v2845 = vsel %vm1050, %v2844, %v2843
  %v2846 = vrot.slane %v2553, 5
  %v2847 = vsel %vm1053, %v2846, %v2845
  %v2848 = vrot.slane %v2554, 4
  %v2849 = vsel %vm1056, %v2848, %v2847
  %v2850 = vrot.slane %v2555, 3
  %v2851 = vsel %vm1059, %v2850, %v2849
  %v2852 = vrot.slane %v2556, 2
  %v2853 = vsel %vm1062, %v2852, %v2851
  %v2854 = vrot.slane %v2557, 1
  %v2855 = vsel %vm1065, %v2854, %v2853
  %v2856 = vrot.slane %v2559, 7
  %v2857 = vsel %vm1047, %v2856, %v2558
  %v2858 = vrot.slane %v2560, 6
  %v2859 = vsel %vm1050, %v2858, %v2857
  %v2860 = vrot.slane %v2561, 5
  %v2861 = vsel %vm1053, %v2860, %v2859
  %v2862 = vrot.slane %v2562, 4
  %v2863 = vsel %vm1056, %v2862, %v2861
  %v2864 = vrot.slane %v2563, 3
  %v2865 = vsel %vm1059, %v2864, %v2863
  %v2866 = vrot.slane %v2564, 2
  %v2867 = vsel %vm1062, %v2866, %v2865
  %v2868 = vrot.slane %v2565, 1
  %v2869 = vsel %vm1065, %v2868, %v2867
  %v2870 = vrot.slane %v2567, 7
  %v2871 = vsel %vm1047, %v2870, %v2566
  %v2872 = vrot.slane %v2568, 6
  %v2873 = vsel %vm1050, %v2872, %v2871
  %v2874 = vrot.slane %v2569, 5
  %v2875 = vsel %vm1053, %v2874, %v2873
  %v2876 = vrot.slane %v2570, 4
  %v2877 = vsel %vm1056, %v2876, %v2875
  %v2878 = vrot.slane %v2571, 3
  %v2879 = vsel %vm1059, %v2878, %v2877
  %v2880 = vrot.slane %v2572, 2
  %v2881 = vsel %vm1062, %v2880, %v2879
  %v2882 = vrot.slane %v2573, 1
  %v2883 = vsel %vm1065, %v2882, %v2881
  %v2884 = vrot.slane %v2575, 7
  %v2885 = vsel %vm1047, %v2884, %v2574
  %v2886 = vrot.slane %v2576, 6
  %v2887 = vsel %vm1050, %v2886, %v2885
  %v2888 = vrot.slane %v2577, 5
  %v2889 = vsel %vm1053, %v2888, %v2887
  %v2890 = vrot.slane %v2578, 4
  %v2891 = vsel %vm1056, %v2890, %v2889
  %v2892 = vrot.slane %v2579, 3
  %v2893 = vsel %vm1059, %v2892, %v2891
  %v2894 = vrot.slane %v2580, 2
  %v2895 = vsel %vm1062, %v2894, %v2893
  %v2896 = vrot.slane %v2581, 1
  %v2897 = vsel %vm1065, %v2896, %v2895
  %v2898 = vrot.slane %v2583, 7
  %v2899 = vsel %vm1047, %v2898, %v2582
  %v2900 = vrot.slane %v2584, 6
  %v2901 = vsel %vm1050, %v2900, %v2899
  %v2902 = vrot.slane %v2585, 5
  %v2903 = vsel %vm1053, %v2902, %v2901
  %v2904 = vrot.slane %v2586, 4
  %v2905 = vsel %vm1056, %v2904, %v2903
  %v2906 = vrot.slane %v2587, 3
  %v2907 = vsel %vm1059, %v2906, %v2905
  %v2908 = vrot.slane %v2588, 2
  %v2909 = vsel %vm1062, %v2908, %v2907
  %v2910 = vrot.slane %v2589, 1
  %v2911 = vsel %vm1065, %v2910, %v2909
  %v2912 = vrot.slane %v2591, 7
  %v2913 = vsel %vm1047, %v2912, %v2590
  %v2914 = vrot.slane %v2592, 6
  %v2915 = vsel %vm1050, %v2914, %v2913
  %v2916 = vrot.slane %v2593, 5
  %v2917 = vsel %vm1053, %v2916, %v2915
  %v2918 = vrot.slane %v2594, 4
  %v2919 = vsel %vm1056, %v2918, %v2917
  %v2920 = vrot.slane %v2595, 3
  %v2921 = vsel %vm1059, %v2920, %v2919
  %v2922 = vrot.slane %v2596, 2
  %v2923 = vsel %vm1062, %v2922, %v2921
  %v2924 = vrot.slane %v2597, 1
  %v2925 = vsel %vm1065, %v2924, %v2923
  %v2926 = vrot.slane %v2599, 7
  %v2927 = vsel %vm1047, %v2926, %v2598
  %v2928 = vrot.slane %v2600, 6
  %v2929 = vsel %vm1050, %v2928, %v2927
  %v2930 = vrot.slane %v2601, 5
  %v2931 = vsel %vm1053, %v2930, %v2929
  %v2932 = vrot.slane %v2602, 4
  %v2933 = vsel %vm1056, %v2932, %v2931
  %v2934 = vrot.slane %v2603, 3
  %v2935 = vsel %vm1059, %v2934, %v2933
  %v2936 = vrot.slane %v2604, 2
  %v2937 = vsel %vm1062, %v2936, %v2935
  %v2938 = vrot.slane %v2605, 1
  %v2939 = vsel %vm1065, %v2938, %v2937
  %v2940 = vrot.slane %v2607, 7
  %v2941 = vsel %vm1047, %v2940, %v2606
  %v2942 = vrot.slane %v2608, 6
  %v2943 = vsel %vm1050, %v2942, %v2941
  %v2944 = vrot.slane %v2609, 5
  %v2945 = vsel %vm1053, %v2944, %v2943
  %v2946 = vrot.slane %v2610, 4
  %v2947 = vsel %vm1056, %v2946, %v2945
  %v2948 = vrot.slane %v2611, 3
  %v2949 = vsel %vm1059, %v2948, %v2947
  %v2950 = vrot.slane %v2612, 2
  %v2951 = vsel %vm1062, %v2950, %v2949
  %v2952 = vrot.slane %v2613, 1
  %v2953 = vsel %vm1065, %v2952, %v2951
  %v2954 = vrot.slane %v2615, 7
  %v2955 = vsel %vm1047, %v2954, %v2614
  %v2956 = vrot.slane %v2616, 6
  %v2957 = vsel %vm1050, %v2956, %v2955
  %v2958 = vrot.slane %v2617, 5
  %v2959 = vsel %vm1053, %v2958, %v2957
  %v2960 = vrot.slane %v2618, 4
  %v2961 = vsel %vm1056, %v2960, %v2959
  %v2962 = vrot.slane %v2619, 3
  %v2963 = vsel %vm1059, %v2962, %v2961
  %v2964 = vrot.slane %v2620, 2
  %v2965 = vsel %vm1062, %v2964, %v2963
  %v2966 = vrot.slane %v2621, 1
  %v2967 = vsel %vm1065, %v2966, %v2965
  %v2968 = vrot.slane %v2623, 7
  %v2969 = vsel %vm1047, %v2968, %v2622
  %v2970 = vrot.slane %v2624, 6
  %v2971 = vsel %vm1050, %v2970, %v2969
  %v2972 = vrot.slane %v2625, 5
  %v2973 = vsel %vm1053, %v2972, %v2971
  %v2974 = vrot.slane %v2626, 4
  %v2975 = vsel %vm1056, %v2974, %v2973
  %v2976 = vrot.slane %v2627, 3
  %v2977 = vsel %vm1059, %v2976, %v2975
  %v2978 = vrot.slane %v2628, 2
  %v2979 = vsel %vm1062, %v2978, %v2977
  %v2980 = vrot.slane %v2629, 1
  %v2981 = vsel %vm1065, %v2980, %v2979
  %v2982 = vrot.slane %v2631, 7
  %v2983 = vsel %vm1047, %v2982, %v2630
  %v2984 = vrot.slane %v2632, 6
  %v2985 = vsel %vm1050, %v2984, %v2983
  %v2986 = vrot.slane %v2633, 5
  %v2987 = vsel %vm1053, %v2986, %v2985
  %v2988 = vrot.slane %v2634, 4
  %v2989 = vsel %vm1056, %v2988, %v2987
  %v2990 = vrot.slane %v2635, 3
  %v2991 = vsel %vm1059, %v2990, %v2989
  %v2992 = vrot.slane %v2636, 2
  %v2993 = vsel %vm1062, %v2992, %v2991
  %v2994 = vrot.slane %v2637, 1
  %v2995 = vsel %vm1065, %v2994, %v2993
  %v2996 = vrot.slane %v2639, 7
  %v2997 = vsel %vm1047, %v2996, %v2638
  %v2998 = vrot.slane %v2640, 6
  %v2999 = vsel %vm1050, %v2998, %v2997
  %v3000 = vrot.slane %v2641, 5
  %v3001 = vsel %vm1053, %v3000, %v2999
  %v3002 = vrot.slane %v2642, 4
  %v3003 = vsel %vm1056, %v3002, %v3001
  %v3004 = vrot.slane %v2643, 3
  %v3005 = vsel %vm1059, %v3004, %v3003
  %v3006 = vrot.slane %v2644, 2
  %v3007 = vsel %vm1062, %v3006, %v3005
  %v3008 = vrot.slane %v2645, 1
  %v3009 = vsel %vm1065, %v3008, %v3007
  %v3010 = vrot.slane %v2647, 7
  %v3011 = vsel %vm1047, %v3010, %v2646
  %v3012 = vrot.slane %v2648, 6
  %v3013 = vsel %vm1050, %v3012, %v3011
  %v3014 = vrot.slane %v2649, 5
  %v3015 = vsel %vm1053, %v3014, %v3013
  %v3016 = vrot.slane %v2650, 4
  %v3017 = vsel %vm1056, %v3016, %v3015
  %v3018 = vrot.slane %v2651, 3
  %v3019 = vsel %vm1059, %v3018, %v3017
  %v3020 = vrot.slane %v2652, 2
  %v3021 = vsel %vm1062, %v3020, %v3019
  %v3022 = vrot.slane %v2653, 1
  %v3023 = vsel %vm1065, %v3022, %v3021
  %v3024 = vrot.slane %v2655, 7
  %v3025 = vsel %vm1047, %v3024, %v2654
  %v3026 = vrot.slane %v2656, 6
  %v3027 = vsel %vm1050, %v3026, %v3025
  %v3028 = vrot.slane %v2657, 5
  %v3029 = vsel %vm1053, %v3028, %v3027
  %v3030 = vrot.slane %v2658, 4
  %v3031 = vsel %vm1056, %v3030, %v3029
  %v3032 = vrot.slane %v2659, 3
  %v3033 = vsel %vm1059, %v3032, %v3031
  %v3034 = vrot.slane %v2660, 2
  %v3035 = vsel %vm1062, %v3034, %v3033
  %v3036 = vrot.slane %v2661, 1
  %v3037 = vsel %vm1065, %v3036, %v3035
  %v3038 = vrot.slane %v2663, 7
  %v3039 = vsel %vm1047, %v3038, %v2662
  %v3040 = vrot.slane %v2664, 6
  %v3041 = vsel %vm1050, %v3040, %v3039
  %v3042 = vrot.slane %v2665, 5
  %v3043 = vsel %vm1053, %v3042, %v3041
  %v3044 = vrot.slane %v2666, 4
  %v3045 = vsel %vm1056, %v3044, %v3043
  %v3046 = vrot.slane %v2667, 3
  %v3047 = vsel %vm1059, %v3046, %v3045
  %v3048 = vrot.slane %v2668, 2
  %v3049 = vsel %vm1062, %v3048, %v3047
  %v3050 = vrot.slane %v2669, 1
  %v3051 = vsel %vm1065, %v3050, %v3049
  %v3052 = vrot.slane %v2671, 7
  %v3053 = vsel %vm1047, %v3052, %v2670
  %v3054 = vrot.slane %v2672, 6
  %v3055 = vsel %vm1050, %v3054, %v3053
  %v3056 = vrot.slane %v2673, 5
  %v3057 = vsel %vm1053, %v3056, %v3055
  %v3058 = vrot.slane %v2674, 4
  %v3059 = vsel %vm1056, %v3058, %v3057
  %v3060 = vrot.slane %v2675, 3
  %v3061 = vsel %vm1059, %v3060, %v3059
  %v3062 = vrot.slane %v2676, 2
  %v3063 = vsel %vm1062, %v3062, %v3061
  %v3064 = vrot.slane %v2677, 1
  %v3065 = vsel %vm1065, %v3064, %v3063
  %v3066 = vrot.slane %v2679, 7
  %v3067 = vsel %vm1047, %v3066, %v2678
  %v3068 = vrot.slane %v2680, 6
  %v3069 = vsel %vm1050, %v3068, %v3067
  %v3070 = vrot.slane %v2681, 5
  %v3071 = vsel %vm1053, %v3070, %v3069
  %v3072 = vrot.slane %v2682, 4
  %v3073 = vsel %vm1056, %v3072, %v3071
  %v3074 = vrot.slane %v2683, 3
  %v3075 = vsel %vm1059, %v3074, %v3073
  %v3076 = vrot.slane %v2684, 2
  %v3077 = vsel %vm1062, %v3076, %v3075
  %v3078 = vrot.slane %v2685, 1
  %v3079 = vsel %vm1065, %v3078, %v3077
  %v3080 = vrot.slane %v2687, 7
  %v3081 = vsel %vm1047, %v3080, %v2686
  %v3082 = vrot.slane %v2688, 6
  %v3083 = vsel %vm1050, %v3082, %v3081
  %v3084 = vrot.slane %v2689, 5
  %v3085 = vsel %vm1053, %v3084, %v3083
  %v3086 = vrot.slane %v2690, 4
  %v3087 = vsel %vm1056, %v3086, %v3085
  %v3088 = vrot.slane %v2691, 3
  %v3089 = vsel %vm1059, %v3088, %v3087
  %v3090 = vrot.slane %v2692, 2
  %v3091 = vsel %vm1062, %v3090, %v3089
  %v3092 = vrot.slane %v2693, 1
  %v3093 = vsel %vm1065, %v3092, %v3091
  %v3094 = vrot.slane %v2695, 7
  %v3095 = vsel %vm1047, %v3094, %v2694
  %v3096 = vrot.slane %v2696, 6
  %v3097 = vsel %vm1050, %v3096, %v3095
  %v3098 = vrot.slane %v2697, 5
  %v3099 = vsel %vm1053, %v3098, %v3097
  %v3100 = vrot.slane %v2698, 4
  %v3101 = vsel %vm1056, %v3100, %v3099
  %v3102 = vrot.slane %v2699, 3
  %v3103 = vsel %vm1059, %v3102, %v3101
  %v3104 = vrot.slane %v2700, 2
  %v3105 = vsel %vm1062, %v3104, %v3103
  %v3106 = vrot.slane %v2701, 1
  %v3107 = vsel %vm1065, %v3106, %v3105
  %v3108 = vrot.slane %v2703, 7
  %v3109 = vsel %vm1047, %v3108, %v2702
  %v3110 = vrot.slane %v2704, 6
  %v3111 = vsel %vm1050, %v3110, %v3109
  %v3112 = vrot.slane %v2705, 5
  %v3113 = vsel %vm1053, %v3112, %v3111
  %v3114 = vrot.slane %v2706, 4
  %v3115 = vsel %vm1056, %v3114, %v3113
  %v3116 = vrot.slane %v2707, 3
  %v3117 = vsel %vm1059, %v3116, %v3115
  %v3118 = vrot.slane %v2708, 2
  %v3119 = vsel %vm1062, %v3118, %v3117
  %v3120 = vrot.slane %v2709, 1
  %v3121 = vsel %vm1065, %v3120, %v3119
  %v3122 = vrot.slane %v2711, 7
  %v3123 = vsel %vm1047, %v3122, %v2710
  %v3124 = vrot.slane %v2712, 6
  %v3125 = vsel %vm1050, %v3124, %v3123
  %v3126 = vrot.slane %v2713, 5
  %v3127 = vsel %vm1053, %v3126, %v3125
  %v3128 = vrot.slane %v2714, 4
  %v3129 = vsel %vm1056, %v3128, %v3127
  %v3130 = vrot.slane %v2715, 3
  %v3131 = vsel %vm1059, %v3130, %v3129
  %v3132 = vrot.slane %v2716, 2
  %v3133 = vsel %vm1062, %v3132, %v3131
  %v3134 = vrot.slane %v2717, 1
  %v3135 = vsel %vm1065, %v3134, %v3133
  %v3136 = vrot.slane %v2719, 7
  %v3137 = vsel %vm1047, %v3136, %v2718
  %v3138 = vrot.slane %v2720, 6
  %v3139 = vsel %vm1050, %v3138, %v3137
  %v3140 = vrot.slane %v2721, 5
  %v3141 = vsel %vm1053, %v3140, %v3139
  %v3142 = vrot.slane %v2722, 4
  %v3143 = vsel %vm1056, %v3142, %v3141
  %v3144 = vrot.slane %v2723, 3
  %v3145 = vsel %vm1059, %v3144, %v3143
  %v3146 = vrot.slane %v2724, 2
  %v3147 = vsel %vm1062, %v3146, %v3145
  %v3148 = vrot.slane %v2725, 1
  %v3149 = vsel %vm1065, %v3148, %v3147
  %v3150 = vrot.slane %v2727, 7
  %v3151 = vsel %vm1047, %v3150, %v2726
  %v3152 = vrot.slane %v2728, 6
  %v3153 = vsel %vm1050, %v3152, %v3151
  %v3154 = vrot.slane %v2729, 5
  %v3155 = vsel %vm1053, %v3154, %v3153
  %v3156 = vrot.slane %v2730, 4
  %v3157 = vsel %vm1056, %v3156, %v3155
  %v3158 = vrot.slane %v2731, 3
  %v3159 = vsel %vm1059, %v3158, %v3157
  %v3160 = vrot.slane %v2732, 2
  %v3161 = vsel %vm1062, %v3160, %v3159
  %v3162 = vrot.slane %v2733, 1
  %v3163 = vsel %vm1065, %v3162, %v3161
  %v3164 = vrot.slane %v2735, 7
  %v3165 = vsel %vm1047, %v3164, %v2734
  %v3166 = vrot.slane %v2736, 6
  %v3167 = vsel %vm1050, %v3166, %v3165
  %v3168 = vrot.slane %v2737, 5
  %v3169 = vsel %vm1053, %v3168, %v3167
  %v3170 = vrot.slane %v2738, 4
  %v3171 = vsel %vm1056, %v3170, %v3169
  %v3172 = vrot.slane %v2739, 3
  %v3173 = vsel %vm1059, %v3172, %v3171
  %v3174 = vrot.slane %v2740, 2
  %v3175 = vsel %vm1062, %v3174, %v3173
  %v3176 = vrot.slane %v2741, 1
  %v3177 = vsel %vm1065, %v3176, %v3175
  %v3178 = vrot.slane %v2743, 7
  %v3179 = vsel %vm1047, %v3178, %v2742
  %v3180 = vrot.slane %v2744, 6
  %v3181 = vsel %vm1050, %v3180, %v3179
  %v3182 = vrot.slane %v2745, 5
  %v3183 = vsel %vm1053, %v3182, %v3181
  %v3184 = vrot.slane %v2746, 4
  %v3185 = vsel %vm1056, %v3184, %v3183
  %v3186 = vrot.slane %v2747, 3
  %v3187 = vsel %vm1059, %v3186, %v3185
  %v3188 = vrot.slane %v2748, 2
  %v3189 = vsel %vm1062, %v3188, %v3187
  %v3190 = vrot.slane %v2749, 1
  %v3191 = vsel %vm1065, %v3190, %v3189
  %v3192 = vrot.slane %v2751, 7
  %v3193 = vsel %vm1047, %v3192, %v2750
  %v3194 = vrot.slane %v2752, 6
  %v3195 = vsel %vm1050, %v3194, %v3193
  %v3196 = vrot.slane %v2753, 5
  %v3197 = vsel %vm1053, %v3196, %v3195
  %v3198 = vrot.slane %v2754, 4
  %v3199 = vsel %vm1056, %v3198, %v3197
  %v3200 = vrot.slane %v2755, 3
  %v3201 = vsel %vm1059, %v3200, %v3199
  %v3202 = vrot.slane %v2756, 2
  %v3203 = vsel %vm1062, %v3202, %v3201
  %v3204 = vrot.slane %v2757, 1
  %v3205 = vsel %vm1065, %v3204, %v3203
  %v3206 = vpack.c.b16 %v2785, %v2771
  %v3207 = vpack.c.b16 %v2813, %v2799
  %v3208 = vpack.c.b16 %v2841, %v2827
  %v3209 = vpack.c.b16 %v2869, %v2855
  %v3210 = vpack.c.b16 %v2897, %v2883
  %v3211 = vpack.c.b16 %v2925, %v2911
  %v3212 = vpack.c.b16 %v2953, %v2939
  %v3213 = vpack.c.b16 %v2981, %v2967
  %v3214 = vpack.c.b16 %v3009, %v2995
  %v3215 = vpack.c.b16 %v3037, %v3023
  %v3216 = vpack.c.b16 %v3065, %v3051
  %v3217 = vpack.c.b16 %v3093, %v3079
  %v3218 = vpack.c.b16 %v3121, %v3107
  %v3219 = vpack.c.b16 %v3149, %v3135
  %v3220 = vpack.c.b16 %v3177, %v3163
  %v3221 = vpack.c.b16 %v3205, %v3191
  %v3223 = vsel %vm1517, %v3206, 0
  %v3226 = vsel %vm1517, %v3207, 0
  %v3229 = vsel %vm1517, %v3208, 0
  %v3232 = vsel %vm1517, %v3209, 0
  %v3235 = vsel %vm1517, %v3210, 0
  %v3238 = vsel %vm1517, %v3211, 0
  %v3241 = vsel %vm1517, %v3212, 0
  %v3244 = vsel %vm1517, %v3213, 0
  %v3247 = vsel %vm1517, %v3214, 0
  %v3250 = vsel %vm1517, %v3215, 0
  %v3253 = vsel %vm1517, %v3216, 0
  %v3256 = vsel %vm1517, %v3217, 0
  %v3259 = vsel %vm1517, %v3218, 0
  %v3262 = vsel %vm1517, %v3219, 0
  %v3265 = vsel %vm1517, %v3220, 0
  %v3268 = vsel %vm1517, %v3221, 0
  %3270 = vmatprep.subr.bf16.mxu0 0
  %3271 = vmatpush1.bf16.msra.mxu0 %v2244
  %3272 = vmatprep.subr.bf16.mxu0 0
  %3273 = vmatpush1.bf16.msra.mxu0 %v2245
  %3274 = vmatprep.subr.bf16.mxu0 0
  %3275 = vmatpush1.bf16.msra.mxu0 0
  %3276 = vmatprep.subr.bf16.mxu0 0
  %3277 = vmatpush1.bf16.msra.mxu0 0
  %3278 = vmatprep.subr.bf16.mxu0 0
  %3279 = vmatpush1.bf16.msra.mxu0 0
  %3280 = vmatprep.subr.bf16.mxu0 0
  %3281 = vmatpush1.bf16.msra.mxu0 0
  %3282 = vmatprep.subr.bf16.mxu0 0
  %3283 = vmatpush1.bf16.msra.mxu0 0
  %3284 = vmatprep.subr.bf16.mxu0 0
  %3285 = vmatpush1.bf16.msra.mxu0 0
  %3286 = vmatprep.subr.bf16.mxu0 0
  %3287 = vmatpush1.bf16.msra.mxu0 0
  %3288 = vmatprep.subr.bf16.mxu0 0
  %3289 = vmatpush1.bf16.msra.mxu0 0
  %3290 = vmatprep.subr.bf16.mxu0 0
  %3291 = vmatpush1.bf16.msra.mxu0 0
  %3292 = vmatprep.subr.bf16.mxu0 0
  %3293 = vmatpush1.bf16.msra.mxu0 0
  %3294 = vmatprep.subr.bf16.mxu0 0
  %3295 = vmatpush1.bf16.msra.mxu0 0
  %3296 = vmatprep.subr.bf16.mxu0 0
  %3297 = vmatpush1.bf16.msra.mxu0 0
  %3298 = vmatprep.subr.bf16.mxu0 0
  %3299 = vmatpush1.bf16.msra.mxu0 0
  %3300 = vmatprep.subr.bf16.mxu0 0
  %3301 = vmatpush1.bf16.msra.mxu0 0
  %3302 = vmatprep.mubr.bf16.mxu0 0
  %3303 = vmatmul.mubr.bf16.gmra.mrb[0].mxu0 %v3223
  %v3304 = vpop.f32.mrb[0].mxu0
  %v3305 = vadd.f32 0.0, %v3304
  %v3306 = vpop.f32.mrb[0].mxu0
  %v3307 = vpop.f32.mrb[0].mxu0
  %v3308 = vadd.f32 0.0, %v3307
  %v3309 = vpop.f32.mrb[0].mxu0
  %3310 = vmatprep.mubr.bf16.mxu0 0
  %3311 = vmatmul.mubr.bf16.gmra.mrb[0].mxu0 %v3226
  %v3312 = vpop.f32.mrb[0].mxu0
  %v3313 = vadd.f32 0.0, %v3312
  %v3314 = vpop.f32.mrb[0].mxu0
  %v3315 = vpop.f32.mrb[0].mxu0
  %v3316 = vadd.f32 0.0, %v3315
  %v3317 = vpop.f32.mrb[0].mxu0
  %3318 = vmatprep.mubr.bf16.mxu0 0
  %3319 = vmatmul.mubr.bf16.gmra.mrb[0].mxu0 %v3229
  %v3320 = vpop.f32.mrb[0].mxu0
  %v3321 = vadd.f32 0.0, %v3320
  %v3322 = vpop.f32.mrb[0].mxu0
  %v3323 = vpop.f32.mrb[0].mxu0
  %v3324 = vadd.f32 0.0, %v3323
  %v3325 = vpop.f32.mrb[0].mxu0
  %3326 = vmatprep.mubr.bf16.mxu0 0
  %3327 = vmatmul.mubr.bf16.gmra.mrb[0].mxu0 %v3232
  %v3328 = vpop.f32.mrb[0].mxu0
  %v3329 = vadd.f32 0.0, %v3328
  %v3330 = vpop.f32.mrb[0].mxu0
  %v3331 = vpop.f32.mrb[0].mxu0
  %v3332 = vadd.f32 0.0, %v3331
  %v3333 = vpop.f32.mrb[0].mxu0
  %3334 = vmatprep.mubr.bf16.mxu0 0
  %3335 = vmatmul.mubr.bf16.gmra.mrb[0].mxu0 %v3235
  %v3336 = vpop.f32.mrb[0].mxu0
  %v3337 = vadd.f32 0.0, %v3336
  %v3338 = vpop.f32.mrb[0].mxu0
  %v3339 = vpop.f32.mrb[0].mxu0
  %v3340 = vadd.f32 0.0, %v3339
  %v3341 = vpop.f32.mrb[0].mxu0
  %3342 = vmatprep.mubr.bf16.mxu0 0
  %3343 = vmatmul.mubr.bf16.gmra.mrb[0].mxu0 %v3238
  %v3344 = vpop.f32.mrb[0].mxu0
  %v3345 = vadd.f32 0.0, %v3344
  %v3346 = vpop.f32.mrb[0].mxu0
  %v3347 = vpop.f32.mrb[0].mxu0
  %v3348 = vadd.f32 0.0, %v3347
  %v3349 = vpop.f32.mrb[0].mxu0
  %3350 = vmatprep.mubr.bf16.mxu0 0
  %3351 = vmatmul.mubr.bf16.gmra.mrb[0].mxu0 %v3241
  %v3352 = vpop.f32.mrb[0].mxu0
  %v3353 = vadd.f32 0.0, %v3352
  %v3354 = vpop.f32.mrb[0].mxu0
  %v3355 = vpop.f32.mrb[0].mxu0
  %v3356 = vadd.f32 0.0, %v3355
  %v3357 = vpop.f32.mrb[0].mxu0
  %3358 = vmatprep.mubr.bf16.mxu0 0
  %3359 = vmatmul.mubr.bf16.gmra.mrb[0].mxu0 %v3244
  %v3360 = vpop.f32.mrb[0].mxu0
  %v3361 = vadd.f32 0.0, %v3360
  %v3362 = vpop.f32.mrb[0].mxu0
  %v3363 = vpop.f32.mrb[0].mxu0
  %v3364 = vadd.f32 0.0, %v3363
  %v3365 = vpop.f32.mrb[0].mxu0
  %3366 = vmatprep.mubr.bf16.mxu0 0
  %3367 = vmatmul.mubr.bf16.gmra.mrb[0].mxu0 %v3247
  %v3368 = vpop.f32.mrb[0].mxu0
  %v3369 = vadd.f32 0.0, %v3368
  %v3370 = vpop.f32.mrb[0].mxu0
  %v3371 = vpop.f32.mrb[0].mxu0
  %v3372 = vadd.f32 0.0, %v3371
  %v3373 = vpop.f32.mrb[0].mxu0
  %3374 = vmatprep.mubr.bf16.mxu0 0
  %3375 = vmatmul.mubr.bf16.gmra.mrb[0].mxu0 %v3250
  %v3376 = vpop.f32.mrb[0].mxu0
  %v3377 = vadd.f32 0.0, %v3376
  %v3378 = vpop.f32.mrb[0].mxu0
  %v3379 = vpop.f32.mrb[0].mxu0
  %v3380 = vadd.f32 0.0, %v3379
  %v3381 = vpop.f32.mrb[0].mxu0
  %3382 = vmatprep.mubr.bf16.mxu0 0
  %3383 = vmatmul.mubr.bf16.gmra.mrb[0].mxu0 %v3253
  %v3384 = vpop.f32.mrb[0].mxu0
  %v3385 = vadd.f32 0.0, %v3384
  %v3386 = vpop.f32.mrb[0].mxu0
  %v3387 = vpop.f32.mrb[0].mxu0
  %v3388 = vadd.f32 0.0, %v3387
  %v3389 = vpop.f32.mrb[0].mxu0
  %3390 = vmatprep.mubr.bf16.mxu0 0
  %3391 = vmatmul.mubr.bf16.gmra.mrb[0].mxu0 %v3256
  %v3392 = vpop.f32.mrb[0].mxu0
  %v3393 = vadd.f32 0.0, %v3392
  %v3394 = vpop.f32.mrb[0].mxu0
  %v3395 = vpop.f32.mrb[0].mxu0
  %v3396 = vadd.f32 0.0, %v3395
  %v3397 = vpop.f32.mrb[0].mxu0
  %3398 = vmatprep.mubr.bf16.mxu0 0
  %3399 = vmatmul.mubr.bf16.gmra.mrb[0].mxu0 %v3259
  %v3400 = vpop.f32.mrb[0].mxu0
  %v3401 = vadd.f32 0.0, %v3400
  %v3402 = vpop.f32.mrb[0].mxu0
  %v3403 = vpop.f32.mrb[0].mxu0
  %v3404 = vadd.f32 0.0, %v3403
  %v3405 = vpop.f32.mrb[0].mxu0
  %3406 = vmatprep.mubr.bf16.mxu0 0
  %3407 = vmatmul.mubr.bf16.gmra.mrb[0].mxu0 %v3262
  %v3408 = vpop.f32.mrb[0].mxu0
  %v3409 = vadd.f32 0.0, %v3408
  %v3410 = vpop.f32.mrb[0].mxu0
  %v3411 = vpop.f32.mrb[0].mxu0
  %v3412 = vadd.f32 0.0, %v3411
  %v3413 = vpop.f32.mrb[0].mxu0
  %3414 = vmatprep.mubr.bf16.mxu0 0
  %3415 = vmatmul.mubr.bf16.gmra.mrb[0].mxu0 %v3265
  %v3416 = vpop.f32.mrb[0].mxu0
  %v3417 = vadd.f32 0.0, %v3416
  %v3418 = vpop.f32.mrb[0].mxu0
  %v3419 = vpop.f32.mrb[0].mxu0
  %v3420 = vadd.f32 0.0, %v3419
  %v3421 = vpop.f32.mrb[0].mxu0
  %3422 = vmatprep.mubr.bf16.mxu0 0
  %3423 = vmatmul.mubr.bf16.gmra.mrb[0].mxu0 %v3268
  %v3424 = vpop.f32.mrb[0].mxu0
  %v3425 = vadd.f32 0.0, %v3424
  %v3426 = vpop.f32.mrb[0].mxu0
  %v3427 = vpop.f32.mrb[0].mxu0
  %v3428 = vadd.f32 0.0, %v3427
  %v3429 = vpop.f32.mrb[0].mxu0
  %3430 = vdwg.mxu0
  %v3431 = vld [vmem:[%s0 + $0x2] sm:$0x1]
  %v3432 = vld [vmem:[%s0 + $0x6] sm:$0x1]
  %v3433 = vld [vmem:[%s0 + $0xa] sm:$0x1]
  %v3434 = vld [vmem:[%s0 + $0xe] sm:$0x1]
  %v3435 = vld [vmem:[%s0 + $0x12] sm:$0x1]
  %v3436 = vld [vmem:[%s0 + $0x16] sm:$0x1]
  %v3437 = vld [vmem:[%s0 + $0x1a] sm:$0x1]
  %v3438 = vld [vmem:[%s0 + $0x1e] sm:$0x1]
  %v3439 = vld [vmem:[%s0 + $0x22] sm:$0x1]
  %v3440 = vld [vmem:[%s0 + $0x26] sm:$0x1]
  %v3441 = vld [vmem:[%s0 + $0x2a] sm:$0x1]
  %v3442 = vld [vmem:[%s0 + $0x2e] sm:$0x1]
  %v3443 = vld [vmem:[%s0 + $0x32] sm:$0x1]
  %v3444 = vld [vmem:[%s0 + $0x36] sm:$0x1]
  %v3445 = vld [vmem:[%s0 + $0x3a] sm:$0x1]
  %v3446 = vld [vmem:[%s0 + $0x3e] sm:$0x1]
  %v3447 = vld [vmem:[%s0 + $0x42] sm:$0x1]
  %v3448 = vld [vmem:[%s0 + $0x46] sm:$0x1]
  %v3449 = vld [vmem:[%s0 + $0x4a] sm:$0x1]
  %v3450 = vld [vmem:[%s0 + $0x4e] sm:$0x1]
  %v3451 = vld [vmem:[%s0 + $0x52] sm:$0x1]
  %v3452 = vld [vmem:[%s0 + $0x56] sm:$0x1]
  %v3453 = vld [vmem:[%s0 + $0x5a] sm:$0x1]
  %v3454 = vld [vmem:[%s0 + $0x5e] sm:$0x1]
  %v3455 = vld [vmem:[%s0 + $0x62] sm:$0x1]
  %v3456 = vld [vmem:[%s0 + $0x66] sm:$0x1]
  %v3457 = vld [vmem:[%s0 + $0x6a] sm:$0x1]
  %v3458 = vld [vmem:[%s0 + $0x6e] sm:$0x1]
  %v3459 = vld [vmem:[%s0 + $0x72] sm:$0x1]
  %v3460 = vld [vmem:[%s0 + $0x76] sm:$0x1]
  %v3461 = vld [vmem:[%s0 + $0x7a] sm:$0x1]
  %v3462 = vld [vmem:[%s0 + $0x7e] sm:$0x1]
  %v3463 = vld [vmem:[%s0 + $0x82] sm:$0x1]
  %v3464 = vld [vmem:[%s0 + $0x86] sm:$0x1]
  %v3465 = vld [vmem:[%s0 + $0x8a] sm:$0x1]
  %v3466 = vld [vmem:[%s0 + $0x8e] sm:$0x1]
  %v3467 = vld [vmem:[%s0 + $0x92] sm:$0x1]
  %v3468 = vld [vmem:[%s0 + $0x96] sm:$0x1]
  %v3469 = vld [vmem:[%s0 + $0x9a] sm:$0x1]
  %v3470 = vld [vmem:[%s0 + $0x9e] sm:$0x1]
  %v3471 = vld [vmem:[%s0 + $0xa2] sm:$0x1]
  %v3472 = vld [vmem:[%s0 + $0xa6] sm:$0x1]
  %v3473 = vld [vmem:[%s0 + $0xaa] sm:$0x1]
  %v3474 = vld [vmem:[%s0 + $0xae] sm:$0x1]
  %v3475 = vld [vmem:[%s0 + $0xb2] sm:$0x1]
  %v3476 = vld [vmem:[%s0 + $0xb6] sm:$0x1]
  %v3477 = vld [vmem:[%s0 + $0xba] sm:$0x1]
  %v3478 = vld [vmem:[%s0 + $0xbe] sm:$0x1]
  %v3479 = vld [vmem:[%s0 + $0xc2] sm:$0x1]
  %v3480 = vld [vmem:[%s0 + $0xc6] sm:$0x1]
  %v3481 = vld [vmem:[%s0 + $0xca] sm:$0x1]
  %v3482 = vld [vmem:[%s0 + $0xce] sm:$0x1]
  %v3483 = vld [vmem:[%s0 + $0xd2] sm:$0x1]
  %v3484 = vld [vmem:[%s0 + $0xd6] sm:$0x1]
  %v3485 = vld [vmem:[%s0 + $0xda] sm:$0x1]
  %v3486 = vld [vmem:[%s0 + $0xde] sm:$0x1]
  %v3487 = vld [vmem:[%s0 + $0xe2] sm:$0x1]
  %v3488 = vld [vmem:[%s0 + $0xe6] sm:$0x1]
  %v3489 = vld [vmem:[%s0 + $0xea] sm:$0x1]
  %v3490 = vld [vmem:[%s0 + $0xee] sm:$0x1]
  %v3491 = vld [vmem:[%s0 + $0xf2] sm:$0x1]
  %v3492 = vld [vmem:[%s0 + $0xf6] sm:$0x1]
  %v3493 = vld [vmem:[%s0 + $0xfa] sm:$0x1]
  %v3494 = vld [vmem:[%s0 + $0xfe] sm:$0x1]
  %v3495 = vld [vmem:[%s0 + $0x102] sm:$0x1]
  %v3496 = vld [vmem:[%s0 + $0x106] sm:$0x1]
  %v3497 = vld [vmem:[%s0 + $0x10a] sm:$0x1]
  %v3498 = vld [vmem:[%s0 + $0x10e] sm:$0x1]
  %v3499 = vld [vmem:[%s0 + $0x112] sm:$0x1]
  %v3500 = vld [vmem:[%s0 + $0x116] sm:$0x1]
  %v3501 = vld [vmem:[%s0 + $0x11a] sm:$0x1]
  %v3502 = vld [vmem:[%s0 + $0x11e] sm:$0x1]
  %v3503 = vld [vmem:[%s0 + $0x122] sm:$0x1]
  %v3504 = vld [vmem:[%s0 + $0x126] sm:$0x1]
  %v3505 = vld [vmem:[%s0 + $0x12a] sm:$0x1]
  %v3506 = vld [vmem:[%s0 + $0x12e] sm:$0x1]
  %v3507 = vld [vmem:[%s0 + $0x132] sm:$0x1]
  %v3508 = vld [vmem:[%s0 + $0x136] sm:$0x1]
  %v3509 = vld [vmem:[%s0 + $0x13a] sm:$0x1]
  %v3510 = vld [vmem:[%s0 + $0x13e] sm:$0x1]
  %v3511 = vld [vmem:[%s0 + $0x142] sm:$0x1]
  %v3512 = vld [vmem:[%s0 + $0x146] sm:$0x1]
  %v3513 = vld [vmem:[%s0 + $0x14a] sm:$0x1]
  %v3514 = vld [vmem:[%s0 + $0x14e] sm:$0x1]
  %v3515 = vld [vmem:[%s0 + $0x152] sm:$0x1]
  %v3516 = vld [vmem:[%s0 + $0x156] sm:$0x1]
  %v3517 = vld [vmem:[%s0 + $0x15a] sm:$0x1]
  %v3518 = vld [vmem:[%s0 + $0x15e] sm:$0x1]
  %v3519 = vld [vmem:[%s0 + $0x162] sm:$0x1]
  %v3520 = vld [vmem:[%s0 + $0x166] sm:$0x1]
  %v3521 = vld [vmem:[%s0 + $0x16a] sm:$0x1]
  %v3522 = vld [vmem:[%s0 + $0x16e] sm:$0x1]
  %v3523 = vld [vmem:[%s0 + $0x172] sm:$0x1]
  %v3524 = vld [vmem:[%s0 + $0x176] sm:$0x1]
  %v3525 = vld [vmem:[%s0 + $0x17a] sm:$0x1]
  %v3526 = vld [vmem:[%s0 + $0x17e] sm:$0x1]
  %v3527 = vld [vmem:[%s0 + $0x182] sm:$0x1]
  %v3528 = vld [vmem:[%s0 + $0x186] sm:$0x1]
  %v3529 = vld [vmem:[%s0 + $0x18a] sm:$0x1]
  %v3530 = vld [vmem:[%s0 + $0x18e] sm:$0x1]
  %v3531 = vld [vmem:[%s0 + $0x192] sm:$0x1]
  %v3532 = vld [vmem:[%s0 + $0x196] sm:$0x1]
  %v3533 = vld [vmem:[%s0 + $0x19a] sm:$0x1]
  %v3534 = vld [vmem:[%s0 + $0x19e] sm:$0x1]
  %v3535 = vld [vmem:[%s0 + $0x1a2] sm:$0x1]
  %v3536 = vld [vmem:[%s0 + $0x1a6] sm:$0x1]
  %v3537 = vld [vmem:[%s0 + $0x1aa] sm:$0x1]
  %v3538 = vld [vmem:[%s0 + $0x1ae] sm:$0x1]
  %v3539 = vld [vmem:[%s0 + $0x1b2] sm:$0x1]
  %v3540 = vld [vmem:[%s0 + $0x1b6] sm:$0x1]
  %v3541 = vld [vmem:[%s0 + $0x1ba] sm:$0x1]
  %v3542 = vld [vmem:[%s0 + $0x1be] sm:$0x1]
  %v3543 = vld [vmem:[%s0 + $0x1c2] sm:$0x1]
  %v3544 = vld [vmem:[%s0 + $0x1c6] sm:$0x1]
  %v3545 = vld [vmem:[%s0 + $0x1ca] sm:$0x1]
  %v3546 = vld [vmem:[%s0 + $0x1ce] sm:$0x1]
  %v3547 = vld [vmem:[%s0 + $0x1d2] sm:$0x1]
  %v3548 = vld [vmem:[%s0 + $0x1d6] sm:$0x1]
  %v3549 = vld [vmem:[%s0 + $0x1da] sm:$0x1]
  %v3550 = vld [vmem:[%s0 + $0x1de] sm:$0x1]
  %v3551 = vld [vmem:[%s0 + $0x1e2] sm:$0x1]
  %v3552 = vld [vmem:[%s0 + $0x1e6] sm:$0x1]
  %v3553 = vld [vmem:[%s0 + $0x1ea] sm:$0x1]
  %v3554 = vld [vmem:[%s0 + $0x1ee] sm:$0x1]
  %v3555 = vld [vmem:[%s0 + $0x1f2] sm:$0x1]
  %v3556 = vld [vmem:[%s0 + $0x1f6] sm:$0x1]
  %v3557 = vld [vmem:[%s0 + $0x1fa] sm:$0x1]
  %v3558 = vld [vmem:[%s0 + $0x1fe] sm:$0x1]
  %v3559 = vld [vmem:[%s0 + $0x202] sm:$0x1]
  %v3560 = vld [vmem:[%s0 + $0x206] sm:$0x1]
  %v3561 = vld [vmem:[%s0 + $0x20a] sm:$0x1]
  %v3562 = vld [vmem:[%s0 + $0x20e] sm:$0x1]
  %v3563 = vld [vmem:[%s0 + $0x212] sm:$0x1]
  %v3564 = vld [vmem:[%s0 + $0x216] sm:$0x1]
  %v3565 = vld [vmem:[%s0 + $0x21a] sm:$0x1]
  %v3566 = vld [vmem:[%s0 + $0x21e] sm:$0x1]
  %v3567 = vld [vmem:[%s0 + $0x222] sm:$0x1]
  %v3568 = vld [vmem:[%s0 + $0x226] sm:$0x1]
  %v3569 = vld [vmem:[%s0 + $0x22a] sm:$0x1]
  %v3570 = vld [vmem:[%s0 + $0x22e] sm:$0x1]
  %v3571 = vld [vmem:[%s0 + $0x232] sm:$0x1]
  %v3572 = vld [vmem:[%s0 + $0x236] sm:$0x1]
  %v3573 = vld [vmem:[%s0 + $0x23a] sm:$0x1]
  %v3574 = vld [vmem:[%s0 + $0x23e] sm:$0x1]
  %v3575 = vld [vmem:[%s0 + $0x242] sm:$0x1]
  %v3576 = vld [vmem:[%s0 + $0x246] sm:$0x1]
  %v3577 = vld [vmem:[%s0 + $0x24a] sm:$0x1]
  %v3578 = vld [vmem:[%s0 + $0x24e] sm:$0x1]
  %v3579 = vld [vmem:[%s0 + $0x252] sm:$0x1]
  %v3580 = vld [vmem:[%s0 + $0x256] sm:$0x1]
  %v3581 = vld [vmem:[%s0 + $0x25a] sm:$0x1]
  %v3582 = vld [vmem:[%s0 + $0x25e] sm:$0x1]
  %v3583 = vld [vmem:[%s0 + $0x262] sm:$0x1]
  %v3584 = vld [vmem:[%s0 + $0x266] sm:$0x1]
  %v3585 = vld [vmem:[%s0 + $0x26a] sm:$0x1]
  %v3586 = vld [vmem:[%s0 + $0x26e] sm:$0x1]
  %v3587 = vld [vmem:[%s0 + $0x272] sm:$0x1]
  %v3588 = vld [vmem:[%s0 + $0x276] sm:$0x1]
  %v3589 = vld [vmem:[%s0 + $0x27a] sm:$0x1]
  %v3590 = vld [vmem:[%s0 + $0x27e] sm:$0x1]
  %v3591 = vld [vmem:[%s0 + $0x282] sm:$0x1]
  %v3592 = vld [vmem:[%s0 + $0x286] sm:$0x1]
  %v3593 = vld [vmem:[%s0 + $0x28a] sm:$0x1]
  %v3594 = vld [vmem:[%s0 + $0x28e] sm:$0x1]
  %v3595 = vld [vmem:[%s0 + $0x292] sm:$0x1]
  %v3596 = vld [vmem:[%s0 + $0x296] sm:$0x1]
  %v3597 = vld [vmem:[%s0 + $0x29a] sm:$0x1]
  %v3598 = vld [vmem:[%s0 + $0x29e] sm:$0x1]
  %v3599 = vld [vmem:[%s0 + $0x2a2] sm:$0x1]
  %v3600 = vld [vmem:[%s0 + $0x2a6] sm:$0x1]
  %v3601 = vld [vmem:[%s0 + $0x2aa] sm:$0x1]
  %v3602 = vld [vmem:[%s0 + $0x2ae] sm:$0x1]
  %v3603 = vld [vmem:[%s0 + $0x2b2] sm:$0x1]
  %v3604 = vld [vmem:[%s0 + $0x2b6] sm:$0x1]
  %v3605 = vld [vmem:[%s0 + $0x2ba] sm:$0x1]
  %v3606 = vld [vmem:[%s0 + $0x2be] sm:$0x1]
  %v3607 = vld [vmem:[%s0 + $0x2c2] sm:$0x1]
  %v3608 = vld [vmem:[%s0 + $0x2c6] sm:$0x1]
  %v3609 = vld [vmem:[%s0 + $0x2ca] sm:$0x1]
  %v3610 = vld [vmem:[%s0 + $0x2ce] sm:$0x1]
  %v3611 = vld [vmem:[%s0 + $0x2d2] sm:$0x1]
  %v3612 = vld [vmem:[%s0 + $0x2d6] sm:$0x1]
  %v3613 = vld [vmem:[%s0 + $0x2da] sm:$0x1]
  %v3614 = vld [vmem:[%s0 + $0x2de] sm:$0x1]
  %v3615 = vld [vmem:[%s0 + $0x2e2] sm:$0x1]
  %v3616 = vld [vmem:[%s0 + $0x2e6] sm:$0x1]
  %v3617 = vld [vmem:[%s0 + $0x2ea] sm:$0x1]
  %v3618 = vld [vmem:[%s0 + $0x2ee] sm:$0x1]
  %v3619 = vld [vmem:[%s0 + $0x2f2] sm:$0x1]
  %v3620 = vld [vmem:[%s0 + $0x2f6] sm:$0x1]
  %v3621 = vld [vmem:[%s0 + $0x2fa] sm:$0x1]
  %v3622 = vld [vmem:[%s0 + $0x2fe] sm:$0x1]
  %v3623 = vld [vmem:[%s0 + $0x302] sm:$0x1]
  %v3624 = vld [vmem:[%s0 + $0x306] sm:$0x1]
  %v3625 = vld [vmem:[%s0 + $0x30a] sm:$0x1]
  %v3626 = vld [vmem:[%s0 + $0x30e] sm:$0x1]
  %v3627 = vld [vmem:[%s0 + $0x312] sm:$0x1]
  %v3628 = vld [vmem:[%s0 + $0x316] sm:$0x1]
  %v3629 = vld [vmem:[%s0 + $0x31a] sm:$0x1]
  %v3630 = vld [vmem:[%s0 + $0x31e] sm:$0x1]
  %v3631 = vld [vmem:[%s0 + $0x322] sm:$0x1]
  %v3632 = vld [vmem:[%s0 + $0x326] sm:$0x1]
  %v3633 = vld [vmem:[%s0 + $0x32a] sm:$0x1]
  %v3634 = vld [vmem:[%s0 + $0x32e] sm:$0x1]
  %v3635 = vld [vmem:[%s0 + $0x332] sm:$0x1]
  %v3636 = vld [vmem:[%s0 + $0x336] sm:$0x1]
  %v3637 = vld [vmem:[%s0 + $0x33a] sm:$0x1]
  %v3638 = vld [vmem:[%s0 + $0x33e] sm:$0x1]
  %v3639 = vld [vmem:[%s0 + $0x342] sm:$0x1]
  %v3640 = vld [vmem:[%s0 + $0x346] sm:$0x1]
  %v3641 = vld [vmem:[%s0 + $0x34a] sm:$0x1]
  %v3642 = vld [vmem:[%s0 + $0x34e] sm:$0x1]
  %v3643 = vld [vmem:[%s0 + $0x352] sm:$0x1]
  %v3644 = vld [vmem:[%s0 + $0x356] sm:$0x1]
  %v3645 = vld [vmem:[%s0 + $0x35a] sm:$0x1]
  %v3646 = vld [vmem:[%s0 + $0x35e] sm:$0x1]
  %v3647 = vld [vmem:[%s0 + $0x362] sm:$0x1]
  %v3648 = vld [vmem:[%s0 + $0x366] sm:$0x1]
  %v3649 = vld [vmem:[%s0 + $0x36a] sm:$0x1]
  %v3650 = vld [vmem:[%s0 + $0x36e] sm:$0x1]
  %v3651 = vld [vmem:[%s0 + $0x372] sm:$0x1]
  %v3652 = vld [vmem:[%s0 + $0x376] sm:$0x1]
  %v3653 = vld [vmem:[%s0 + $0x37a] sm:$0x1]
  %v3654 = vld [vmem:[%s0 + $0x37e] sm:$0x1]
  %v3655 = vld [vmem:[%s0 + $0x382] sm:$0x1]
  %v3656 = vld [vmem:[%s0 + $0x386] sm:$0x1]
  %v3657 = vld [vmem:[%s0 + $0x38a] sm:$0x1]
  %v3658 = vld [vmem:[%s0 + $0x38e] sm:$0x1]
  %v3659 = vld [vmem:[%s0 + $0x392] sm:$0x1]
  %v3660 = vld [vmem:[%s0 + $0x396] sm:$0x1]
  %v3661 = vld [vmem:[%s0 + $0x39a] sm:$0x1]
  %v3662 = vld [vmem:[%s0 + $0x39e] sm:$0x1]
  %v3663 = vld [vmem:[%s0 + $0x3a2] sm:$0x1]
  %v3664 = vld [vmem:[%s0 + $0x3a6] sm:$0x1]
  %v3665 = vld [vmem:[%s0 + $0x3aa] sm:$0x1]
  %v3666 = vld [vmem:[%s0 + $0x3ae] sm:$0x1]
  %v3667 = vld [vmem:[%s0 + $0x3b2] sm:$0x1]
  %v3668 = vld [vmem:[%s0 + $0x3b6] sm:$0x1]
  %v3669 = vld [vmem:[%s0 + $0x3ba] sm:$0x1]
  %v3670 = vld [vmem:[%s0 + $0x3be] sm:$0x1]
  %v3671 = vld [vmem:[%s0 + $0x3c2] sm:$0x1]
  %v3672 = vld [vmem:[%s0 + $0x3c6] sm:$0x1]
  %v3673 = vld [vmem:[%s0 + $0x3ca] sm:$0x1]
  %v3674 = vld [vmem:[%s0 + $0x3ce] sm:$0x1]
  %v3675 = vld [vmem:[%s0 + $0x3d2] sm:$0x1]
  %v3676 = vld [vmem:[%s0 + $0x3d6] sm:$0x1]
  %v3677 = vld [vmem:[%s0 + $0x3da] sm:$0x1]
  %v3678 = vld [vmem:[%s0 + $0x3de] sm:$0x1]
  %v3679 = vld [vmem:[%s0 + $0x3e2] sm:$0x1]
  %v3680 = vld [vmem:[%s0 + $0x3e6] sm:$0x1]
  %v3681 = vld [vmem:[%s0 + $0x3ea] sm:$0x1]
  %v3682 = vld [vmem:[%s0 + $0x3ee] sm:$0x1]
  %v3683 = vld [vmem:[%s0 + $0x3f2] sm:$0x1]
  %v3684 = vld [vmem:[%s0 + $0x3f6] sm:$0x1]
  %v3685 = vld [vmem:[%s0 + $0x3fa] sm:$0x1]
  %v3686 = vld [vmem:[%s0 + $0x3fe] sm:$0x1]
  %v3687 = vpack.c.bf16 %v3431, %v3431
  %v3688 = vpack.c.bf16 %v3432, %v3432
  %v3689 = vpack.c.bf16 %v3433, %v3433
  %v3690 = vpack.c.bf16 %v3434, %v3434
  %v3691 = vpack.c.bf16 %v3435, %v3435
  %v3692 = vpack.c.bf16 %v3436, %v3436
  %v3693 = vpack.c.bf16 %v3437, %v3437
  %v3694 = vpack.c.bf16 %v3438, %v3438
  %v3695 = vpack.c.bf16 %v3439, %v3439
  %v3696 = vpack.c.bf16 %v3440, %v3440
  %v3697 = vpack.c.bf16 %v3441, %v3441
  %v3698 = vpack.c.bf16 %v3442, %v3442
  %v3699 = vpack.c.bf16 %v3443, %v3443
  %v3700 = vpack.c.bf16 %v3444, %v3444
  %v3701 = vpack.c.bf16 %v3445, %v3445
  %v3702 = vpack.c.bf16 %v3446, %v3446
  %v3703 = vpack.c.bf16 %v3447, %v3447
  %v3704 = vpack.c.bf16 %v3448, %v3448
  %v3705 = vpack.c.bf16 %v3449, %v3449
  %v3706 = vpack.c.bf16 %v3450, %v3450
  %v3707 = vpack.c.bf16 %v3451, %v3451
  %v3708 = vpack.c.bf16 %v3452, %v3452
  %v3709 = vpack.c.bf16 %v3453, %v3453
  %v3710 = vpack.c.bf16 %v3454, %v3454
  %v3711 = vpack.c.bf16 %v3455, %v3455
  %v3712 = vpack.c.bf16 %v3456, %v3456
  %v3713 = vpack.c.bf16 %v3457, %v3457
  %v3714 = vpack.c.bf16 %v3458, %v3458
  %v3715 = vpack.c.bf16 %v3459, %v3459
  %v3716 = vpack.c.bf16 %v3460, %v3460
  %v3717 = vpack.c.bf16 %v3461, %v3461
  %v3718 = vpack.c.bf16 %v3462, %v3462
  %v3719 = vpack.c.bf16 %v3463, %v3463
  %v3720 = vpack.c.bf16 %v3464, %v3464
  %v3721 = vpack.c.bf16 %v3465, %v3465
  %v3722 = vpack.c.bf16 %v3466, %v3466
  %v3723 = vpack.c.bf16 %v3467, %v3467
  %v3724 = vpack.c.bf16 %v3468, %v3468
  %v3725 = vpack.c.bf16 %v3469, %v3469
  %v3726 = vpack.c.bf16 %v3470, %v3470
  %v3727 = vpack.c.bf16 %v3471, %v3471
  %v3728 = vpack.c.bf16 %v3472, %v3472
  %v3729 = vpack.c.bf16 %v3473, %v3473
  %v3730 = vpack.c.bf16 %v3474, %v3474
  %v3731 = vpack.c.bf16 %v3475, %v3475
  %v3732 = vpack.c.bf16 %v3476, %v3476
  %v3733 = vpack.c.bf16 %v3477, %v3477
  %v3734 = vpack.c.bf16 %v3478, %v3478
  %v3735 = vpack.c.bf16 %v3479, %v3479
  %v3736 = vpack.c.bf16 %v3480, %v3480
  %v3737 = vpack.c.bf16 %v3481, %v3481
  %v3738 = vpack.c.bf16 %v3482, %v3482
  %v3739 = vpack.c.bf16 %v3483, %v3483
  %v3740 = vpack.c.bf16 %v3484, %v3484
  %v3741 = vpack.c.bf16 %v3485, %v3485
  %v3742 = vpack.c.bf16 %v3486, %v3486
  %v3743 = vpack.c.bf16 %v3487, %v3487
  %v3744 = vpack.c.bf16 %v3488, %v3488
  %v3745 = vpack.c.bf16 %v3489, %v3489
  %v3746 = vpack.c.bf16 %v3490, %v3490
  %v3747 = vpack.c.bf16 %v3491, %v3491
  %v3748 = vpack.c.bf16 %v3492, %v3492
  %v3749 = vpack.c.bf16 %v3493, %v3493
  %v3750 = vpack.c.bf16 %v3494, %v3494
  %v3751 = vpack.c.bf16 %v3495, %v3495
  %v3752 = vpack.c.bf16 %v3496, %v3496
  %v3753 = vpack.c.bf16 %v3497, %v3497
  %v3754 = vpack.c.bf16 %v3498, %v3498
  %v3755 = vpack.c.bf16 %v3499, %v3499
  %v3756 = vpack.c.bf16 %v3500, %v3500
  %v3757 = vpack.c.bf16 %v3501, %v3501
  %v3758 = vpack.c.bf16 %v3502, %v3502
  %v3759 = vpack.c.bf16 %v3503, %v3503
  %v3760 = vpack.c.bf16 %v3504, %v3504
  %v3761 = vpack.c.bf16 %v3505, %v3505
  %v3762 = vpack.c.bf16 %v3506, %v3506
  %v3763 = vpack.c.bf16 %v3507, %v3507
  %v3764 = vpack.c.bf16 %v3508, %v3508
  %v3765 = vpack.c.bf16 %v3509, %v3509
  %v3766 = vpack.c.bf16 %v3510, %v3510
  %v3767 = vpack.c.bf16 %v3511, %v3511
  %v3768 = vpack.c.bf16 %v3512, %v3512
  %v3769 = vpack.c.bf16 %v3513, %v3513
  %v3770 = vpack.c.bf16 %v3514, %v3514
  %v3771 = vpack.c.bf16 %v3515, %v3515
  %v3772 = vpack.c.bf16 %v3516, %v3516
  %v3773 = vpack.c.bf16 %v3517, %v3517
  %v3774 = vpack.c.bf16 %v3518, %v3518
  %v3775 = vpack.c.bf16 %v3519, %v3519
  %v3776 = vpack.c.bf16 %v3520, %v3520
  %v3777 = vpack.c.bf16 %v3521, %v3521
  %v3778 = vpack.c.bf16 %v3522, %v3522
  %v3779 = vpack.c.bf16 %v3523, %v3523
  %v3780 = vpack.c.bf16 %v3524, %v3524
  %v3781 = vpack.c.bf16 %v3525, %v3525
  %v3782 = vpack.c.bf16 %v3526, %v3526
  %v3783 = vpack.c.bf16 %v3527, %v3527
  %v3784 = vpack.c.bf16 %v3528, %v3528
  %v3785 = vpack.c.bf16 %v3529, %v3529
  %v3786 = vpack.c.bf16 %v3530, %v3530
  %v3787 = vpack.c.bf16 %v3531, %v3531
  %v3788 = vpack.c.bf16 %v3532, %v3532
  %v3789 = vpack.c.bf16 %v3533, %v3533
  %v3790 = vpack.c.bf16 %v3534, %v3534
  %v3791 = vpack.c.bf16 %v3535, %v3535
  %v3792 = vpack.c.bf16 %v3536, %v3536
  %v3793 = vpack.c.bf16 %v3537, %v3537
  %v3794 = vpack.c.bf16 %v3538, %v3538
  %v3795 = vpack.c.bf16 %v3539, %v3539
  %v3796 = vpack.c.bf16 %v3540, %v3540
  %v3797 = vpack.c.bf16 %v3541, %v3541
  %v3798 = vpack.c.bf16 %v3542, %v3542
  %v3799 = vpack.c.bf16 %v3543, %v3543
  %v3800 = vpack.c.bf16 %v3544, %v3544
  %v3801 = vpack.c.bf16 %v3545, %v3545
  %v3802 = vpack.c.bf16 %v3546, %v3546
  %v3803 = vpack.c.bf16 %v3547, %v3547
  %v3804 = vpack.c.bf16 %v3548, %v3548
  %v3805 = vpack.c.bf16 %v3549, %v3549
  %v3806 = vpack.c.bf16 %v3550, %v3550
  %v3807 = vpack.c.bf16 %v3551, %v3551
  %v3808 = vpack.c.bf16 %v3552, %v3552
  %v3809 = vpack.c.bf16 %v3553, %v3553
  %v3810 = vpack.c.bf16 %v3554, %v3554
  %v3811 = vpack.c.bf16 %v3555, %v3555
  %v3812 = vpack.c.bf16 %v3556, %v3556
  %v3813 = vpack.c.bf16 %v3557, %v3557
  %v3814 = vpack.c.bf16 %v3558, %v3558
  %v3815 = vpack.c.bf16 %v3559, %v3559
  %v3816 = vpack.c.bf16 %v3560, %v3560
  %v3817 = vpack.c.bf16 %v3561, %v3561
  %v3818 = vpack.c.bf16 %v3562, %v3562
  %v3819 = vpack.c.bf16 %v3563, %v3563
  %v3820 = vpack.c.bf16 %v3564, %v3564
  %v3821 = vpack.c.bf16 %v3565, %v3565
  %v3822 = vpack.c.bf16 %v3566, %v3566
  %v3823 = vpack.c.bf16 %v3567, %v3567
  %v3824 = vpack.c.bf16 %v3568, %v3568
  %v3825 = vpack.c.bf16 %v3569, %v3569
  %v3826 = vpack.c.bf16 %v3570, %v3570
  %v3827 = vpack.c.bf16 %v3571, %v3571
  %v3828 = vpack.c.bf16 %v3572, %v3572
  %v3829 = vpack.c.bf16 %v3573, %v3573
  %v3830 = vpack.c.bf16 %v3574, %v3574
  %v3831 = vpack.c.bf16 %v3575, %v3575
  %v3832 = vpack.c.bf16 %v3576, %v3576
  %v3833 = vpack.c.bf16 %v3577, %v3577
  %v3834 = vpack.c.bf16 %v3578, %v3578
  %v3835 = vpack.c.bf16 %v3579, %v3579
  %v3836 = vpack.c.bf16 %v3580, %v3580
  %v3837 = vpack.c.bf16 %v3581, %v3581
  %v3838 = vpack.c.bf16 %v3582, %v3582
  %v3839 = vpack.c.bf16 %v3583, %v3583
  %v3840 = vpack.c.bf16 %v3584, %v3584
  %v3841 = vpack.c.bf16 %v3585, %v3585
  %v3842 = vpack.c.bf16 %v3586, %v3586
  %v3843 = vpack.c.bf16 %v3587, %v3587
  %v3844 = vpack.c.bf16 %v3588, %v3588
  %v3845 = vpack.c.bf16 %v3589, %v3589
  %v3846 = vpack.c.bf16 %v3590, %v3590
  %v3847 = vpack.c.bf16 %v3591, %v3591
  %v3848 = vpack.c.bf16 %v3592, %v3592
  %v3849 = vpack.c.bf16 %v3593, %v3593
  %v3850 = vpack.c.bf16 %v3594, %v3594
  %v3851 = vpack.c.bf16 %v3595, %v3595
  %v3852 = vpack.c.bf16 %v3596, %v3596
  %v3853 = vpack.c.bf16 %v3597, %v3597
  %v3854 = vpack.c.bf16 %v3598, %v3598
  %v3855 = vpack.c.bf16 %v3599, %v3599
  %v3856 = vpack.c.bf16 %v3600, %v3600
  %v3857 = vpack.c.bf16 %v3601, %v3601
  %v3858 = vpack.c.bf16 %v3602, %v3602
  %v3859 = vpack.c.bf16 %v3603, %v3603
  %v3860 = vpack.c.bf16 %v3604, %v3604
  %v3861 = vpack.c.bf16 %v3605, %v3605
  %v3862 = vpack.c.bf16 %v3606, %v3606
  %v3863 = vpack.c.bf16 %v3607, %v3607
  %v3864 = vpack.c.bf16 %v3608, %v3608
  %v3865 = vpack.c.bf16 %v3609, %v3609
  %v3866 = vpack.c.bf16 %v3610, %v3610
  %v3867 = vpack.c.bf16 %v3611, %v3611
  %v3868 = vpack.c.bf16 %v3612, %v3612
  %v3869 = vpack.c.bf16 %v3613, %v3613
  %v3870 = vpack.c.bf16 %v3614, %v3614
  %v3871 = vpack.c.bf16 %v3615, %v3615
  %v3872 = vpack.c.bf16 %v3616, %v3616
  %v3873 = vpack.c.bf16 %v3617, %v3617
  %v3874 = vpack.c.bf16 %v3618, %v3618
  %v3875 = vpack.c.bf16 %v3619, %v3619
  %v3876 = vpack.c.bf16 %v3620, %v3620
  %v3877 = vpack.c.bf16 %v3621, %v3621
  %v3878 = vpack.c.bf16 %v3622, %v3622
  %v3879 = vpack.c.bf16 %v3623, %v3623
  %v3880 = vpack.c.bf16 %v3624, %v3624
  %v3881 = vpack.c.bf16 %v3625, %v3625
  %v3882 = vpack.c.bf16 %v3626, %v3626
  %v3883 = vpack.c.bf16 %v3627, %v3627
  %v3884 = vpack.c.bf16 %v3628, %v3628
  %v3885 = vpack.c.bf16 %v3629, %v3629
  %v3886 = vpack.c.bf16 %v3630, %v3630
  %v3887 = vpack.c.bf16 %v3631, %v3631
  %v3888 = vpack.c.bf16 %v3632, %v3632
  %v3889 = vpack.c.bf16 %v3633, %v3633
  %v3890 = vpack.c.bf16 %v3634, %v3634
  %v3891 = vpack.c.bf16 %v3635, %v3635
  %v3892 = vpack.c.bf16 %v3636, %v3636
  %v3893 = vpack.c.bf16 %v3637, %v3637
  %v3894 = vpack.c.bf16 %v3638, %v3638
  %v3895 = vpack.c.bf16 %v3639, %v3639
  %v3896 = vpack.c.bf16 %v3640, %v3640
  %v3897 = vpack.c.bf16 %v3641, %v3641
  %v3898 = vpack.c.bf16 %v3642, %v3642
  %v3899 = vpack.c.bf16 %v3643, %v3643
  %v3900 = vpack.c.bf16 %v3644, %v3644
  %v3901 = vpack.c.bf16 %v3645, %v3645
  %v3902 = vpack.c.bf16 %v3646, %v3646
  %v3903 = vpack.c.bf16 %v3647, %v3647
  %v3904 = vpack.c.bf16 %v3648, %v3648
  %v3905 = vpack.c.bf16 %v3649, %v3649
  %v3906 = vpack.c.bf16 %v3650, %v3650
  %v3907 = vpack.c.bf16 %v3651, %v3651
  %v3908 = vpack.c.bf16 %v3652, %v3652
  %v3909 = vpack.c.bf16 %v3653, %v3653
  %v3910 = vpack.c.bf16 %v3654, %v3654
  %v3911 = vpack.c.bf16 %v3655, %v3655
  %v3912 = vpack.c.bf16 %v3656, %v3656
  %v3913 = vpack.c.bf16 %v3657, %v3657
  %v3914 = vpack.c.bf16 %v3658, %v3658
  %v3915 = vpack.c.bf16 %v3659, %v3659
  %v3916 = vpack.c.bf16 %v3660, %v3660
  %v3917 = vpack.c.bf16 %v3661, %v3661
  %v3918 = vpack.c.bf16 %v3662, %v3662
  %v3919 = vpack.c.bf16 %v3663, %v3663
  %v3920 = vpack.c.bf16 %v3664, %v3664
  %v3921 = vpack.c.bf16 %v3665, %v3665
  %v3922 = vpack.c.bf16 %v3666, %v3666
  %v3923 = vpack.c.bf16 %v3667, %v3667
  %v3924 = vpack.c.bf16 %v3668, %v3668
  %v3925 = vpack.c.bf16 %v3669, %v3669
  %v3926 = vpack.c.bf16 %v3670, %v3670
  %v3927 = vpack.c.bf16 %v3671, %v3671
  %v3928 = vpack.c.bf16 %v3672, %v3672
  %v3929 = vpack.c.bf16 %v3673, %v3673
  %v3930 = vpack.c.bf16 %v3674, %v3674
  %v3931 = vpack.c.bf16 %v3675, %v3675
  %v3932 = vpack.c.bf16 %v3676, %v3676
  %v3933 = vpack.c.bf16 %v3677, %v3677
  %v3934 = vpack.c.bf16 %v3678, %v3678
  %v3935 = vpack.c.bf16 %v3679, %v3679
  %v3936 = vpack.c.bf16 %v3680, %v3680
  %v3937 = vpack.c.bf16 %v3681, %v3681
  %v3938 = vpack.c.bf16 %v3682, %v3682
  %v3939 = vpack.c.bf16 %v3683, %v3683
  %v3940 = vpack.c.bf16 %v3684, %v3684
  %v3941 = vpack.c.bf16 %v3685, %v3685
  %v3942 = vpack.c.bf16 %v3686, %v3686
  %s3943 = scalar_lea.vmem %s1, 64
  %v3944 = vld [vmem:[%s3943] sm:$0xff]
  %v3945 = vld [vmem:[%s3943 + $0x8] sm:$0xff]
  %v3946 = vld [vmem:[%s3943 + $0x10] sm:$0xff]
  %v3947 = vld [vmem:[%s3943 + $0x18] sm:$0xff]
  %v3948 = vpack.c.bf16 %v3945, %v3944
  %v3949 = vpack.c.bf16 %v3947, %v3946
  %v4206 = vunpack.c.l.b16 %v3687
  %v4207 = vunpack.c.l.b16 %v3688
  %v4208 = vunpack.c.l.b16 %v3689
  %v4209 = vunpack.c.l.b16 %v3690
  %v4210 = vunpack.c.l.b16 %v3691
  %v4211 = vunpack.c.l.b16 %v3692
  %v4212 = vunpack.c.l.b16 %v3693
  %v4213 = vunpack.c.l.b16 %v3694
  %v4214 = vunpack.c.l.b16 %v3695
  %v4215 = vunpack.c.l.b16 %v3696
  %v4216 = vunpack.c.l.b16 %v3697
  %v4217 = vunpack.c.l.b16 %v3698
  %v4218 = vunpack.c.l.b16 %v3699
  %v4219 = vunpack.c.l.b16 %v3700
  %v4220 = vunpack.c.l.b16 %v3701
  %v4221 = vunpack.c.l.b16 %v3702
  %v4222 = vunpack.c.l.b16 %v3703
  %v4223 = vunpack.c.l.b16 %v3704
  %v4224 = vunpack.c.l.b16 %v3705
  %v4225 = vunpack.c.l.b16 %v3706
  %v4226 = vunpack.c.l.b16 %v3707
  %v4227 = vunpack.c.l.b16 %v3708
  %v4228 = vunpack.c.l.b16 %v3709
  %v4229 = vunpack.c.l.b16 %v3710
  %v4230 = vunpack.c.l.b16 %v3711
  %v4231 = vunpack.c.l.b16 %v3712
  %v4232 = vunpack.c.l.b16 %v3713
  %v4233 = vunpack.c.l.b16 %v3714
  %v4234 = vunpack.c.l.b16 %v3715
  %v4235 = vunpack.c.l.b16 %v3716
  %v4236 = vunpack.c.l.b16 %v3717
  %v4237 = vunpack.c.l.b16 %v3718
  %v4238 = vunpack.c.l.b16 %v3719
  %v4239 = vunpack.c.l.b16 %v3720
  %v4240 = vunpack.c.l.b16 %v3721
  %v4241 = vunpack.c.l.b16 %v3722
  %v4242 = vunpack.c.l.b16 %v3723
  %v4243 = vunpack.c.l.b16 %v3724
  %v4244 = vunpack.c.l.b16 %v3725
  %v4245 = vunpack.c.l.b16 %v3726
  %v4246 = vunpack.c.l.b16 %v3727
  %v4247 = vunpack.c.l.b16 %v3728
  %v4248 = vunpack.c.l.b16 %v3729
  %v4249 = vunpack.c.l.b16 %v3730
  %v4250 = vunpack.c.l.b16 %v3731
  %v4251 = vunpack.c.l.b16 %v3732
  %v4252 = vunpack.c.l.b16 %v3733
  %v4253 = vunpack.c.l.b16 %v3734
  %v4254 = vunpack.c.l.b16 %v3735
  %v4255 = vunpack.c.l.b16 %v3736
  %v4256 = vunpack.c.l.b16 %v3737
  %v4257 = vunpack.c.l.b16 %v3738
  %v4258 = vunpack.c.l.b16 %v3739
  %v4259 = vunpack.c.l.b16 %v3740
  %v4260 = vunpack.c.l.b16 %v3741
  %v4261 = vunpack.c.l.b16 %v3742
  %v4262 = vunpack.c.l.b16 %v3743
  %v4263 = vunpack.c.l.b16 %v3744
  %v4264 = vunpack.c.l.b16 %v3745
  %v4265 = vunpack.c.l.b16 %v3746
  %v4266 = vunpack.c.l.b16 %v3747
  %v4267 = vunpack.c.l.b16 %v3748
  %v4268 = vunpack.c.l.b16 %v3749
  %v4269 = vunpack.c.l.b16 %v3750
  %v4270 = vunpack.c.l.b16 %v3751
  %v4271 = vunpack.c.l.b16 %v3752
  %v4272 = vunpack.c.l.b16 %v3753
  %v4273 = vunpack.c.l.b16 %v3754
  %v4274 = vunpack.c.l.b16 %v3755
  %v4275 = vunpack.c.l.b16 %v3756
  %v4276 = vunpack.c.l.b16 %v3757
  %v4277 = vunpack.c.l.b16 %v3758
  %v4278 = vunpack.c.l.b16 %v3759
  %v4279 = vunpack.c.l.b16 %v3760
  %v4280 = vunpack.c.l.b16 %v3761
  %v4281 = vunpack.c.l.b16 %v3762
  %v4282 = vunpack.c.l.b16 %v3763
  %v4283 = vunpack.c.l.b16 %v3764
  %v4284 = vunpack.c.l.b16 %v3765
  %v4285 = vunpack.c.l.b16 %v3766
  %v4286 = vunpack.c.l.b16 %v3767
  %v4287 = vunpack.c.l.b16 %v3768
  %v4288 = vunpack.c.l.b16 %v3769
  %v4289 = vunpack.c.l.b16 %v3770
  %v4290 = vunpack.c.l.b16 %v3771
  %v4291 = vunpack.c.l.b16 %v3772
  %v4292 = vunpack.c.l.b16 %v3773
  %v4293 = vunpack.c.l.b16 %v3774
  %v4294 = vunpack.c.l.b16 %v3775
  %v4295 = vunpack.c.l.b16 %v3776
  %v4296 = vunpack.c.l.b16 %v3777
  %v4297 = vunpack.c.l.b16 %v3778
  %v4298 = vunpack.c.l.b16 %v3779
  %v4299 = vunpack.c.l.b16 %v3780
  %v4300 = vunpack.c.l.b16 %v3781
  %v4301 = vunpack.c.l.b16 %v3782
  %v4302 = vunpack.c.l.b16 %v3783
  %v4303 = vunpack.c.l.b16 %v3784
  %v4304 = vunpack.c.l.b16 %v3785
  %v4305 = vunpack.c.l.b16 %v3786
  %v4306 = vunpack.c.l.b16 %v3787
  %v4307 = vunpack.c.l.b16 %v3788
  %v4308 = vunpack.c.l.b16 %v3789
  %v4309 = vunpack.c.l.b16 %v3790
  %v4310 = vunpack.c.l.b16 %v3791
  %v4311 = vunpack.c.l.b16 %v3792
  %v4312 = vunpack.c.l.b16 %v3793
  %v4313 = vunpack.c.l.b16 %v3794
  %v4314 = vunpack.c.l.b16 %v3795
  %v4315 = vunpack.c.l.b16 %v3796
  %v4316 = vunpack.c.l.b16 %v3797
  %v4317 = vunpack.c.l.b16 %v3798
  %v4318 = vunpack.c.l.b16 %v3799
  %v4319 = vunpack.c.l.b16 %v3800
  %v4320 = vunpack.c.l.b16 %v3801
  %v4321 = vunpack.c.l.b16 %v3802
  %v4322 = vunpack.c.l.b16 %v3803
  %v4323 = vunpack.c.l.b16 %v3804
  %v4324 = vunpack.c.l.b16 %v3805
  %v4325 = vunpack.c.l.b16 %v3806
  %v4326 = vunpack.c.l.b16 %v3807
  %v4327 = vunpack.c.l.b16 %v3808
  %v4328 = vunpack.c.l.b16 %v3809
  %v4329 = vunpack.c.l.b16 %v3810
  %v4330 = vunpack.c.l.b16 %v3811
  %v4331 = vunpack.c.l.b16 %v3812
  %v4332 = vunpack.c.l.b16 %v3813
  %v4333 = vunpack.c.l.b16 %v3814
  %v4334 = vunpack.c.l.b16 %v3815
  %v4335 = vunpack.c.l.b16 %v3816
  %v4336 = vunpack.c.l.b16 %v3817
  %v4337 = vunpack.c.l.b16 %v3818
  %v4338 = vunpack.c.l.b16 %v3819
  %v4339 = vunpack.c.l.b16 %v3820
  %v4340 = vunpack.c.l.b16 %v3821
  %v4341 = vunpack.c.l.b16 %v3822
  %v4342 = vunpack.c.l.b16 %v3823
  %v4343 = vunpack.c.l.b16 %v3824
  %v4344 = vunpack.c.l.b16 %v3825
  %v4345 = vunpack.c.l.b16 %v3826
  %v4346 = vunpack.c.l.b16 %v3827
  %v4347 = vunpack.c.l.b16 %v3828
  %v4348 = vunpack.c.l.b16 %v3829
  %v4349 = vunpack.c.l.b16 %v3830
  %v4350 = vunpack.c.l.b16 %v3831
  %v4351 = vunpack.c.l.b16 %v3832
  %v4352 = vunpack.c.l.b16 %v3833
  %v4353 = vunpack.c.l.b16 %v3834
  %v4354 = vunpack.c.l.b16 %v3835
  %v4355 = vunpack.c.l.b16 %v3836
  %v4356 = vunpack.c.l.b16 %v3837
  %v4357 = vunpack.c.l.b16 %v3838
  %v4358 = vunpack.c.l.b16 %v3839
  %v4359 = vunpack.c.l.b16 %v3840
  %v4360 = vunpack.c.l.b16 %v3841
  %v4361 = vunpack.c.l.b16 %v3842
  %v4362 = vunpack.c.l.b16 %v3843
  %v4363 = vunpack.c.l.b16 %v3844
  %v4364 = vunpack.c.l.b16 %v3845
  %v4365 = vunpack.c.l.b16 %v3846
  %v4366 = vunpack.c.l.b16 %v3847
  %v4367 = vunpack.c.l.b16 %v3848
  %v4368 = vunpack.c.l.b16 %v3849
  %v4369 = vunpack.c.l.b16 %v3850
  %v4370 = vunpack.c.l.b16 %v3851
  %v4371 = vunpack.c.l.b16 %v3852
  %v4372 = vunpack.c.l.b16 %v3853
  %v4373 = vunpack.c.l.b16 %v3854
  %v4374 = vunpack.c.l.b16 %v3855
  %v4375 = vunpack.c.l.b16 %v3856
  %v4376 = vunpack.c.l.b16 %v3857
  %v4377 = vunpack.c.l.b16 %v3858
  %v4378 = vunpack.c.l.b16 %v3859
  %v4379 = vunpack.c.l.b16 %v3860
  %v4380 = vunpack.c.l.b16 %v3861
  %v4381 = vunpack.c.l.b16 %v3862
  %v4382 = vunpack.c.l.b16 %v3863
  %v4383 = vunpack.c.l.b16 %v3864
  %v4384 = vunpack.c.l.b16 %v3865
  %v4385 = vunpack.c.l.b16 %v3866
  %v4386 = vunpack.c.l.b16 %v3867
  %v4387 = vunpack.c.l.b16 %v3868
  %v4388 = vunpack.c.l.b16 %v3869
  %v4389 = vunpack.c.l.b16 %v3870
  %v4390 = vunpack.c.l.b16 %v3871
  %v4391 = vunpack.c.l.b16 %v3872
  %v4392 = vunpack.c.l.b16 %v3873
  %v4393 = vunpack.c.l.b16 %v3874
  %v4394 = vunpack.c.l.b16 %v3875
  %v4395 = vunpack.c.l.b16 %v3876
  %v4396 = vunpack.c.l.b16 %v3877
  %v4397 = vunpack.c.l.b16 %v3878
  %v4398 = vunpack.c.l.b16 %v3879
  %v4399 = vunpack.c.l.b16 %v3880
  %v4400 = vunpack.c.l.b16 %v3881
  %v4401 = vunpack.c.l.b16 %v3882
  %v4402 = vunpack.c.l.b16 %v3883
  %v4403 = vunpack.c.l.b16 %v3884
  %v4404 = vunpack.c.l.b16 %v3885
  %v4405 = vunpack.c.l.b16 %v3886
  %v4406 = vunpack.c.l.b16 %v3887
  %v4407 = vunpack.c.l.b16 %v3888
  %v4408 = vunpack.c.l.b16 %v3889
  %v4409 = vunpack.c.l.b16 %v3890
  %v4410 = vunpack.c.l.b16 %v3891
  %v4411 = vunpack.c.l.b16 %v3892
  %v4412 = vunpack.c.l.b16 %v3893
  %v4413 = vunpack.c.l.b16 %v3894
  %v4414 = vunpack.c.l.b16 %v3895
  %v4415 = vunpack.c.l.b16 %v3896
  %v4416 = vunpack.c.l.b16 %v3897
  %v4417 = vunpack.c.l.b16 %v3898
  %v4418 = vunpack.c.l.b16 %v3899
  %v4419 = vunpack.c.l.b16 %v3900
  %v4420 = vunpack.c.l.b16 %v3901
  %v4421 = vunpack.c.l.b16 %v3902
  %v4422 = vunpack.c.l.b16 %v3903
  %v4423 = vunpack.c.l.b16 %v3904
  %v4424 = vunpack.c.l.b16 %v3905
  %v4425 = vunpack.c.l.b16 %v3906
  %v4426 = vunpack.c.l.b16 %v3907
  %v4427 = vunpack.c.l.b16 %v3908
  %v4428 = vunpack.c.l.b16 %v3909
  %v4429 = vunpack.c.l.b16 %v3910
  %v4430 = vunpack.c.l.b16 %v3911
  %v4431 = vunpack.c.l.b16 %v3912
  %v4432 = vunpack.c.l.b16 %v3913
  %v4433 = vunpack.c.l.b16 %v3914
  %v4434 = vunpack.c.l.b16 %v3915
  %v4435 = vunpack.c.l.b16 %v3916
  %v4436 = vunpack.c.l.b16 %v3917
  %v4437 = vunpack.c.l.b16 %v3918
  %v4438 = vunpack.c.l.b16 %v3919
  %v4439 = vunpack.c.l.b16 %v3920
  %v4440 = vunpack.c.l.b16 %v3921
  %v4441 = vunpack.c.l.b16 %v3922
  %v4442 = vunpack.c.l.b16 %v3923
  %v4443 = vunpack.c.l.b16 %v3924
  %v4444 = vunpack.c.l.b16 %v3925
  %v4445 = vunpack.c.l.b16 %v3926
  %v4446 = vunpack.c.l.b16 %v3927
  %v4447 = vunpack.c.l.b16 %v3928
  %v4448 = vunpack.c.l.b16 %v3929
  %v4449 = vunpack.c.l.b16 %v3930
  %v4450 = vunpack.c.l.b16 %v3931
  %v4451 = vunpack.c.l.b16 %v3932
  %v4452 = vunpack.c.l.b16 %v3933
  %v4453 = vunpack.c.l.b16 %v3934
  %v4454 = vunpack.c.l.b16 %v3935
  %v4455 = vunpack.c.l.b16 %v3936
  %v4456 = vunpack.c.l.b16 %v3937
  %v4457 = vunpack.c.l.b16 %v3938
  %v4458 = vunpack.c.l.b16 %v3939
  %v4459 = vunpack.c.l.b16 %v3940
  %v4460 = vunpack.c.l.b16 %v3941
  %v4461 = vunpack.c.l.b16 %v3942
  %v4462 = vrot.slane %v4207, 7
  %v4463 = vsel %vm1047, %v4462, %v4206
  %v4464 = vrot.slane %v4208, 6
  %v4465 = vsel %vm1050, %v4464, %v4463
  %v4466 = vrot.slane %v4209, 5
  %v4467 = vsel %vm1053, %v4466, %v4465
  %v4468 = vrot.slane %v4210, 4
  %v4469 = vsel %vm1056, %v4468, %v4467
  %v4470 = vrot.slane %v4211, 3
  %v4471 = vsel %vm1059, %v4470, %v4469
  %v4472 = vrot.slane %v4212, 2
  %v4473 = vsel %vm1062, %v4472, %v4471
  %v4474 = vrot.slane %v4213, 1
  %v4475 = vsel %vm1065, %v4474, %v4473
  %v4476 = vrot.slane %v4215, 7
  %v4477 = vsel %vm1047, %v4476, %v4214
  %v4478 = vrot.slane %v4216, 6
  %v4479 = vsel %vm1050, %v4478, %v4477
  %v4480 = vrot.slane %v4217, 5
  %v4481 = vsel %vm1053, %v4480, %v4479
  %v4482 = vrot.slane %v4218, 4
  %v4483 = vsel %vm1056, %v4482, %v4481
  %v4484 = vrot.slane %v4219, 3
  %v4485 = vsel %vm1059, %v4484, %v4483
  %v4486 = vrot.slane %v4220, 2
  %v4487 = vsel %vm1062, %v4486, %v4485
  %v4488 = vrot.slane %v4221, 1
  %v4489 = vsel %vm1065, %v4488, %v4487
  %v4490 = vrot.slane %v4223, 7
  %v4491 = vsel %vm1047, %v4490, %v4222
  %v4492 = vrot.slane %v4224, 6
  %v4493 = vsel %vm1050, %v4492, %v4491
  %v4494 = vrot.slane %v4225, 5
  %v4495 = vsel %vm1053, %v4494, %v4493
  %v4496 = vrot.slane %v4226, 4
  %v4497 = vsel %vm1056, %v4496, %v4495
  %v4498 = vrot.slane %v4227, 3
  %v4499 = vsel %vm1059, %v4498, %v4497
  %v4500 = vrot.slane %v4228, 2
  %v4501 = vsel %vm1062, %v4500, %v4499
  %v4502 = vrot.slane %v4229, 1
  %v4503 = vsel %vm1065, %v4502, %v4501
  %v4504 = vrot.slane %v4231, 7
  %v4505 = vsel %vm1047, %v4504, %v4230
  %v4506 = vrot.slane %v4232, 6
  %v4507 = vsel %vm1050, %v4506, %v4505
  %v4508 = vrot.slane %v4233, 5
  %v4509 = vsel %vm1053, %v4508, %v4507
  %v4510 = vrot.slane %v4234, 4
  %v4511 = vsel %vm1056, %v4510, %v4509
  %v4512 = vrot.slane %v4235, 3
  %v4513 = vsel %vm1059, %v4512, %v4511
  %v4514 = vrot.slane %v4236, 2
  %v4515 = vsel %vm1062, %v4514, %v4513
  %v4516 = vrot.slane %v4237, 1
  %v4517 = vsel %vm1065, %v4516, %v4515
  %v4518 = vrot.slane %v4239, 7
  %v4519 = vsel %vm1047, %v4518, %v4238
  %v4520 = vrot.slane %v4240, 6
  %v4521 = vsel %vm1050, %v4520, %v4519
  %v4522 = vrot.slane %v4241, 5
  %v4523 = vsel %vm1053, %v4522, %v4521
  %v4524 = vrot.slane %v4242, 4
  %v4525 = vsel %vm1056, %v4524, %v4523
  %v4526 = vrot.slane %v4243, 3
  %v4527 = vsel %vm1059, %v4526, %v4525
  %v4528 = vrot.slane %v4244, 2
  %v4529 = vsel %vm1062, %v4528, %v4527
  %v4530 = vrot.slane %v4245, 1
  %v4531 = vsel %vm1065, %v4530, %v4529
  %v4532 = vrot.slane %v4247, 7
  %v4533 = vsel %vm1047, %v4532, %v4246
  %v4534 = vrot.slane %v4248, 6
  %v4535 = vsel %vm1050, %v4534, %v4533
  %v4536 = vrot.slane %v4249, 5
  %v4537 = vsel %vm1053, %v4536, %v4535
  %v4538 = vrot.slane %v4250, 4
  %v4539 = vsel %vm1056, %v4538, %v4537
  %v4540 = vrot.slane %v4251, 3
  %v4541 = vsel %vm1059, %v4540, %v4539
  %v4542 = vrot.slane %v4252, 2
  %v4543 = vsel %vm1062, %v4542, %v4541
  %v4544 = vrot.slane %v4253, 1
  %v4545 = vsel %vm1065, %v4544, %v4543
  %v4546 = vrot.slane %v4255, 7
  %v4547 = vsel %vm1047, %v4546, %v4254
  %v4548 = vrot.slane %v4256, 6
  %v4549 = vsel %vm1050, %v4548, %v4547
  %v4550 = vrot.slane %v4257, 5
  %v4551 = vsel %vm1053, %v4550, %v4549
  %v4552 = vrot.slane %v4258, 4
  %v4553 = vsel %vm1056, %v4552, %v4551
  %v4554 = vrot.slane %v4259, 3
  %v4555 = vsel %vm1059, %v4554, %v4553
  %v4556 = vrot.slane %v4260, 2
  %v4557 = vsel %vm1062, %v4556, %v4555
  %v4558 = vrot.slane %v4261, 1
  %v4559 = vsel %vm1065, %v4558, %v4557
  %v4560 = vrot.slane %v4263, 7
  %v4561 = vsel %vm1047, %v4560, %v4262
  %v4562 = vrot.slane %v4264, 6
  %v4563 = vsel %vm1050, %v4562, %v4561
  %v4564 = vrot.slane %v4265, 5
  %v4565 = vsel %vm1053, %v4564, %v4563
  %v4566 = vrot.slane %v4266, 4
  %v4567 = vsel %vm1056, %v4566, %v4565
  %v4568 = vrot.slane %v4267, 3
  %v4569 = vsel %vm1059, %v4568, %v4567
  %v4570 = vrot.slane %v4268, 2
  %v4571 = vsel %vm1062, %v4570, %v4569
  %v4572 = vrot.slane %v4269, 1
  %v4573 = vsel %vm1065, %v4572, %v4571
  %v4574 = vrot.slane %v4271, 7
  %v4575 = vsel %vm1047, %v4574, %v4270
  %v4576 = vrot.slane %v4272, 6
  %v4577 = vsel %vm1050, %v4576, %v4575
  %v4578 = vrot.slane %v4273, 5
  %v4579 = vsel %vm1053, %v4578, %v4577
  %v4580 = vrot.slane %v4274, 4
  %v4581 = vsel %vm1056, %v4580, %v4579
  %v4582 = vrot.slane %v4275, 3
  %v4583 = vsel %vm1059, %v4582, %v4581
  %v4584 = vrot.slane %v4276, 2
  %v4585 = vsel %vm1062, %v4584, %v4583
  %v4586 = vrot.slane %v4277, 1
  %v4587 = vsel %vm1065, %v4586, %v4585
  %v4588 = vrot.slane %v4279, 7
  %v4589 = vsel %vm1047, %v4588, %v4278
  %v4590 = vrot.slane %v4280, 6
  %v4591 = vsel %vm1050, %v4590, %v4589
  %v4592 = vrot.slane %v4281, 5
  %v4593 = vsel %vm1053, %v4592, %v4591
  %v4594 = vrot.slane %v4282, 4
  %v4595 = vsel %vm1056, %v4594, %v4593
  %v4596 = vrot.slane %v4283, 3
  %v4597 = vsel %vm1059, %v4596, %v4595
  %v4598 = vrot.slane %v4284, 2
  %v4599 = vsel %vm1062, %v4598, %v4597
  %v4600 = vrot.slane %v4285, 1
  %v4601 = vsel %vm1065, %v4600, %v4599
  %v4602 = vrot.slane %v4287, 7
  %v4603 = vsel %vm1047, %v4602, %v4286
  %v4604 = vrot.slane %v4288, 6
  %v4605 = vsel %vm1050, %v4604, %v4603
  %v4606 = vrot.slane %v4289, 5
  %v4607 = vsel %vm1053, %v4606, %v4605
  %v4608 = vrot.slane %v4290, 4
  %v4609 = vsel %vm1056, %v4608, %v4607
  %v4610 = vrot.slane %v4291, 3
  %v4611 = vsel %vm1059, %v4610, %v4609
  %v4612 = vrot.slane %v4292, 2
  %v4613 = vsel %vm1062, %v4612, %v4611
  %v4614 = vrot.slane %v4293, 1
  %v4615 = vsel %vm1065, %v4614, %v4613
  %v4616 = vrot.slane %v4295, 7
  %v4617 = vsel %vm1047, %v4616, %v4294
  %v4618 = vrot.slane %v4296, 6
  %v4619 = vsel %vm1050, %v4618, %v4617
  %v4620 = vrot.slane %v4297, 5
  %v4621 = vsel %vm1053, %v4620, %v4619
  %v4622 = vrot.slane %v4298, 4
  %v4623 = vsel %vm1056, %v4622, %v4621
  %v4624 = vrot.slane %v4299, 3
  %v4625 = vsel %vm1059, %v4624, %v4623
  %v4626 = vrot.slane %v4300, 2
  %v4627 = vsel %vm1062, %v4626, %v4625
  %v4628 = vrot.slane %v4301, 1
  %v4629 = vsel %vm1065, %v4628, %v4627
  %v4630 = vrot.slane %v4303, 7
  %v4631 = vsel %vm1047, %v4630, %v4302
  %v4632 = vrot.slane %v4304, 6
  %v4633 = vsel %vm1050, %v4632, %v4631
  %v4634 = vrot.slane %v4305, 5
  %v4635 = vsel %vm1053, %v4634, %v4633
  %v4636 = vrot.slane %v4306, 4
  %v4637 = vsel %vm1056, %v4636, %v4635
  %v4638 = vrot.slane %v4307, 3
  %v4639 = vsel %vm1059, %v4638, %v4637
  %v4640 = vrot.slane %v4308, 2
  %v4641 = vsel %vm1062, %v4640, %v4639
  %v4642 = vrot.slane %v4309, 1
  %v4643 = vsel %vm1065, %v4642, %v4641
  %v4644 = vrot.slane %v4311, 7
  %v4645 = vsel %vm1047, %v4644, %v4310
  %v4646 = vrot.slane %v4312, 6
  %v4647 = vsel %vm1050, %v4646, %v4645
  %v4648 = vrot.slane %v4313, 5
  %v4649 = vsel %vm1053, %v4648, %v4647
  %v4650 = vrot.slane %v4314, 4
  %v4651 = vsel %vm1056, %v4650, %v4649
  %v4652 = vrot.slane %v4315, 3
  %v4653 = vsel %vm1059, %v4652, %v4651
  %v4654 = vrot.slane %v4316, 2
  %v4655 = vsel %vm1062, %v4654, %v4653
  %v4656 = vrot.slane %v4317, 1
  %v4657 = vsel %vm1065, %v4656, %v4655
  %v4658 = vrot.slane %v4319, 7
  %v4659 = vsel %vm1047, %v4658, %v4318
  %v4660 = vrot.slane %v4320, 6
  %v4661 = vsel %vm1050, %v4660, %v4659
  %v4662 = vrot.slane %v4321, 5
  %v4663 = vsel %vm1053, %v4662, %v4661
  %v4664 = vrot.slane %v4322, 4
  %v4665 = vsel %vm1056, %v4664, %v4663
  %v4666 = vrot.slane %v4323, 3
  %v4667 = vsel %vm1059, %v4666, %v4665
  %v4668 = vrot.slane %v4324, 2
  %v4669 = vsel %vm1062, %v4668, %v4667
  %v4670 = vrot.slane %v4325, 1
  %v4671 = vsel %vm1065, %v4670, %v4669
  %v4672 = vrot.slane %v4327, 7
  %v4673 = vsel %vm1047, %v4672, %v4326
  %v4674 = vrot.slane %v4328, 6
  %v4675 = vsel %vm1050, %v4674, %v4673
  %v4676 = vrot.slane %v4329, 5
  %v4677 = vsel %vm1053, %v4676, %v4675
  %v4678 = vrot.slane %v4330, 4
  %v4679 = vsel %vm1056, %v4678, %v4677
  %v4680 = vrot.slane %v4331, 3
  %v4681 = vsel %vm1059, %v4680, %v4679
  %v4682 = vrot.slane %v4332, 2
  %v4683 = vsel %vm1062, %v4682, %v4681
  %v4684 = vrot.slane %v4333, 1
  %v4685 = vsel %vm1065, %v4684, %v4683
  %v4686 = vrot.slane %v4335, 7
  %v4687 = vsel %vm1047, %v4686, %v4334
  %v4688 = vrot.slane %v4336, 6
  %v4689 = vsel %vm1050, %v4688, %v4687
  %v4690 = vrot.slane %v4337, 5
  %v4691 = vsel %vm1053, %v4690, %v4689
  %v4692 = vrot.slane %v4338, 4
  %v4693 = vsel %vm1056, %v4692, %v4691
  %v4694 = vrot.slane %v4339, 3
  %v4695 = vsel %vm1059, %v4694, %v4693
  %v4696 = vrot.slane %v4340, 2
  %v4697 = vsel %vm1062, %v4696, %v4695
  %v4698 = vrot.slane %v4341, 1
  %v4699 = vsel %vm1065, %v4698, %v4697
  %v4700 = vrot.slane %v4343, 7
  %v4701 = vsel %vm1047, %v4700, %v4342
  %v4702 = vrot.slane %v4344, 6
  %v4703 = vsel %vm1050, %v4702, %v4701
  %v4704 = vrot.slane %v4345, 5
  %v4705 = vsel %vm1053, %v4704, %v4703
  %v4706 = vrot.slane %v4346, 4
  %v4707 = vsel %vm1056, %v4706, %v4705
  %v4708 = vrot.slane %v4347, 3
  %v4709 = vsel %vm1059, %v4708, %v4707
  %v4710 = vrot.slane %v4348, 2
  %v4711 = vsel %vm1062, %v4710, %v4709
  %v4712 = vrot.slane %v4349, 1
  %v4713 = vsel %vm1065, %v4712, %v4711
  %v4714 = vrot.slane %v4351, 7
  %v4715 = vsel %vm1047, %v4714, %v4350
  %v4716 = vrot.slane %v4352, 6
  %v4717 = vsel %vm1050, %v4716, %v4715
  %v4718 = vrot.slane %v4353, 5
  %v4719 = vsel %vm1053, %v4718, %v4717
  %v4720 = vrot.slane %v4354, 4
  %v4721 = vsel %vm1056, %v4720, %v4719
  %v4722 = vrot.slane %v4355, 3
  %v4723 = vsel %vm1059, %v4722, %v4721
  %v4724 = vrot.slane %v4356, 2
  %v4725 = vsel %vm1062, %v4724, %v4723
  %v4726 = vrot.slane %v4357, 1
  %v4727 = vsel %vm1065, %v4726, %v4725
  %v4728 = vrot.slane %v4359, 7
  %v4729 = vsel %vm1047, %v4728, %v4358
  %v4730 = vrot.slane %v4360, 6
  %v4731 = vsel %vm1050, %v4730, %v4729
  %v4732 = vrot.slane %v4361, 5
  %v4733 = vsel %vm1053, %v4732, %v4731
  %v4734 = vrot.slane %v4362, 4
  %v4735 = vsel %vm1056, %v4734, %v4733
  %v4736 = vrot.slane %v4363, 3
  %v4737 = vsel %vm1059, %v4736, %v4735
  %v4738 = vrot.slane %v4364, 2
  %v4739 = vsel %vm1062, %v4738, %v4737
  %v4740 = vrot.slane %v4365, 1
  %v4741 = vsel %vm1065, %v4740, %v4739
  %v4742 = vrot.slane %v4367, 7
  %v4743 = vsel %vm1047, %v4742, %v4366
  %v4744 = vrot.slane %v4368, 6
  %v4745 = vsel %vm1050, %v4744, %v4743
  %v4746 = vrot.slane %v4369, 5
  %v4747 = vsel %vm1053, %v4746, %v4745
  %v4748 = vrot.slane %v4370, 4
  %v4749 = vsel %vm1056, %v4748, %v4747
  %v4750 = vrot.slane %v4371, 3
  %v4751 = vsel %vm1059, %v4750, %v4749
  %v4752 = vrot.slane %v4372, 2
  %v4753 = vsel %vm1062, %v4752, %v4751
  %v4754 = vrot.slane %v4373, 1
  %v4755 = vsel %vm1065, %v4754, %v4753
  %v4756 = vrot.slane %v4375, 7
  %v4757 = vsel %vm1047, %v4756, %v4374
  %v4758 = vrot.slane %v4376, 6
  %v4759 = vsel %vm1050, %v4758, %v4757
  %v4760 = vrot.slane %v4377, 5
  %v4761 = vsel %vm1053, %v4760, %v4759
  %v4762 = vrot.slane %v4378, 4
  %v4763 = vsel %vm1056, %v4762, %v4761
  %v4764 = vrot.slane %v4379, 3
  %v4765 = vsel %vm1059, %v4764, %v4763
  %v4766 = vrot.slane %v4380, 2
  %v4767 = vsel %vm1062, %v4766, %v4765
  %v4768 = vrot.slane %v4381, 1
  %v4769 = vsel %vm1065, %v4768, %v4767
  %v4770 = vrot.slane %v4383, 7
  %v4771 = vsel %vm1047, %v4770, %v4382
  %v4772 = vrot.slane %v4384, 6
  %v4773 = vsel %vm1050, %v4772, %v4771
  %v4774 = vrot.slane %v4385, 5
  %v4775 = vsel %vm1053, %v4774, %v4773
  %v4776 = vrot.slane %v4386, 4
  %v4777 = vsel %vm1056, %v4776, %v4775
  %v4778 = vrot.slane %v4387, 3
  %v4779 = vsel %vm1059, %v4778, %v4777
  %v4780 = vrot.slane %v4388, 2
  %v4781 = vsel %vm1062, %v4780, %v4779
  %v4782 = vrot.slane %v4389, 1
  %v4783 = vsel %vm1065, %v4782, %v4781
  %v4784 = vrot.slane %v4391, 7
  %v4785 = vsel %vm1047, %v4784, %v4390
  %v4786 = vrot.slane %v4392, 6
  %v4787 = vsel %vm1050, %v4786, %v4785
  %v4788 = vrot.slane %v4393, 5
  %v4789 = vsel %vm1053, %v4788, %v4787
  %v4790 = vrot.slane %v4394, 4
  %v4791 = vsel %vm1056, %v4790, %v4789
  %v4792 = vrot.slane %v4395, 3
  %v4793 = vsel %vm1059, %v4792, %v4791
  %v4794 = vrot.slane %v4396, 2
  %v4795 = vsel %vm1062, %v4794, %v4793
  %v4796 = vrot.slane %v4397, 1
  %v4797 = vsel %vm1065, %v4796, %v4795
  %v4798 = vrot.slane %v4399, 7
  %v4799 = vsel %vm1047, %v4798, %v4398
  %v4800 = vrot.slane %v4400, 6
  %v4801 = vsel %vm1050, %v4800, %v4799
  %v4802 = vrot.slane %v4401, 5
  %v4803 = vsel %vm1053, %v4802, %v4801
  %v4804 = vrot.slane %v4402, 4
  %v4805 = vsel %vm1056, %v4804, %v4803
  %v4806 = vrot.slane %v4403, 3
  %v4807 = vsel %vm1059, %v4806, %v4805
  %v4808 = vrot.slane %v4404, 2
  %v4809 = vsel %vm1062, %v4808, %v4807
  %v4810 = vrot.slane %v4405, 1
  %v4811 = vsel %vm1065, %v4810, %v4809
  %v4812 = vrot.slane %v4407, 7
  %v4813 = vsel %vm1047, %v4812, %v4406
  %v4814 = vrot.slane %v4408, 6
  %v4815 = vsel %vm1050, %v4814, %v4813
  %v4816 = vrot.slane %v4409, 5
  %v4817 = vsel %vm1053, %v4816, %v4815
  %v4818 = vrot.slane %v4410, 4
  %v4819 = vsel %vm1056, %v4818, %v4817
  %v4820 = vrot.slane %v4411, 3
  %v4821 = vsel %vm1059, %v4820, %v4819
  %v4822 = vrot.slane %v4412, 2
  %v4823 = vsel %vm1062, %v4822, %v4821
  %v4824 = vrot.slane %v4413, 1
  %v4825 = vsel %vm1065, %v4824, %v4823
  %v4826 = vrot.slane %v4415, 7
  %v4827 = vsel %vm1047, %v4826, %v4414
  %v4828 = vrot.slane %v4416, 6
  %v4829 = vsel %vm1050, %v4828, %v4827
  %v4830 = vrot.slane %v4417, 5
  %v4831 = vsel %vm1053, %v4830, %v4829
  %v4832 = vrot.slane %v4418, 4
  %v4833 = vsel %vm1056, %v4832, %v4831
  %v4834 = vrot.slane %v4419, 3
  %v4835 = vsel %vm1059, %v4834, %v4833
  %v4836 = vrot.slane %v4420, 2
  %v4837 = vsel %vm1062, %v4836, %v4835
  %v4838 = vrot.slane %v4421, 1
  %v4839 = vsel %vm1065, %v4838, %v4837
  %v4840 = vrot.slane %v4423, 7
  %v4841 = vsel %vm1047, %v4840, %v4422
  %v4842 = vrot.slane %v4424, 6
  %v4843 = vsel %vm1050, %v4842, %v4841
  %v4844 = vrot.slane %v4425, 5
  %v4845 = vsel %vm1053, %v4844, %v4843
  %v4846 = vrot.slane %v4426, 4
  %v4847 = vsel %vm1056, %v4846, %v4845
  %v4848 = vrot.slane %v4427, 3
  %v4849 = vsel %vm1059, %v4848, %v4847
  %v4850 = vrot.slane %v4428, 2
  %v4851 = vsel %vm1062, %v4850, %v4849
  %v4852 = vrot.slane %v4429, 1
  %v4853 = vsel %vm1065, %v4852, %v4851
  %v4854 = vrot.slane %v4431, 7
  %v4855 = vsel %vm1047, %v4854, %v4430
  %v4856 = vrot.slane %v4432, 6
  %v4857 = vsel %vm1050, %v4856, %v4855
  %v4858 = vrot.slane %v4433, 5
  %v4859 = vsel %vm1053, %v4858, %v4857
  %v4860 = vrot.slane %v4434, 4
  %v4861 = vsel %vm1056, %v4860, %v4859
  %v4862 = vrot.slane %v4435, 3
  %v4863 = vsel %vm1059, %v4862, %v4861
  %v4864 = vrot.slane %v4436, 2
  %v4865 = vsel %vm1062, %v4864, %v4863
  %v4866 = vrot.slane %v4437, 1
  %v4867 = vsel %vm1065, %v4866, %v4865
  %v4868 = vrot.slane %v4439, 7
  %v4869 = vsel %vm1047, %v4868, %v4438
  %v4870 = vrot.slane %v4440, 6
  %v4871 = vsel %vm1050, %v4870, %v4869
  %v4872 = vrot.slane %v4441, 5
  %v4873 = vsel %vm1053, %v4872, %v4871
  %v4874 = vrot.slane %v4442, 4
  %v4875 = vsel %vm1056, %v4874, %v4873
  %v4876 = vrot.slane %v4443, 3
  %v4877 = vsel %vm1059, %v4876, %v4875
  %v4878 = vrot.slane %v4444, 2
  %v4879 = vsel %vm1062, %v4878, %v4877
  %v4880 = vrot.slane %v4445, 1
  %v4881 = vsel %vm1065, %v4880, %v4879
  %v4882 = vrot.slane %v4447, 7
  %v4883 = vsel %vm1047, %v4882, %v4446
  %v4884 = vrot.slane %v4448, 6
  %v4885 = vsel %vm1050, %v4884, %v4883
  %v4886 = vrot.slane %v4449, 5
  %v4887 = vsel %vm1053, %v4886, %v4885
  %v4888 = vrot.slane %v4450, 4
  %v4889 = vsel %vm1056, %v4888, %v4887
  %v4890 = vrot.slane %v4451, 3
  %v4891 = vsel %vm1059, %v4890, %v4889
  %v4892 = vrot.slane %v4452, 2
  %v4893 = vsel %vm1062, %v4892, %v4891
  %v4894 = vrot.slane %v4453, 1
  %v4895 = vsel %vm1065, %v4894, %v4893
  %v4896 = vrot.slane %v4455, 7
  %v4897 = vsel %vm1047, %v4896, %v4454
  %v4898 = vrot.slane %v4456, 6
  %v4899 = vsel %vm1050, %v4898, %v4897
  %v4900 = vrot.slane %v4457, 5
  %v4901 = vsel %vm1053, %v4900, %v4899
  %v4902 = vrot.slane %v4458, 4
  %v4903 = vsel %vm1056, %v4902, %v4901
  %v4904 = vrot.slane %v4459, 3
  %v4905 = vsel %vm1059, %v4904, %v4903
  %v4906 = vrot.slane %v4460, 2
  %v4907 = vsel %vm1062, %v4906, %v4905
  %v4908 = vrot.slane %v4461, 1
  %v4909 = vsel %vm1065, %v4908, %v4907
  %v4910 = vpack.c.b16 %v4489, %v4475
  %v4911 = vpack.c.b16 %v4517, %v4503
  %v4912 = vpack.c.b16 %v4545, %v4531
  %v4913 = vpack.c.b16 %v4573, %v4559
  %v4914 = vpack.c.b16 %v4601, %v4587
  %v4915 = vpack.c.b16 %v4629, %v4615
  %v4916 = vpack.c.b16 %v4657, %v4643
  %v4917 = vpack.c.b16 %v4685, %v4671
  %v4918 = vpack.c.b16 %v4713, %v4699
  %v4919 = vpack.c.b16 %v4741, %v4727
  %v4920 = vpack.c.b16 %v4769, %v4755
  %v4921 = vpack.c.b16 %v4797, %v4783
  %v4922 = vpack.c.b16 %v4825, %v4811
  %v4923 = vpack.c.b16 %v4853, %v4839
  %v4924 = vpack.c.b16 %v4881, %v4867
  %v4925 = vpack.c.b16 %v4909, %v4895
  %v4927 = vsel %vm1517, %v4910, 0
  %v4930 = vsel %vm1517, %v4911, 0
  %v4933 = vsel %vm1517, %v4912, 0
  %v4936 = vsel %vm1517, %v4913, 0
  %v4939 = vsel %vm1517, %v4914, 0
  %v4942 = vsel %vm1517, %v4915, 0
  %v4945 = vsel %vm1517, %v4916, 0
  %v4948 = vsel %vm1517, %v4917, 0
  %v4951 = vsel %vm1517, %v4918, 0
  %v4954 = vsel %vm1517, %v4919, 0
  %v4957 = vsel %vm1517, %v4920, 0
  %v4960 = vsel %vm1517, %v4921, 0
  %v4963 = vsel %vm1517, %v4922, 0
  %v4966 = vsel %vm1517, %v4923, 0
  %v4969 = vsel %vm1517, %v4924, 0
  %v4972 = vsel %vm1517, %v4925, 0
  %4974 = vmatprep.subr.bf16.mxu0 0
  %4975 = vmatpush1.bf16.msra.mxu0 %v3948
  %4976 = vmatprep.subr.bf16.mxu0 0
  %4977 = vmatpush1.bf16.msra.mxu0 %v3949
  %4978 = vmatprep.subr.bf16.mxu0 0
  %4979 = vmatpush1.bf16.msra.mxu0 0
  %4980 = vmatprep.subr.bf16.mxu0 0
  %4981 = vmatpush1.bf16.msra.mxu0 0
  %4982 = vmatprep.subr.bf16.mxu0 0
  %4983 = vmatpush1.bf16.msra.mxu0 0
  %4984 = vmatprep.subr.bf16.mxu0 0
  %4985 = vmatpush1.bf16.msra.mxu0 0
  %4986 = vmatprep.subr.bf16.mxu0 0
  %4987 = vmatpush1.bf16.msra.mxu0 0
  %4988 = vmatprep.subr.bf16.mxu0 0
  %4989 = vmatpush1.bf16.msra.mxu0 0
  %4990 = vmatprep.subr.bf16.mxu0 0
  %4991 = vmatpush1.bf16.msra.mxu0 0
  %4992 = vmatprep.subr.bf16.mxu0 0
  %4993 = vmatpush1.bf16.msra.mxu0 0
  %4994 = vmatprep.subr.bf16.mxu0 0
  %4995 = vmatpush1.bf16.msra.mxu0 0
  %4996 = vmatprep.subr.bf16.mxu0 0
  %4997 = vmatpush1.bf16.msra.mxu0 0
  %4998 = vmatprep.subr.bf16.mxu0 0
  %4999 = vmatpush1.bf16.msra.mxu0 0
  %5000 = vmatprep.subr.bf16.mxu0 0
  %5001 = vmatpush1.bf16.msra.mxu0 0
  %5002 = vmatprep.subr.bf16.mxu0 0
  %5003 = vmatpush1.bf16.msra.mxu0 0
  %5004 = vmatprep.subr.bf16.mxu0 0
  %5005 = vmatpush1.bf16.msra.mxu0 0
  %5006 = vmatprep.mubr.bf16.mxu0 0
  %5007 = vmatmul.mubr.bf16.gmra.mrb[0].mxu0 %v4927
  %v5008 = vpop.f32.mrb[0].mxu0
  %v5009 = vadd.f32 0.0, %v5008
  %v5010 = vpop.f32.mrb[0].mxu0
  %v5011 = vpop.f32.mrb[0].mxu0
  %v5012 = vadd.f32 0.0, %v5011
  %v5013 = vpop.f32.mrb[0].mxu0
  %5014 = vmatprep.mubr.bf16.mxu0 0
  %5015 = vmatmul.mubr.bf16.gmra.mrb[0].mxu0 %v4930
  %v5016 = vpop.f32.mrb[0].mxu0
  %v5017 = vadd.f32 0.0, %v5016
  %v5018 = vpop.f32.mrb[0].mxu0
  %v5019 = vpop.f32.mrb[0].mxu0
  %v5020 = vadd.f32 0.0, %v5019
  %v5021 = vpop.f32.mrb[0].mxu0
  %5022 = vmatprep.mubr.bf16.mxu0 0
  %5023 = vmatmul.mubr.bf16.gmra.mrb[0].mxu0 %v4933
  %v5024 = vpop.f32.mrb[0].mxu0
  %v5025 = vadd.f32 0.0, %v5024
  %v5026 = vpop.f32.mrb[0].mxu0
  %v5027 = vpop.f32.mrb[0].mxu0
  %v5028 = vadd.f32 0.0, %v5027
  %v5029 = vpop.f32.mrb[0].mxu0
  %5030 = vmatprep.mubr.bf16.mxu0 0
  %5031 = vmatmul.mubr.bf16.gmra.mrb[0].mxu0 %v4936
  %v5032 = vpop.f32.mrb[0].mxu0
  %v5033 = vadd.f32 0.0, %v5032
  %v5034 = vpop.f32.mrb[0].mxu0
  %v5035 = vpop.f32.mrb[0].mxu0
  %v5036 = vadd.f32 0.0, %v5035
  %v5037 = vpop.f32.mrb[0].mxu0
  %5038 = vmatprep.mubr.bf16.mxu0 0
  %5039 = vmatmul.mubr.bf16.gmra.mrb[0].mxu0 %v4939
  %v5040 = vpop.f32.mrb[0].mxu0
  %v5041 = vadd.f32 0.0, %v5040
  %v5042 = vpop.f32.mrb[0].mxu0
  %v5043 = vpop.f32.mrb[0].mxu0
  %v5044 = vadd.f32 0.0, %v5043
  %v5045 = vpop.f32.mrb[0].mxu0
  %5046 = vmatprep.mubr.bf16.mxu0 0
  %5047 = vmatmul.mubr.bf16.gmra.mrb[0].mxu0 %v4942
  %v5048 = vpop.f32.mrb[0].mxu0
  %v5049 = vadd.f32 0.0, %v5048
  %v5050 = vpop.f32.mrb[0].mxu0
  %v5051 = vpop.f32.mrb[0].mxu0
  %v5052 = vadd.f32 0.0, %v5051
  %v5053 = vpop.f32.mrb[0].mxu0
  %5054 = vmatprep.mubr.bf16.mxu0 0
  %5055 = vmatmul.mubr.bf16.gmra.mrb[0].mxu0 %v4945
  %v5056 = vpop.f32.mrb[0].mxu0
  %v5057 = vadd.f32 0.0, %v5056
  %v5058 = vpop.f32.mrb[0].mxu0
  %v5059 = vpop.f32.mrb[0].mxu0
  %v5060 = vadd.f32 0.0, %v5059
  %v5061 = vpop.f32.mrb[0].mxu0
  %5062 = vmatprep.mubr.bf16.mxu0 0
  %5063 = vmatmul.mubr.bf16.gmra.mrb[0].mxu0 %v4948
  %v5064 = vpop.f32.mrb[0].mxu0
  %v5065 = vadd.f32 0.0, %v5064
  %v5066 = vpop.f32.mrb[0].mxu0
  %v5067 = vpop.f32.mrb[0].mxu0
  %v5068 = vadd.f32 0.0, %v5067
  %v5069 = vpop.f32.mrb[0].mxu0
  %5070 = vmatprep.mubr.bf16.mxu0 0
  %5071 = vmatmul.mubr.bf16.gmra.mrb[0].mxu0 %v4951
  %v5072 = vpop.f32.mrb[0].mxu0
  %v5073 = vadd.f32 0.0, %v5072
  %v5074 = vpop.f32.mrb[0].mxu0
  %v5075 = vpop.f32.mrb[0].mxu0
  %v5076 = vadd.f32 0.0, %v5075
  %v5077 = vpop.f32.mrb[0].mxu0
  %5078 = vmatprep.mubr.bf16.mxu0 0
  %5079 = vmatmul.mubr.bf16.gmra.mrb[0].mxu0 %v4954
  %v5080 = vpop.f32.mrb[0].mxu0
  %v5081 = vadd.f32 0.0, %v5080
  %v5082 = vpop.f32.mrb[0].mxu0
  %v5083 = vpop.f32.mrb[0].mxu0
  %v5084 = vadd.f32 0.0, %v5083
  %v5085 = vpop.f32.mrb[0].mxu0
  %5086 = vmatprep.mubr.bf16.mxu0 0
  %5087 = vmatmul.mubr.bf16.gmra.mrb[0].mxu0 %v4957
  %v5088 = vpop.f32.mrb[0].mxu0
  %v5089 = vadd.f32 0.0, %v5088
  %v5090 = vpop.f32.mrb[0].mxu0
  %v5091 = vpop.f32.mrb[0].mxu0
  %v5092 = vadd.f32 0.0, %v5091
  %v5093 = vpop.f32.mrb[0].mxu0
  %5094 = vmatprep.mubr.bf16.mxu0 0
  %5095 = vmatmul.mubr.bf16.gmra.mrb[0].mxu0 %v4960
  %v5096 = vpop.f32.mrb[0].mxu0
  %v5097 = vadd.f32 0.0, %v5096
  %v5098 = vpop.f32.mrb[0].mxu0
  %v5099 = vpop.f32.mrb[0].mxu0
  %v5100 = vadd.f32 0.0, %v5099
  %v5101 = vpop.f32.mrb[0].mxu0
  %5102 = vmatprep.mubr.bf16.mxu0 0
  %5103 = vmatmul.mubr.bf16.gmra.mrb[0].mxu0 %v4963
  %v5104 = vpop.f32.mrb[0].mxu0
  %v5105 = vadd.f32 0.0, %v5104
  %v5106 = vpop.f32.mrb[0].mxu0
  %v5107 = vpop.f32.mrb[0].mxu0
  %v5108 = vadd.f32 0.0, %v5107
  %v5109 = vpop.f32.mrb[0].mxu0
  %5110 = vmatprep.mubr.bf16.mxu0 0
  %5111 = vmatmul.mubr.bf16.gmra.mrb[0].mxu0 %v4966
  %v5112 = vpop.f32.mrb[0].mxu0
  %v5113 = vadd.f32 0.0, %v5112
  %v5114 = vpop.f32.mrb[0].mxu0
  %v5115 = vpop.f32.mrb[0].mxu0
  %v5116 = vadd.f32 0.0, %v5115
  %v5117 = vpop.f32.mrb[0].mxu0
  %5118 = vmatprep.mubr.bf16.mxu0 0
  %5119 = vmatmul.mubr.bf16.gmra.mrb[0].mxu0 %v4969
  %v5120 = vpop.f32.mrb[0].mxu0
  %v5121 = vadd.f32 0.0, %v5120
  %v5122 = vpop.f32.mrb[0].mxu0
  %v5123 = vpop.f32.mrb[0].mxu0
  %v5124 = vadd.f32 0.0, %v5123
  %v5125 = vpop.f32.mrb[0].mxu0
  %5126 = vmatprep.mubr.bf16.mxu0 0
  %5127 = vmatmul.mubr.bf16.gmra.mrb[0].mxu0 %v4972
  %v5128 = vpop.f32.mrb[0].mxu0
  %v5129 = vadd.f32 0.0, %v5128
  %v5130 = vpop.f32.mrb[0].mxu0
  %v5131 = vpop.f32.mrb[0].mxu0
  %v5132 = vadd.f32 0.0, %v5131
  %v5133 = vpop.f32.mrb[0].mxu0
  %5134 = vdwg.mxu0
  %v5135 = vld [vmem:[%s0 + $0x3] sm:$0x1]
  %v5136 = vld [vmem:[%s0 + $0x7] sm:$0x1]
  %v5137 = vld [vmem:[%s0 + $0xb] sm:$0x1]
  %v5138 = vld [vmem:[%s0 + $0xf] sm:$0x1]
  %v5139 = vld [vmem:[%s0 + $0x13] sm:$0x1]
  %v5140 = vld [vmem:[%s0 + $0x17] sm:$0x1]
  %v5141 = vld [vmem:[%s0 + $0x1b] sm:$0x1]
  %v5142 = vld [vmem:[%s0 + $0x1f] sm:$0x1]
  %v5143 = vld [vmem:[%s0 + $0x23] sm:$0x1]
  %v5144 = vld [vmem:[%s0 + $0x27] sm:$0x1]
  %v5145 = vld [vmem:[%s0 + $0x2b] sm:$0x1]
  %v5146 = vld [vmem:[%s0 + $0x2f] sm:$0x1]
  %v5147 = vld [vmem:[%s0 + $0x33] sm:$0x1]
  %v5148 = vld [vmem:[%s0 + $0x37] sm:$0x1]
  %v5149 = vld [vmem:[%s0 + $0x3b] sm:$0x1]
  %v5150 = vld [vmem:[%s0 + $0x3f] sm:$0x1]
  %v5151 = vld [vmem:[%s0 + $0x43] sm:$0x1]
  %v5152 = vld [vmem:[%s0 + $0x47] sm:$0x1]
  %v5153 = vld [vmem:[%s0 + $0x4b] sm:$0x1]
  %v5154 = vld [vmem:[%s0 + $0x4f] sm:$0x1]
  %v5155 = vld [vmem:[%s0 + $0x53] sm:$0x1]
  %v5156 = vld [vmem:[%s0 + $0x57] sm:$0x1]
  %v5157 = vld [vmem:[%s0 + $0x5b] sm:$0x1]
  %v5158 = vld [vmem:[%s0 + $0x5f] sm:$0x1]
  %v5159 = vld [vmem:[%s0 + $0x63] sm:$0x1]
  %v5160 = vld [vmem:[%s0 + $0x67] sm:$0x1]
  %v5161 = vld [vmem:[%s0 + $0x6b] sm:$0x1]
  %v5162 = vld [vmem:[%s0 + $0x6f] sm:$0x1]
  %v5163 = vld [vmem:[%s0 + $0x73] sm:$0x1]
  %v5164 = vld [vmem:[%s0 + $0x77] sm:$0x1]
  %v5165 = vld [vmem:[%s0 + $0x7b] sm:$0x1]
  %v5166 = vld [vmem:[%s0 + $0x7f] sm:$0x1]
  %v5167 = vld [vmem:[%s0 + $0x83] sm:$0x1]
  %v5168 = vld [vmem:[%s0 + $0x87] sm:$0x1]
  %v5169 = vld [vmem:[%s0 + $0x8b] sm:$0x1]
  %v5170 = vld [vmem:[%s0 + $0x8f] sm:$0x1]
  %v5171 = vld [vmem:[%s0 + $0x93] sm:$0x1]
  %v5172 = vld [vmem:[%s0 + $0x97] sm:$0x1]
  %v5173 = vld [vmem:[%s0 + $0x9b] sm:$0x1]
  %v5174 = vld [vmem:[%s0 + $0x9f] sm:$0x1]
  %v5175 = vld [vmem:[%s0 + $0xa3] sm:$0x1]
  %v5176 = vld [vmem:[%s0 + $0xa7] sm:$0x1]
  %v5177 = vld [vmem:[%s0 + $0xab] sm:$0x1]
  %v5178 = vld [vmem:[%s0 + $0xaf] sm:$0x1]
  %v5179 = vld [vmem:[%s0 + $0xb3] sm:$0x1]
  %v5180 = vld [vmem:[%s0 + $0xb7] sm:$0x1]
  %v5181 = vld [vmem:[%s0 + $0xbb] sm:$0x1]
  %v5182 = vld [vmem:[%s0 + $0xbf] sm:$0x1]
  %v5183 = vld [vmem:[%s0 + $0xc3] sm:$0x1]
  %v5184 = vld [vmem:[%s0 + $0xc7] sm:$0x1]
  %v5185 = vld [vmem:[%s0 + $0xcb] sm:$0x1]
  %v5186 = vld [vmem:[%s0 + $0xcf] sm:$0x1]
  %v5187 = vld [vmem:[%s0 + $0xd3] sm:$0x1]
  %v5188 = vld [vmem:[%s0 + $0xd7] sm:$0x1]
  %v5189 = vld [vmem:[%s0 + $0xdb] sm:$0x1]
  %v5190 = vld [vmem:[%s0 + $0xdf] sm:$0x1]
  %v5191 = vld [vmem:[%s0 + $0xe3] sm:$0x1]
  %v5192 = vld [vmem:[%s0 + $0xe7] sm:$0x1]
  %v5193 = vld [vmem:[%s0 + $0xeb] sm:$0x1]
  %v5194 = vld [vmem:[%s0 + $0xef] sm:$0x1]
  %v5195 = vld [vmem:[%s0 + $0xf3] sm:$0x1]
  %v5196 = vld [vmem:[%s0 + $0xf7] sm:$0x1]
  %v5197 = vld [vmem:[%s0 + $0xfb] sm:$0x1]
  %v5198 = vld [vmem:[%s0 + $0xff] sm:$0x1]
  %v5199 = vld [vmem:[%s0 + $0x103] sm:$0x1]
  %v5200 = vld [vmem:[%s0 + $0x107] sm:$0x1]
  %v5201 = vld [vmem:[%s0 + $0x10b] sm:$0x1]
  %v5202 = vld [vmem:[%s0 + $0x10f] sm:$0x1]
  %v5203 = vld [vmem:[%s0 + $0x113] sm:$0x1]
  %v5204 = vld [vmem:[%s0 + $0x117] sm:$0x1]
  %v5205 = vld [vmem:[%s0 + $0x11b] sm:$0x1]
  %v5206 = vld [vmem:[%s0 + $0x11f] sm:$0x1]
  %v5207 = vld [vmem:[%s0 + $0x123] sm:$0x1]
  %v5208 = vld [vmem:[%s0 + $0x127] sm:$0x1]
  %v5209 = vld [vmem:[%s0 + $0x12b] sm:$0x1]
  %v5210 = vld [vmem:[%s0 + $0x12f] sm:$0x1]
  %v5211 = vld [vmem:[%s0 + $0x133] sm:$0x1]
  %v5212 = vld [vmem:[%s0 + $0x137] sm:$0x1]
  %v5213 = vld [vmem:[%s0 + $0x13b] sm:$0x1]
  %v5214 = vld [vmem:[%s0 + $0x13f] sm:$0x1]
  %v5215 = vld [vmem:[%s0 + $0x143] sm:$0x1]
  %v5216 = vld [vmem:[%s0 + $0x147] sm:$0x1]
  %v5217 = vld [vmem:[%s0 + $0x14b] sm:$0x1]
  %v5218 = vld [vmem:[%s0 + $0x14f] sm:$0x1]
  %v5219 = vld [vmem:[%s0 + $0x153] sm:$0x1]
  %v5220 = vld [vmem:[%s0 + $0x157] sm:$0x1]
  %v5221 = vld [vmem:[%s0 + $0x15b] sm:$0x1]
  %v5222 = vld [vmem:[%s0 + $0x15f] sm:$0x1]
  %v5223 = vld [vmem:[%s0 + $0x163] sm:$0x1]
  %v5224 = vld [vmem:[%s0 + $0x167] sm:$0x1]
  %v5225 = vld [vmem:[%s0 + $0x16b] sm:$0x1]
  %v5226 = vld [vmem:[%s0 + $0x16f] sm:$0x1]
  %v5227 = vld [vmem:[%s0 + $0x173] sm:$0x1]
  %v5228 = vld [vmem:[%s0 + $0x177] sm:$0x1]
  %v5229 = vld [vmem:[%s0 + $0x17b] sm:$0x1]
  %v5230 = vld [vmem:[%s0 + $0x17f] sm:$0x1]
  %v5231 = vld [vmem:[%s0 + $0x183] sm:$0x1]
  %v5232 = vld [vmem:[%s0 + $0x187] sm:$0x1]
  %v5233 = vld [vmem:[%s0 + $0x18b] sm:$0x1]
  %v5234 = vld [vmem:[%s0 + $0x18f] sm:$0x1]
  %v5235 = vld [vmem:[%s0 + $0x193] sm:$0x1]
  %v5236 = vld [vmem:[%s0 + $0x197] sm:$0x1]
  %v5237 = vld [vmem:[%s0 + $0x19b] sm:$0x1]
  %v5238 = vld [vmem:[%s0 + $0x19f] sm:$0x1]
  %v5239 = vld [vmem:[%s0 + $0x1a3] sm:$0x1]
  %v5240 = vld [vmem:[%s0 + $0x1a7] sm:$0x1]
  %v5241 = vld [vmem:[%s0 + $0x1ab] sm:$0x1]
  %v5242 = vld [vmem:[%s0 + $0x1af] sm:$0x1]
  %v5243 = vld [vmem:[%s0 + $0x1b3] sm:$0x1]
  %v5244 = vld [vmem:[%s0 + $0x1b7] sm:$0x1]
  %v5245 = vld [vmem:[%s0 + $0x1bb] sm:$0x1]
  %v5246 = vld [vmem:[%s0 + $0x1bf] sm:$0x1]
  %v5247 = vld [vmem:[%s0 + $0x1c3] sm:$0x1]
  %v5248 = vld [vmem:[%s0 + $0x1c7] sm:$0x1]
  %v5249 = vld [vmem:[%s0 + $0x1cb] sm:$0x1]
  %v5250 = vld [vmem:[%s0 + $0x1cf] sm:$0x1]
  %v5251 = vld [vmem:[%s0 + $0x1d3] sm:$0x1]
  %v5252 = vld [vmem:[%s0 + $0x1d7] sm:$0x1]
  %v5253 = vld [vmem:[%s0 + $0x1db] sm:$0x1]
  %v5254 = vld [vmem:[%s0 + $0x1df] sm:$0x1]
  %v5255 = vld [vmem:[%s0 + $0x1e3] sm:$0x1]
  %v5256 = vld [vmem:[%s0 + $0x1e7] sm:$0x1]
  %v5257 = vld [vmem:[%s0 + $0x1eb] sm:$0x1]
  %v5258 = vld [vmem:[%s0 + $0x1ef] sm:$0x1]
  %v5259 = vld [vmem:[%s0 + $0x1f3] sm:$0x1]
  %v5260 = vld [vmem:[%s0 + $0x1f7] sm:$0x1]
  %v5261 = vld [vmem:[%s0 + $0x1fb] sm:$0x1]
  %v5262 = vld [vmem:[%s0 + $0x1ff] sm:$0x1]
  %v5263 = vld [vmem:[%s0 + $0x203] sm:$0x1]
  %v5264 = vld [vmem:[%s0 + $0x207] sm:$0x1]
  %v5265 = vld [vmem:[%s0 + $0x20b] sm:$0x1]
  %v5266 = vld [vmem:[%s0 + $0x20f] sm:$0x1]
  %v5267 = vld [vmem:[%s0 + $0x213] sm:$0x1]
  %v5268 = vld [vmem:[%s0 + $0x217] sm:$0x1]
  %v5269 = vld [vmem:[%s0 + $0x21b] sm:$0x1]
  %v5270 = vld [vmem:[%s0 + $0x21f] sm:$0x1]
  %v5271 = vld [vmem:[%s0 + $0x223] sm:$0x1]
  %v5272 = vld [vmem:[%s0 + $0x227] sm:$0x1]
  %v5273 = vld [vmem:[%s0 + $0x22b] sm:$0x1]
  %v5274 = vld [vmem:[%s0 + $0x22f] sm:$0x1]
  %v5275 = vld [vmem:[%s0 + $0x233] sm:$0x1]
  %v5276 = vld [vmem:[%s0 + $0x237] sm:$0x1]
  %v5277 = vld [vmem:[%s0 + $0x23b] sm:$0x1]
  %v5278 = vld [vmem:[%s0 + $0x23f] sm:$0x1]
  %v5279 = vld [vmem:[%s0 + $0x243] sm:$0x1]
  %v5280 = vld [vmem:[%s0 + $0x247] sm:$0x1]
  %v5281 = vld [vmem:[%s0 + $0x24b] sm:$0x1]
  %v5282 = vld [vmem:[%s0 + $0x24f] sm:$0x1]
  %v5283 = vld [vmem:[%s0 + $0x253] sm:$0x1]
  %v5284 = vld [vmem:[%s0 + $0x257] sm:$0x1]
  %v5285 = vld [vmem:[%s0 + $0x25b] sm:$0x1]
  %v5286 = vld [vmem:[%s0 + $0x25f] sm:$0x1]
  %v5287 = vld [vmem:[%s0 + $0x263] sm:$0x1]
  %v5288 = vld [vmem:[%s0 + $0x267] sm:$0x1]
  %v5289 = vld [vmem:[%s0 + $0x26b] sm:$0x1]
  %v5290 = vld [vmem:[%s0 + $0x26f] sm:$0x1]
  %v5291 = vld [vmem:[%s0 + $0x273] sm:$0x1]
  %v5292 = vld [vmem:[%s0 + $0x277] sm:$0x1]
  %v5293 = vld [vmem:[%s0 + $0x27b] sm:$0x1]
  %v5294 = vld [vmem:[%s0 + $0x27f] sm:$0x1]
  %v5295 = vld [vmem:[%s0 + $0x283] sm:$0x1]
  %v5296 = vld [vmem:[%s0 + $0x287] sm:$0x1]
  %v5297 = vld [vmem:[%s0 + $0x28b] sm:$0x1]
  %v5298 = vld [vmem:[%s0 + $0x28f] sm:$0x1]
  %v5299 = vld [vmem:[%s0 + $0x293] sm:$0x1]
  %v5300 = vld [vmem:[%s0 + $0x297] sm:$0x1]
  %v5301 = vld [vmem:[%s0 + $0x29b] sm:$0x1]
  %v5302 = vld [vmem:[%s0 + $0x29f] sm:$0x1]
  %v5303 = vld [vmem:[%s0 + $0x2a3] sm:$0x1]
  %v5304 = vld [vmem:[%s0 + $0x2a7] sm:$0x1]
  %v5305 = vld [vmem:[%s0 + $0x2ab] sm:$0x1]
  %v5306 = vld [vmem:[%s0 + $0x2af] sm:$0x1]
  %v5307 = vld [vmem:[%s0 + $0x2b3] sm:$0x1]
  %v5308 = vld [vmem:[%s0 + $0x2b7] sm:$0x1]
  %v5309 = vld [vmem:[%s0 + $0x2bb] sm:$0x1]
  %v5310 = vld [vmem:[%s0 + $0x2bf] sm:$0x1]
  %v5311 = vld [vmem:[%s0 + $0x2c3] sm:$0x1]
  %v5312 = vld [vmem:[%s0 + $0x2c7] sm:$0x1]
  %v5313 = vld [vmem:[%s0 + $0x2cb] sm:$0x1]
  %v5314 = vld [vmem:[%s0 + $0x2cf] sm:$0x1]
  %v5315 = vld [vmem:[%s0 + $0x2d3] sm:$0x1]
  %v5316 = vld [vmem:[%s0 + $0x2d7] sm:$0x1]
  %v5317 = vld [vmem:[%s0 + $0x2db] sm:$0x1]
  %v5318 = vld [vmem:[%s0 + $0x2df] sm:$0x1]
  %v5319 = vld [vmem:[%s0 + $0x2e3] sm:$0x1]
  %v5320 = vld [vmem:[%s0 + $0x2e7] sm:$0x1]
  %v5321 = vld [vmem:[%s0 + $0x2eb] sm:$0x1]
  %v5322 = vld [vmem:[%s0 + $0x2ef] sm:$0x1]
  %v5323 = vld [vmem:[%s0 + $0x2f3] sm:$0x1]
  %v5324 = vld [vmem:[%s0 + $0x2f7] sm:$0x1]
  %v5325 = vld [vmem:[%s0 + $0x2fb] sm:$0x1]
  %v5326 = vld [vmem:[%s0 + $0x2ff] sm:$0x1]
  %v5327 = vld [vmem:[%s0 + $0x303] sm:$0x1]
  %v5328 = vld [vmem:[%s0 + $0x307] sm:$0x1]
  %v5329 = vld [vmem:[%s0 + $0x30b] sm:$0x1]
  %v5330 = vld [vmem:[%s0 + $0x30f] sm:$0x1]
  %v5331 = vld [vmem:[%s0 + $0x313] sm:$0x1]
  %v5332 = vld [vmem:[%s0 + $0x317] sm:$0x1]
  %v5333 = vld [vmem:[%s0 + $0x31b] sm:$0x1]
  %v5334 = vld [vmem:[%s0 + $0x31f] sm:$0x1]
  %v5335 = vld [vmem:[%s0 + $0x323] sm:$0x1]
  %v5336 = vld [vmem:[%s0 + $0x327] sm:$0x1]
  %v5337 = vld [vmem:[%s0 + $0x32b] sm:$0x1]
  %v5338 = vld [vmem:[%s0 + $0x32f] sm:$0x1]
  %v5339 = vld [vmem:[%s0 + $0x333] sm:$0x1]
  %v5340 = vld [vmem:[%s0 + $0x337] sm:$0x1]
  %v5341 = vld [vmem:[%s0 + $0x33b] sm:$0x1]
  %v5342 = vld [vmem:[%s0 + $0x33f] sm:$0x1]
  %v5343 = vld [vmem:[%s0 + $0x343] sm:$0x1]
  %v5344 = vld [vmem:[%s0 + $0x347] sm:$0x1]
  %v5345 = vld [vmem:[%s0 + $0x34b] sm:$0x1]
  %v5346 = vld [vmem:[%s0 + $0x34f] sm:$0x1]
  %v5347 = vld [vmem:[%s0 + $0x353] sm:$0x1]
  %v5348 = vld [vmem:[%s0 + $0x357] sm:$0x1]
  %v5349 = vld [vmem:[%s0 + $0x35b] sm:$0x1]
  %v5350 = vld [vmem:[%s0 + $0x35f] sm:$0x1]
  %v5351 = vld [vmem:[%s0 + $0x363] sm:$0x1]
  %v5352 = vld [vmem:[%s0 + $0x367] sm:$0x1]
  %v5353 = vld [vmem:[%s0 + $0x36b] sm:$0x1]
  %v5354 = vld [vmem:[%s0 + $0x36f] sm:$0x1]
  %v5355 = vld [vmem:[%s0 + $0x373] sm:$0x1]
  %v5356 = vld [vmem:[%s0 + $0x377] sm:$0x1]
  %v5357 = vld [vmem:[%s0 + $0x37b] sm:$0x1]
  %v5358 = vld [vmem:[%s0 + $0x37f] sm:$0x1]
  %v5359 = vld [vmem:[%s0 + $0x383] sm:$0x1]
  %v5360 = vld [vmem:[%s0 + $0x387] sm:$0x1]
  %v5361 = vld [vmem:[%s0 + $0x38b] sm:$0x1]
  %v5362 = vld [vmem:[%s0 + $0x38f] sm:$0x1]
  %v5363 = vld [vmem:[%s0 + $0x393] sm:$0x1]
  %v5364 = vld [vmem:[%s0 + $0x397] sm:$0x1]
  %v5365 = vld [vmem:[%s0 + $0x39b] sm:$0x1]
  %v5366 = vld [vmem:[%s0 + $0x39f] sm:$0x1]
  %v5367 = vld [vmem:[%s0 + $0x3a3] sm:$0x1]
  %v5368 = vld [vmem:[%s0 + $0x3a7] sm:$0x1]
  %v5369 = vld [vmem:[%s0 + $0x3ab] sm:$0x1]
  %v5370 = vld [vmem:[%s0 + $0x3af] sm:$0x1]
  %v5371 = vld [vmem:[%s0 + $0x3b3] sm:$0x1]
  %v5372 = vld [vmem:[%s0 + $0x3b7] sm:$0x1]
  %v5373 = vld [vmem:[%s0 + $0x3bb] sm:$0x1]
  %v5374 = vld [vmem:[%s0 + $0x3bf] sm:$0x1]
  %v5375 = vld [vmem:[%s0 + $0x3c3] sm:$0x1]
  %v5376 = vld [vmem:[%s0 + $0x3c7] sm:$0x1]
  %v5377 = vld [vmem:[%s0 + $0x3cb] sm:$0x1]
  %v5378 = vld [vmem:[%s0 + $0x3cf] sm:$0x1]
  %v5379 = vld [vmem:[%s0 + $0x3d3] sm:$0x1]
  %v5380 = vld [vmem:[%s0 + $0x3d7] sm:$0x1]
  %v5381 = vld [vmem:[%s0 + $0x3db] sm:$0x1]
  %v5382 = vld [vmem:[%s0 + $0x3df] sm:$0x1]
  %v5383 = vld [vmem:[%s0 + $0x3e3] sm:$0x1]
  %v5384 = vld [vmem:[%s0 + $0x3e7] sm:$0x1]
  %v5385 = vld [vmem:[%s0 + $0x3eb] sm:$0x1]
  %v5386 = vld [vmem:[%s0 + $0x3ef] sm:$0x1]
  %v5387 = vld [vmem:[%s0 + $0x3f3] sm:$0x1]
  %v5388 = vld [vmem:[%s0 + $0x3f7] sm:$0x1]
  %v5389 = vld [vmem:[%s0 + $0x3fb] sm:$0x1]
  %v5390 = vld [vmem:[%s0 + $0x3ff] sm:$0x1]
  %v5391 = vpack.c.bf16 %v5135, %v5135
  %v5392 = vpack.c.bf16 %v5136, %v5136
  %v5393 = vpack.c.bf16 %v5137, %v5137
  %v5394 = vpack.c.bf16 %v5138, %v5138
  %v5395 = vpack.c.bf16 %v5139, %v5139
  %v5396 = vpack.c.bf16 %v5140, %v5140
  %v5397 = vpack.c.bf16 %v5141, %v5141
  %v5398 = vpack.c.bf16 %v5142, %v5142
  %v5399 = vpack.c.bf16 %v5143, %v5143
  %v5400 = vpack.c.bf16 %v5144, %v5144
  %v5401 = vpack.c.bf16 %v5145, %v5145
  %v5402 = vpack.c.bf16 %v5146, %v5146
  %v5403 = vpack.c.bf16 %v5147, %v5147
  %v5404 = vpack.c.bf16 %v5148, %v5148
  %v5405 = vpack.c.bf16 %v5149, %v5149
  %v5406 = vpack.c.bf16 %v5150, %v5150
  %v5407 = vpack.c.bf16 %v5151, %v5151
  %v5408 = vpack.c.bf16 %v5152, %v5152
  %v5409 = vpack.c.bf16 %v5153, %v5153
  %v5410 = vpack.c.bf16 %v5154, %v5154
  %v5411 = vpack.c.bf16 %v5155, %v5155
  %v5412 = vpack.c.bf16 %v5156, %v5156
  %v5413 = vpack.c.bf16 %v5157, %v5157
  %v5414 = vpack.c.bf16 %v5158, %v5158
  %v5415 = vpack.c.bf16 %v5159, %v5159
  %v5416 = vpack.c.bf16 %v5160, %v5160
  %v5417 = vpack.c.bf16 %v5161, %v5161
  %v5418 = vpack.c.bf16 %v5162, %v5162
  %v5419 = vpack.c.bf16 %v5163, %v5163
  %v5420 = vpack.c.bf16 %v5164, %v5164
  %v5421 = vpack.c.bf16 %v5165, %v5165
  %v5422 = vpack.c.bf16 %v5166, %v5166
  %v5423 = vpack.c.bf16 %v5167, %v5167
  %v5424 = vpack.c.bf16 %v5168, %v5168
  %v5425 = vpack.c.bf16 %v5169, %v5169
  %v5426 = vpack.c.bf16 %v5170, %v5170
  %v5427 = vpack.c.bf16 %v5171, %v5171
  %v5428 = vpack.c.bf16 %v5172, %v5172
  %v5429 = vpack.c.bf16 %v5173, %v5173
  %v5430 = vpack.c.bf16 %v5174, %v5174
  %v5431 = vpack.c.bf16 %v5175, %v5175
  %v5432 = vpack.c.bf16 %v5176, %v5176
  %v5433 = vpack.c.bf16 %v5177, %v5177
  %v5434 = vpack.c.bf16 %v5178, %v5178
  %v5435 = vpack.c.bf16 %v5179, %v5179
  %v5436 = vpack.c.bf16 %v5180, %v5180
  %v5437 = vpack.c.bf16 %v5181, %v5181
  %v5438 = vpack.c.bf16 %v5182, %v5182
  %v5439 = vpack.c.bf16 %v5183, %v5183
  %v5440 = vpack.c.bf16 %v5184, %v5184
  %v5441 = vpack.c.bf16 %v5185, %v5185
  %v5442 = vpack.c.bf16 %v5186, %v5186
  %v5443 = vpack.c.bf16 %v5187, %v5187
  %v5444 = vpack.c.bf16 %v5188, %v5188
  %v5445 = vpack.c.bf16 %v5189, %v5189
  %v5446 = vpack.c.bf16 %v5190, %v5190
  %v5447 = vpack.c.bf16 %v5191, %v5191
  %v5448 = vpack.c.bf16 %v5192, %v5192
  %v5449 = vpack.c.bf16 %v5193, %v5193
  %v5450 = vpack.c.bf16 %v5194, %v5194
  %v5451 = vpack.c.bf16 %v5195, %v5195
  %v5452 = vpack.c.bf16 %v5196, %v5196
  %v5453 = vpack.c.bf16 %v5197, %v5197
  %v5454 = vpack.c.bf16 %v5198, %v5198
  %v5455 = vpack.c.bf16 %v5199, %v5199
  %v5456 = vpack.c.bf16 %v5200, %v5200
  %v5457 = vpack.c.bf16 %v5201, %v5201
  %v5458 = vpack.c.bf16 %v5202, %v5202
  %v5459 = vpack.c.bf16 %v5203, %v5203
  %v5460 = vpack.c.bf16 %v5204, %v5204
  %v5461 = vpack.c.bf16 %v5205, %v5205
  %v5462 = vpack.c.bf16 %v5206, %v5206
  %v5463 = vpack.c.bf16 %v5207, %v5207
  %v5464 = vpack.c.bf16 %v5208, %v5208
  %v5465 = vpack.c.bf16 %v5209, %v5209
  %v5466 = vpack.c.bf16 %v5210, %v5210
  %v5467 = vpack.c.bf16 %v5211, %v5211
  %v5468 = vpack.c.bf16 %v5212, %v5212
  %v5469 = vpack.c.bf16 %v5213, %v5213
  %v5470 = vpack.c.bf16 %v5214, %v5214
  %v5471 = vpack.c.bf16 %v5215, %v5215
  %v5472 = vpack.c.bf16 %v5216, %v5216
  %v5473 = vpack.c.bf16 %v5217, %v5217
  %v5474 = vpack.c.bf16 %v5218, %v5218
  %v5475 = vpack.c.bf16 %v5219, %v5219
  %v5476 = vpack.c.bf16 %v5220, %v5220
  %v5477 = vpack.c.bf16 %v5221, %v5221
  %v5478 = vpack.c.bf16 %v5222, %v5222
  %v5479 = vpack.c.bf16 %v5223, %v5223
  %v5480 = vpack.c.bf16 %v5224, %v5224
  %v5481 = vpack.c.bf16 %v5225, %v5225
  %v5482 = vpack.c.bf16 %v5226, %v5226
  %v5483 = vpack.c.bf16 %v5227, %v5227
  %v5484 = vpack.c.bf16 %v5228, %v5228
  %v5485 = vpack.c.bf16 %v5229, %v5229
  %v5486 = vpack.c.bf16 %v5230, %v5230
  %v5487 = vpack.c.bf16 %v5231, %v5231
  %v5488 = vpack.c.bf16 %v5232, %v5232
  %v5489 = vpack.c.bf16 %v5233, %v5233
  %v5490 = vpack.c.bf16 %v5234, %v5234
  %v5491 = vpack.c.bf16 %v5235, %v5235
  %v5492 = vpack.c.bf16 %v5236, %v5236
  %v5493 = vpack.c.bf16 %v5237, %v5237
  %v5494 = vpack.c.bf16 %v5238, %v5238
  %v5495 = vpack.c.bf16 %v5239, %v5239
  %v5496 = vpack.c.bf16 %v5240, %v5240
  %v5497 = vpack.c.bf16 %v5241, %v5241
  %v5498 = vpack.c.bf16 %v5242, %v5242
  %v5499 = vpack.c.bf16 %v5243, %v5243
  %v5500 = vpack.c.bf16 %v5244, %v5244
  %v5501 = vpack.c.bf16 %v5245, %v5245
  %v5502 = vpack.c.bf16 %v5246, %v5246
  %v5503 = vpack.c.bf16 %v5247, %v5247
  %v5504 = vpack.c.bf16 %v5248, %v5248
  %v5505 = vpack.c.bf16 %v5249, %v5249
  %v5506 = vpack.c.bf16 %v5250, %v5250
  %v5507 = vpack.c.bf16 %v5251, %v5251
  %v5508 = vpack.c.bf16 %v5252, %v5252
  %v5509 = vpack.c.bf16 %v5253, %v5253
  %v5510 = vpack.c.bf16 %v5254, %v5254
  %v5511 = vpack.c.bf16 %v5255, %v5255
  %v5512 = vpack.c.bf16 %v5256, %v5256
  %v5513 = vpack.c.bf16 %v5257, %v5257
  %v5514 = vpack.c.bf16 %v5258, %v5258
  %v5515 = vpack.c.bf16 %v5259, %v5259
  %v5516 = vpack.c.bf16 %v5260, %v5260
  %v5517 = vpack.c.bf16 %v5261, %v5261
  %v5518 = vpack.c.bf16 %v5262, %v5262
  %v5519 = vpack.c.bf16 %v5263, %v5263
  %v5520 = vpack.c.bf16 %v5264, %v5264
  %v5521 = vpack.c.bf16 %v5265, %v5265
  %v5522 = vpack.c.bf16 %v5266, %v5266
  %v5523 = vpack.c.bf16 %v5267, %v5267
  %v5524 = vpack.c.bf16 %v5268, %v5268
  %v5525 = vpack.c.bf16 %v5269, %v5269
  %v5526 = vpack.c.bf16 %v5270, %v5270
  %v5527 = vpack.c.bf16 %v5271, %v5271
  %v5528 = vpack.c.bf16 %v5272, %v5272
  %v5529 = vpack.c.bf16 %v5273, %v5273
  %v5530 = vpack.c.bf16 %v5274, %v5274
  %v5531 = vpack.c.bf16 %v5275, %v5275
  %v5532 = vpack.c.bf16 %v5276, %v5276
  %v5533 = vpack.c.bf16 %v5277, %v5277
  %v5534 = vpack.c.bf16 %v5278, %v5278
  %v5535 = vpack.c.bf16 %v5279, %v5279
  %v5536 = vpack.c.bf16 %v5280, %v5280
  %v5537 = vpack.c.bf16 %v5281, %v5281
  %v5538 = vpack.c.bf16 %v5282, %v5282
  %v5539 = vpack.c.bf16 %v5283, %v5283
  %v5540 = vpack.c.bf16 %v5284, %v5284
  %v5541 = vpack.c.bf16 %v5285, %v5285
  %v5542 = vpack.c.bf16 %v5286, %v5286
  %v5543 = vpack.c.bf16 %v5287, %v5287
  %v5544 = vpack.c.bf16 %v5288, %v5288
  %v5545 = vpack.c.bf16 %v5289, %v5289
  %v5546 = vpack.c.bf16 %v5290, %v5290
  %v5547 = vpack.c.bf16 %v5291, %v5291
  %v5548 = vpack.c.bf16 %v5292, %v5292
  %v5549 = vpack.c.bf16 %v5293, %v5293
  %v5550 = vpack.c.bf16 %v5294, %v5294
  %v5551 = vpack.c.bf16 %v5295, %v5295
  %v5552 = vpack.c.bf16 %v5296, %v5296
  %v5553 = vpack.c.bf16 %v5297, %v5297
  %v5554 = vpack.c.bf16 %v5298, %v5298
  %v5555 = vpack.c.bf16 %v5299, %v5299
  %v5556 = vpack.c.bf16 %v5300, %v5300
  %v5557 = vpack.c.bf16 %v5301, %v5301
  %v5558 = vpack.c.bf16 %v5302, %v5302
  %v5559 = vpack.c.bf16 %v5303, %v5303
  %v5560 = vpack.c.bf16 %v5304, %v5304
  %v5561 = vpack.c.bf16 %v5305, %v5305
  %v5562 = vpack.c.bf16 %v5306, %v5306
  %v5563 = vpack.c.bf16 %v5307, %v5307
  %v5564 = vpack.c.bf16 %v5308, %v5308
  %v5565 = vpack.c.bf16 %v5309, %v5309
  %v5566 = vpack.c.bf16 %v5310, %v5310
  %v5567 = vpack.c.bf16 %v5311, %v5311
  %v5568 = vpack.c.bf16 %v5312, %v5312
  %v5569 = vpack.c.bf16 %v5313, %v5313
  %v5570 = vpack.c.bf16 %v5314, %v5314
  %v5571 = vpack.c.bf16 %v5315, %v5315
  %v5572 = vpack.c.bf16 %v5316, %v5316
  %v5573 = vpack.c.bf16 %v5317, %v5317
  %v5574 = vpack.c.bf16 %v5318, %v5318
  %v5575 = vpack.c.bf16 %v5319, %v5319
  %v5576 = vpack.c.bf16 %v5320, %v5320
  %v5577 = vpack.c.bf16 %v5321, %v5321
  %v5578 = vpack.c.bf16 %v5322, %v5322
  %v5579 = vpack.c.bf16 %v5323, %v5323
  %v5580 = vpack.c.bf16 %v5324, %v5324
  %v5581 = vpack.c.bf16 %v5325, %v5325
  %v5582 = vpack.c.bf16 %v5326, %v5326
  %v5583 = vpack.c.bf16 %v5327, %v5327
  %v5584 = vpack.c.bf16 %v5328, %v5328
  %v5585 = vpack.c.bf16 %v5329, %v5329
  %v5586 = vpack.c.bf16 %v5330, %v5330
  %v5587 = vpack.c.bf16 %v5331, %v5331
  %v5588 = vpack.c.bf16 %v5332, %v5332
  %v5589 = vpack.c.bf16 %v5333, %v5333
  %v5590 = vpack.c.bf16 %v5334, %v5334
  %v5591 = vpack.c.bf16 %v5335, %v5335
  %v5592 = vpack.c.bf16 %v5336, %v5336
  %v5593 = vpack.c.bf16 %v5337, %v5337
  %v5594 = vpack.c.bf16 %v5338, %v5338
  %v5595 = vpack.c.bf16 %v5339, %v5339
  %v5596 = vpack.c.bf16 %v5340, %v5340
  %v5597 = vpack.c.bf16 %v5341, %v5341
  %v5598 = vpack.c.bf16 %v5342, %v5342
  %v5599 = vpack.c.bf16 %v5343, %v5343
  %v5600 = vpack.c.bf16 %v5344, %v5344
  %v5601 = vpack.c.bf16 %v5345, %v5345
  %v5602 = vpack.c.bf16 %v5346, %v5346
  %v5603 = vpack.c.bf16 %v5347, %v5347
  %v5604 = vpack.c.bf16 %v5348, %v5348
  %v5605 = vpack.c.bf16 %v5349, %v5349
  %v5606 = vpack.c.bf16 %v5350, %v5350
  %v5607 = vpack.c.bf16 %v5351, %v5351
  %v5608 = vpack.c.bf16 %v5352, %v5352
  %v5609 = vpack.c.bf16 %v5353, %v5353
  %v5610 = vpack.c.bf16 %v5354, %v5354
  %v5611 = vpack.c.bf16 %v5355, %v5355
  %v5612 = vpack.c.bf16 %v5356, %v5356
  %v5613 = vpack.c.bf16 %v5357, %v5357
  %v5614 = vpack.c.bf16 %v5358, %v5358
  %v5615 = vpack.c.bf16 %v5359, %v5359
  %v5616 = vpack.c.bf16 %v5360, %v5360
  %v5617 = vpack.c.bf16 %v5361, %v5361
  %v5618 = vpack.c.bf16 %v5362, %v5362
  %v5619 = vpack.c.bf16 %v5363, %v5363
  %v5620 = vpack.c.bf16 %v5364, %v5364
  %v5621 = vpack.c.bf16 %v5365, %v5365
  %v5622 = vpack.c.bf16 %v5366, %v5366
  %v5623 = vpack.c.bf16 %v5367, %v5367
  %v5624 = vpack.c.bf16 %v5368, %v5368
  %v5625 = vpack.c.bf16 %v5369, %v5369
  %v5626 = vpack.c.bf16 %v5370, %v5370
  %v5627 = vpack.c.bf16 %v5371, %v5371
  %v5628 = vpack.c.bf16 %v5372, %v5372
  %v5629 = vpack.c.bf16 %v5373, %v5373
  %v5630 = vpack.c.bf16 %v5374, %v5374
  %v5631 = vpack.c.bf16 %v5375, %v5375
  %v5632 = vpack.c.bf16 %v5376, %v5376
  %v5633 = vpack.c.bf16 %v5377, %v5377
  %v5634 = vpack.c.bf16 %v5378, %v5378
  %v5635 = vpack.c.bf16 %v5379, %v5379
  %v5636 = vpack.c.bf16 %v5380, %v5380
  %v5637 = vpack.c.bf16 %v5381, %v5381
  %v5638 = vpack.c.bf16 %v5382, %v5382
  %v5639 = vpack.c.bf16 %v5383, %v5383
  %v5640 = vpack.c.bf16 %v5384, %v5384
  %v5641 = vpack.c.bf16 %v5385, %v5385
  %v5642 = vpack.c.bf16 %v5386, %v5386
  %v5643 = vpack.c.bf16 %v5387, %v5387
  %v5644 = vpack.c.bf16 %v5388, %v5388
  %v5645 = vpack.c.bf16 %v5389, %v5389
  %v5646 = vpack.c.bf16 %v5390, %v5390
  %s5647 = scalar_lea.vmem %s1, 96
  %v5648 = vld [vmem:[%s5647] sm:$0xff]
  %v5649 = vld [vmem:[%s5647 + $0x8] sm:$0xff]
  %v5650 = vld [vmem:[%s5647 + $0x10] sm:$0xff]
  %v5651 = vld [vmem:[%s5647 + $0x18] sm:$0xff]
  %v5652 = vpack.c.bf16 %v5649, %v5648
  %v5653 = vpack.c.bf16 %v5651, %v5650
  %v5910 = vunpack.c.l.b16 %v5391
  %v5911 = vunpack.c.l.b16 %v5392
  %v5912 = vunpack.c.l.b16 %v5393
  %v5913 = vunpack.c.l.b16 %v5394
  %v5914 = vunpack.c.l.b16 %v5395
  %v5915 = vunpack.c.l.b16 %v5396
  %v5916 = vunpack.c.l.b16 %v5397
  %v5917 = vunpack.c.l.b16 %v5398
  %v5918 = vunpack.c.l.b16 %v5399
  %v5919 = vunpack.c.l.b16 %v5400
  %v5920 = vunpack.c.l.b16 %v5401
  %v5921 = vunpack.c.l.b16 %v5402
  %v5922 = vunpack.c.l.b16 %v5403
  %v5923 = vunpack.c.l.b16 %v5404
  %v5924 = vunpack.c.l.b16 %v5405
  %v5925 = vunpack.c.l.b16 %v5406
  %v5926 = vunpack.c.l.b16 %v5407
  %v5927 = vunpack.c.l.b16 %v5408
  %v5928 = vunpack.c.l.b16 %v5409
  %v5929 = vunpack.c.l.b16 %v5410
  %v5930 = vunpack.c.l.b16 %v5411
  %v5931 = vunpack.c.l.b16 %v5412
  %v5932 = vunpack.c.l.b16 %v5413
  %v5933 = vunpack.c.l.b16 %v5414
  %v5934 = vunpack.c.l.b16 %v5415
  %v5935 = vunpack.c.l.b16 %v5416
  %v5936 = vunpack.c.l.b16 %v5417
  %v5937 = vunpack.c.l.b16 %v5418
  %v5938 = vunpack.c.l.b16 %v5419
  %v5939 = vunpack.c.l.b16 %v5420
  %v5940 = vunpack.c.l.b16 %v5421
  %v5941 = vunpack.c.l.b16 %v5422
  %v5942 = vunpack.c.l.b16 %v5423
  %v5943 = vunpack.c.l.b16 %v5424
  %v5944 = vunpack.c.l.b16 %v5425
  %v5945 = vunpack.c.l.b16 %v5426
  %v5946 = vunpack.c.l.b16 %v5427
  %v5947 = vunpack.c.l.b16 %v5428
  %v5948 = vunpack.c.l.b16 %v5429
  %v5949 = vunpack.c.l.b16 %v5430
  %v5950 = vunpack.c.l.b16 %v5431
  %v5951 = vunpack.c.l.b16 %v5432
  %v5952 = vunpack.c.l.b16 %v5433
  %v5953 = vunpack.c.l.b16 %v5434
  %v5954 = vunpack.c.l.b16 %v5435
  %v5955 = vunpack.c.l.b16 %v5436
  %v5956 = vunpack.c.l.b16 %v5437
  %v5957 = vunpack.c.l.b16 %v5438
  %v5958 = vunpack.c.l.b16 %v5439
  %v5959 = vunpack.c.l.b16 %v5440
  %v5960 = vunpack.c.l.b16 %v5441
  %v5961 = vunpack.c.l.b16 %v5442
  %v5962 = vunpack.c.l.b16 %v5443
  %v5963 = vunpack.c.l.b16 %v5444
  %v5964 = vunpack.c.l.b16 %v5445
  %v5965 = vunpack.c.l.b16 %v5446
  %v5966 = vunpack.c.l.b16 %v5447
  %v5967 = vunpack.c.l.b16 %v5448
  %v5968 = vunpack.c.l.b16 %v5449
  %v5969 = vunpack.c.l.b16 %v5450
  %v5970 = vunpack.c.l.b16 %v5451
  %v5971 = vunpack.c.l.b16 %v5452
  %v5972 = vunpack.c.l.b16 %v5453
  %v5973 = vunpack.c.l.b16 %v5454
  %v5974 = vunpack.c.l.b16 %v5455
  %v5975 = vunpack.c.l.b16 %v5456
  %v5976 = vunpack.c.l.b16 %v5457
  %v5977 = vunpack.c.l.b16 %v5458
  %v5978 = vunpack.c.l.b16 %v5459
  %v5979 = vunpack.c.l.b16 %v5460
  %v5980 = vunpack.c.l.b16 %v5461
  %v5981 = vunpack.c.l.b16 %v5462
  %v5982 = vunpack.c.l.b16 %v5463
  %v5983 = vunpack.c.l.b16 %v5464
  %v5984 = vunpack.c.l.b16 %v5465
  %v5985 = vunpack.c.l.b16 %v5466
  %v5986 = vunpack.c.l.b16 %v5467
  %v5987 = vunpack.c.l.b16 %v5468
  %v5988 = vunpack.c.l.b16 %v5469
  %v5989 = vunpack.c.l.b16 %v5470
  %v5990 = vunpack.c.l.b16 %v5471
  %v5991 = vunpack.c.l.b16 %v5472
  %v5992 = vunpack.c.l.b16 %v5473
  %v5993 = vunpack.c.l.b16 %v5474
  %v5994 = vunpack.c.l.b16 %v5475
  %v5995 = vunpack.c.l.b16 %v5476
  %v5996 = vunpack.c.l.b16 %v5477
  %v5997 = vunpack.c.l.b16 %v5478
  %v5998 = vunpack.c.l.b16 %v5479
  %v5999 = vunpack.c.l.b16 %v5480
  %v6000 = vunpack.c.l.b16 %v5481
  %v6001 = vunpack.c.l.b16 %v5482
  %v6002 = vunpack.c.l.b16 %v5483
  %v6003 = vunpack.c.l.b16 %v5484
  %v6004 = vunpack.c.l.b16 %v5485
  %v6005 = vunpack.c.l.b16 %v5486
  %v6006 = vunpack.c.l.b16 %v5487
  %v6007 = vunpack.c.l.b16 %v5488
  %v6008 = vunpack.c.l.b16 %v5489
  %v6009 = vunpack.c.l.b16 %v5490
  %v6010 = vunpack.c.l.b16 %v5491
  %v6011 = vunpack.c.l.b16 %v5492
  %v6012 = vunpack.c.l.b16 %v5493
  %v6013 = vunpack.c.l.b16 %v5494
  %v6014 = vunpack.c.l.b16 %v5495
  %v6015 = vunpack.c.l.b16 %v5496
  %v6016 = vunpack.c.l.b16 %v5497
  %v6017 = vunpack.c.l.b16 %v5498
  %v6018 = vunpack.c.l.b16 %v5499
  %v6019 = vunpack.c.l.b16 %v5500
  %v6020 = vunpack.c.l.b16 %v5501
  %v6021 = vunpack.c.l.b16 %v5502
  %v6022 = vunpack.c.l.b16 %v5503
  %v6023 = vunpack.c.l.b16 %v5504
  %v6024 = vunpack.c.l.b16 %v5505
  %v6025 = vunpack.c.l.b16 %v5506
  %v6026 = vunpack.c.l.b16 %v5507
  %v6027 = vunpack.c.l.b16 %v5508
  %v6028 = vunpack.c.l.b16 %v5509
  %v6029 = vunpack.c.l.b16 %v5510
  %v6030 = vunpack.c.l.b16 %v5511
  %v6031 = vunpack.c.l.b16 %v5512
  %v6032 = vunpack.c.l.b16 %v5513
  %v6033 = vunpack.c.l.b16 %v5514
  %v6034 = vunpack.c.l.b16 %v5515
  %v6035 = vunpack.c.l.b16 %v5516
  %v6036 = vunpack.c.l.b16 %v5517
  %v6037 = vunpack.c.l.b16 %v5518
  %v6038 = vunpack.c.l.b16 %v5519
  %v6039 = vunpack.c.l.b16 %v5520
  %v6040 = vunpack.c.l.b16 %v5521
  %v6041 = vunpack.c.l.b16 %v5522
  %v6042 = vunpack.c.l.b16 %v5523
  %v6043 = vunpack.c.l.b16 %v5524
  %v6044 = vunpack.c.l.b16 %v5525
  %v6045 = vunpack.c.l.b16 %v5526
  %v6046 = vunpack.c.l.b16 %v5527
  %v6047 = vunpack.c.l.b16 %v5528
  %v6048 = vunpack.c.l.b16 %v5529
  %v6049 = vunpack.c.l.b16 %v5530
  %v6050 = vunpack.c.l.b16 %v5531
  %v6051 = vunpack.c.l.b16 %v5532
  %v6052 = vunpack.c.l.b16 %v5533
  %v6053 = vunpack.c.l.b16 %v5534
  %v6054 = vunpack.c.l.b16 %v5535
  %v6055 = vunpack.c.l.b16 %v5536
  %v6056 = vunpack.c.l.b16 %v5537
  %v6057 = vunpack.c.l.b16 %v5538
  %v6058 = vunpack.c.l.b16 %v5539
  %v6059 = vunpack.c.l.b16 %v5540
  %v6060 = vunpack.c.l.b16 %v5541
  %v6061 = vunpack.c.l.b16 %v5542
  %v6062 = vunpack.c.l.b16 %v5543
  %v6063 = vunpack.c.l.b16 %v5544
  %v6064 = vunpack.c.l.b16 %v5545
  %v6065 = vunpack.c.l.b16 %v5546
  %v6066 = vunpack.c.l.b16 %v5547
  %v6067 = vunpack.c.l.b16 %v5548
  %v6068 = vunpack.c.l.b16 %v5549
  %v6069 = vunpack.c.l.b16 %v5550
  %v6070 = vunpack.c.l.b16 %v5551
  %v6071 = vunpack.c.l.b16 %v5552
  %v6072 = vunpack.c.l.b16 %v5553
  %v6073 = vunpack.c.l.b16 %v5554
  %v6074 = vunpack.c.l.b16 %v5555
  %v6075 = vunpack.c.l.b16 %v5556
  %v6076 = vunpack.c.l.b16 %v5557
  %v6077 = vunpack.c.l.b16 %v5558
  %v6078 = vunpack.c.l.b16 %v5559
  %v6079 = vunpack.c.l.b16 %v5560
  %v6080 = vunpack.c.l.b16 %v5561
  %v6081 = vunpack.c.l.b16 %v5562
  %v6082 = vunpack.c.l.b16 %v5563
  %v6083 = vunpack.c.l.b16 %v5564
  %v6084 = vunpack.c.l.b16 %v5565
  %v6085 = vunpack.c.l.b16 %v5566
  %v6086 = vunpack.c.l.b16 %v5567
  %v6087 = vunpack.c.l.b16 %v5568
  %v6088 = vunpack.c.l.b16 %v5569
  %v6089 = vunpack.c.l.b16 %v5570
  %v6090 = vunpack.c.l.b16 %v5571
  %v6091 = vunpack.c.l.b16 %v5572
  %v6092 = vunpack.c.l.b16 %v5573
  %v6093 = vunpack.c.l.b16 %v5574
  %v6094 = vunpack.c.l.b16 %v5575
  %v6095 = vunpack.c.l.b16 %v5576
  %v6096 = vunpack.c.l.b16 %v5577
  %v6097 = vunpack.c.l.b16 %v5578
  %v6098 = vunpack.c.l.b16 %v5579
  %v6099 = vunpack.c.l.b16 %v5580
  %v6100 = vunpack.c.l.b16 %v5581
  %v6101 = vunpack.c.l.b16 %v5582
  %v6102 = vunpack.c.l.b16 %v5583
  %v6103 = vunpack.c.l.b16 %v5584
  %v6104 = vunpack.c.l.b16 %v5585
  %v6105 = vunpack.c.l.b16 %v5586
  %v6106 = vunpack.c.l.b16 %v5587
  %v6107 = vunpack.c.l.b16 %v5588
  %v6108 = vunpack.c.l.b16 %v5589
  %v6109 = vunpack.c.l.b16 %v5590
  %v6110 = vunpack.c.l.b16 %v5591
  %v6111 = vunpack.c.l.b16 %v5592
  %v6112 = vunpack.c.l.b16 %v5593
  %v6113 = vunpack.c.l.b16 %v5594
  %v6114 = vunpack.c.l.b16 %v5595
  %v6115 = vunpack.c.l.b16 %v5596
  %v6116 = vunpack.c.l.b16 %v5597
  %v6117 = vunpack.c.l.b16 %v5598
  %v6118 = vunpack.c.l.b16 %v5599
  %v6119 = vunpack.c.l.b16 %v5600
  %v6120 = vunpack.c.l.b16 %v5601
  %v6121 = vunpack.c.l.b16 %v5602
  %v6122 = vunpack.c.l.b16 %v5603
  %v6123 = vunpack.c.l.b16 %v5604
  %v6124 = vunpack.c.l.b16 %v5605
  %v6125 = vunpack.c.l.b16 %v5606
  %v6126 = vunpack.c.l.b16 %v5607
  %v6127 = vunpack.c.l.b16 %v5608
  %v6128 = vunpack.c.l.b16 %v5609
  %v6129 = vunpack.c.l.b16 %v5610
  %v6130 = vunpack.c.l.b16 %v5611
  %v6131 = vunpack.c.l.b16 %v5612
  %v6132 = vunpack.c.l.b16 %v5613
  %v6133 = vunpack.c.l.b16 %v5614
  %v6134 = vunpack.c.l.b16 %v5615
  %v6135 = vunpack.c.l.b16 %v5616
  %v6136 = vunpack.c.l.b16 %v5617
  %v6137 = vunpack.c.l.b16 %v5618
  %v6138 = vunpack.c.l.b16 %v5619
  %v6139 = vunpack.c.l.b16 %v5620
  %v6140 = vunpack.c.l.b16 %v5621
  %v6141 = vunpack.c.l.b16 %v5622
  %v6142 = vunpack.c.l.b16 %v5623
  %v6143 = vunpack.c.l.b16 %v5624
  %v6144 = vunpack.c.l.b16 %v5625
  %v6145 = vunpack.c.l.b16 %v5626
  %v6146 = vunpack.c.l.b16 %v5627
  %v6147 = vunpack.c.l.b16 %v5628
  %v6148 = vunpack.c.l.b16 %v5629
  %v6149 = vunpack.c.l.b16 %v5630
  %v6150 = vunpack.c.l.b16 %v5631
  %v6151 = vunpack.c.l.b16 %v5632
  %v6152 = vunpack.c.l.b16 %v5633
  %v6153 = vunpack.c.l.b16 %v5634
  %v6154 = vunpack.c.l.b16 %v5635
  %v6155 = vunpack.c.l.b16 %v5636
  %v6156 = vunpack.c.l.b16 %v5637
  %v6157 = vunpack.c.l.b16 %v5638
  %v6158 = vunpack.c.l.b16 %v5639
  %v6159 = vunpack.c.l.b16 %v5640
  %v6160 = vunpack.c.l.b16 %v5641
  %v6161 = vunpack.c.l.b16 %v5642
  %v6162 = vunpack.c.l.b16 %v5643
  %v6163 = vunpack.c.l.b16 %v5644
  %v6164 = vunpack.c.l.b16 %v5645
  %v6165 = vunpack.c.l.b16 %v5646
  %v6166 = vrot.slane %v5911, 7
  %v6167 = vsel %vm1047, %v6166, %v5910
  %v6168 = vrot.slane %v5912, 6
  %v6169 = vsel %vm1050, %v6168, %v6167
  %v6170 = vrot.slane %v5913, 5
  %v6171 = vsel %vm1053, %v6170, %v6169
  %v6172 = vrot.slane %v5914, 4
  %v6173 = vsel %vm1056, %v6172, %v6171
  %v6174 = vrot.slane %v5915, 3
  %v6175 = vsel %vm1059, %v6174, %v6173
  %v6176 = vrot.slane %v5916, 2
  %v6177 = vsel %vm1062, %v6176, %v6175
  %v6178 = vrot.slane %v5917, 1
  %v6179 = vsel %vm1065, %v6178, %v6177
  %v6180 = vrot.slane %v5919, 7
  %v6181 = vsel %vm1047, %v6180, %v5918
  %v6182 = vrot.slane %v5920, 6
  %v6183 = vsel %vm1050, %v6182, %v6181
  %v6184 = vrot.slane %v5921, 5
  %v6185 = vsel %vm1053, %v6184, %v6183
  %v6186 = vrot.slane %v5922, 4
  %v6187 = vsel %vm1056, %v6186, %v6185
  %v6188 = vrot.slane %v5923, 3
  %v6189 = vsel %vm1059, %v6188, %v6187
  %v6190 = vrot.slane %v5924, 2
  %v6191 = vsel %vm1062, %v6190, %v6189
  %v6192 = vrot.slane %v5925, 1
  %v6193 = vsel %vm1065, %v6192, %v6191
  %v6194 = vrot.slane %v5927, 7
  %v6195 = vsel %vm1047, %v6194, %v5926
  %v6196 = vrot.slane %v5928, 6
  %v6197 = vsel %vm1050, %v6196, %v6195
  %v6198 = vrot.slane %v5929, 5
  %v6199 = vsel %vm1053, %v6198, %v6197
  %v6200 = vrot.slane %v5930, 4
  %v6201 = vsel %vm1056, %v6200, %v6199
  %v6202 = vrot.slane %v5931, 3
  %v6203 = vsel %vm1059, %v6202, %v6201
  %v6204 = vrot.slane %v5932, 2
  %v6205 = vsel %vm1062, %v6204, %v6203
  %v6206 = vrot.slane %v5933, 1
  %v6207 = vsel %vm1065, %v6206, %v6205
  %v6208 = vrot.slane %v5935, 7
  %v6209 = vsel %vm1047, %v6208, %v5934
  %v6210 = vrot.slane %v5936, 6
  %v6211 = vsel %vm1050, %v6210, %v6209
  %v6212 = vrot.slane %v5937, 5
  %v6213 = vsel %vm1053, %v6212, %v6211
  %v6214 = vrot.slane %v5938, 4
  %v6215 = vsel %vm1056, %v6214, %v6213
  %v6216 = vrot.slane %v5939, 3
  %v6217 = vsel %vm1059, %v6216, %v6215
  %v6218 = vrot.slane %v5940, 2
  %v6219 = vsel %vm1062, %v6218, %v6217
  %v6220 = vrot.slane %v5941, 1
  %v6221 = vsel %vm1065, %v6220, %v6219
  %v6222 = vrot.slane %v5943, 7
  %v6223 = vsel %vm1047, %v6222, %v5942
  %v6224 = vrot.slane %v5944, 6
  %v6225 = vsel %vm1050, %v6224, %v6223
  %v6226 = vrot.slane %v5945, 5
  %v6227 = vsel %vm1053, %v6226, %v6225
  %v6228 = vrot.slane %v5946, 4
  %v6229 = vsel %vm1056, %v6228, %v6227
  %v6230 = vrot.slane %v5947, 3
  %v6231 = vsel %vm1059, %v6230, %v6229
  %v6232 = vrot.slane %v5948, 2
  %v6233 = vsel %vm1062, %v6232, %v6231
  %v6234 = vrot.slane %v5949, 1
  %v6235 = vsel %vm1065, %v6234, %v6233
  %v6236 = vrot.slane %v5951, 7
  %v6237 = vsel %vm1047, %v6236, %v5950
  %v6238 = vrot.slane %v5952, 6
  %v6239 = vsel %vm1050, %v6238, %v6237
  %v6240 = vrot.slane %v5953, 5
  %v6241 = vsel %vm1053, %v6240, %v6239
  %v6242 = vrot.slane %v5954, 4
  %v6243 = vsel %vm1056, %v6242, %v6241
  %v6244 = vrot.slane %v5955, 3
  %v6245 = vsel %vm1059, %v6244, %v6243
  %v6246 = vrot.slane %v5956, 2
  %v6247 = vsel %vm1062, %v6246, %v6245
  %v6248 = vrot.slane %v5957, 1
  %v6249 = vsel %vm1065, %v6248, %v6247
  %v6250 = vrot.slane %v5959, 7
  %v6251 = vsel %vm1047, %v6250, %v5958
  %v6252 = vrot.slane %v5960, 6
  %v6253 = vsel %vm1050, %v6252, %v6251
  %v6254 = vrot.slane %v5961, 5
  %v6255 = vsel %vm1053, %v6254, %v6253
  %v6256 = vrot.slane %v5962, 4
  %v6257 = vsel %vm1056, %v6256, %v6255
  %v6258 = vrot.slane %v5963, 3
  %v6259 = vsel %vm1059, %v6258, %v6257
  %v6260 = vrot.slane %v5964, 2
  %v6261 = vsel %vm1062, %v6260, %v6259
  %v6262 = vrot.slane %v5965, 1
  %v6263 = vsel %vm1065, %v6262, %v6261
  %v6264 = vrot.slane %v5967, 7
  %v6265 = vsel %vm1047, %v6264, %v5966
  %v6266 = vrot.slane %v5968, 6
  %v6267 = vsel %vm1050, %v6266, %v6265
  %v6268 = vrot.slane %v5969, 5
  %v6269 = vsel %vm1053, %v6268, %v6267
  %v6270 = vrot.slane %v5970, 4
  %v6271 = vsel %vm1056, %v6270, %v6269
  %v6272 = vrot.slane %v5971, 3
  %v6273 = vsel %vm1059, %v6272, %v6271
  %v6274 = vrot.slane %v5972, 2
  %v6275 = vsel %vm1062, %v6274, %v6273
  %v6276 = vrot.slane %v5973, 1
  %v6277 = vsel %vm1065, %v6276, %v6275
  %v6278 = vrot.slane %v5975, 7
  %v6279 = vsel %vm1047, %v6278, %v5974
  %v6280 = vrot.slane %v5976, 6
  %v6281 = vsel %vm1050, %v6280, %v6279
  %v6282 = vrot.slane %v5977, 5
  %v6283 = vsel %vm1053, %v6282, %v6281
  %v6284 = vrot.slane %v5978, 4
  %v6285 = vsel %vm1056, %v6284, %v6283
  %v6286 = vrot.slane %v5979, 3
  %v6287 = vsel %vm1059, %v6286, %v6285
  %v6288 = vrot.slane %v5980, 2
  %v6289 = vsel %vm1062, %v6288, %v6287
  %v6290 = vrot.slane %v5981, 1
  %v6291 = vsel %vm1065, %v6290, %v6289
  %v6292 = vrot.slane %v5983, 7
  %v6293 = vsel %vm1047, %v6292, %v5982
  %v6294 = vrot.slane %v5984, 6
  %v6295 = vsel %vm1050, %v6294, %v6293
  %v6296 = vrot.slane %v5985, 5
  %v6297 = vsel %vm1053, %v6296, %v6295
  %v6298 = vrot.slane %v5986, 4
  %v6299 = vsel %vm1056, %v6298, %v6297
  %v6300 = vrot.slane %v5987, 3
  %v6301 = vsel %vm1059, %v6300, %v6299
  %v6302 = vrot.slane %v5988, 2
  %v6303 = vsel %vm1062, %v6302, %v6301
  %v6304 = vrot.slane %v5989, 1
  %v6305 = vsel %vm1065, %v6304, %v6303
  %v6306 = vrot.slane %v5991, 7
  %v6307 = vsel %vm1047, %v6306, %v5990
  %v6308 = vrot.slane %v5992, 6
  %v6309 = vsel %vm1050, %v6308, %v6307
  %v6310 = vrot.slane %v5993, 5
  %v6311 = vsel %vm1053, %v6310, %v6309
  %v6312 = vrot.slane %v5994, 4
  %v6313 = vsel %vm1056, %v6312, %v6311
  %v6314 = vrot.slane %v5995, 3
  %v6315 = vsel %vm1059, %v6314, %v6313
  %v6316 = vrot.slane %v5996, 2
  %v6317 = vsel %vm1062, %v6316, %v6315
  %v6318 = vrot.slane %v5997, 1
  %v6319 = vsel %vm1065, %v6318, %v6317
  %v6320 = vrot.slane %v5999, 7
  %v6321 = vsel %vm1047, %v6320, %v5998
  %v6322 = vrot.slane %v6000, 6
  %v6323 = vsel %vm1050, %v6322, %v6321
  %v6324 = vrot.slane %v6001, 5
  %v6325 = vsel %vm1053, %v6324, %v6323
  %v6326 = vrot.slane %v6002, 4
  %v6327 = vsel %vm1056, %v6326, %v6325
  %v6328 = vrot.slane %v6003, 3
  %v6329 = vsel %vm1059, %v6328, %v6327
  %v6330 = vrot.slane %v6004, 2
  %v6331 = vsel %vm1062, %v6330, %v6329
  %v6332 = vrot.slane %v6005, 1
  %v6333 = vsel %vm1065, %v6332, %v6331
  %v6334 = vrot.slane %v6007, 7
  %v6335 = vsel %vm1047, %v6334, %v6006
  %v6336 = vrot.slane %v6008, 6
  %v6337 = vsel %vm1050, %v6336, %v6335
  %v6338 = vrot.slane %v6009, 5
  %v6339 = vsel %vm1053, %v6338, %v6337
  %v6340 = vrot.slane %v6010, 4
  %v6341 = vsel %vm1056, %v6340, %v6339
  %v6342 = vrot.slane %v6011, 3
  %v6343 = vsel %vm1059, %v6342, %v6341
  %v6344 = vrot.slane %v6012, 2
  %v6345 = vsel %vm1062, %v6344, %v6343
  %v6346 = vrot.slane %v6013, 1
  %v6347 = vsel %vm1065, %v6346, %v6345
  %v6348 = vrot.slane %v6015, 7
  %v6349 = vsel %vm1047, %v6348, %v6014
  %v6350 = vrot.slane %v6016, 6
  %v6351 = vsel %vm1050, %v6350, %v6349
  %v6352 = vrot.slane %v6017, 5
  %v6353 = vsel %vm1053, %v6352, %v6351
  %v6354 = vrot.slane %v6018, 4
  %v6355 = vsel %vm1056, %v6354, %v6353
  %v6356 = vrot.slane %v6019, 3
  %v6357 = vsel %vm1059, %v6356, %v6355
  %v6358 = vrot.slane %v6020, 2
  %v6359 = vsel %vm1062, %v6358, %v6357
  %v6360 = vrot.slane %v6021, 1
  %v6361 = vsel %vm1065, %v6360, %v6359
  %v6362 = vrot.slane %v6023, 7
  %v6363 = vsel %vm1047, %v6362, %v6022
  %v6364 = vrot.slane %v6024, 6
  %v6365 = vsel %vm1050, %v6364, %v6363
  %v6366 = vrot.slane %v6025, 5
  %v6367 = vsel %vm1053, %v6366, %v6365
  %v6368 = vrot.slane %v6026, 4
  %v6369 = vsel %vm1056, %v6368, %v6367
  %v6370 = vrot.slane %v6027, 3
  %v6371 = vsel %vm1059, %v6370, %v6369
  %v6372 = vrot.slane %v6028, 2
  %v6373 = vsel %vm1062, %v6372, %v6371
  %v6374 = vrot.slane %v6029, 1
  %v6375 = vsel %vm1065, %v6374, %v6373
  %v6376 = vrot.slane %v6031, 7
  %v6377 = vsel %vm1047, %v6376, %v6030
  %v6378 = vrot.slane %v6032, 6
  %v6379 = vsel %vm1050, %v6378, %v6377
  %v6380 = vrot.slane %v6033, 5
  %v6381 = vsel %vm1053, %v6380, %v6379
  %v6382 = vrot.slane %v6034, 4
  %v6383 = vsel %vm1056, %v6382, %v6381
  %v6384 = vrot.slane %v6035, 3
  %v6385 = vsel %vm1059, %v6384, %v6383
  %v6386 = vrot.slane %v6036, 2
  %v6387 = vsel %vm1062, %v6386, %v6385
  %v6388 = vrot.slane %v6037, 1
  %v6389 = vsel %vm1065, %v6388, %v6387
  %v6390 = vrot.slane %v6039, 7
  %v6391 = vsel %vm1047, %v6390, %v6038
  %v6392 = vrot.slane %v6040, 6
  %v6393 = vsel %vm1050, %v6392, %v6391
  %v6394 = vrot.slane %v6041, 5
  %v6395 = vsel %vm1053, %v6394, %v6393
  %v6396 = vrot.slane %v6042, 4
  %v6397 = vsel %vm1056, %v6396, %v6395
  %v6398 = vrot.slane %v6043, 3
  %v6399 = vsel %vm1059, %v6398, %v6397
  %v6400 = vrot.slane %v6044, 2
  %v6401 = vsel %vm1062, %v6400, %v6399
  %v6402 = vrot.slane %v6045, 1
  %v6403 = vsel %vm1065, %v6402, %v6401
  %v6404 = vrot.slane %v6047, 7
  %v6405 = vsel %vm1047, %v6404, %v6046
  %v6406 = vrot.slane %v6048, 6
  %v6407 = vsel %vm1050, %v6406, %v6405
  %v6408 = vrot.slane %v6049, 5
  %v6409 = vsel %vm1053, %v6408, %v6407
  %v6410 = vrot.slane %v6050, 4
  %v6411 = vsel %vm1056, %v6410, %v6409
  %v6412 = vrot.slane %v6051, 3
  %v6413 = vsel %vm1059, %v6412, %v6411
  %v6414 = vrot.slane %v6052, 2
  %v6415 = vsel %vm1062, %v6414, %v6413
  %v6416 = vrot.slane %v6053, 1
  %v6417 = vsel %vm1065, %v6416, %v6415
  %v6418 = vrot.slane %v6055, 7
  %v6419 = vsel %vm1047, %v6418, %v6054
  %v6420 = vrot.slane %v6056, 6
  %v6421 = vsel %vm1050, %v6420, %v6419
  %v6422 = vrot.slane %v6057, 5
  %v6423 = vsel %vm1053, %v6422, %v6421
  %v6424 = vrot.slane %v6058, 4
  %v6425 = vsel %vm1056, %v6424, %v6423
  %v6426 = vrot.slane %v6059, 3
  %v6427 = vsel %vm1059, %v6426, %v6425
  %v6428 = vrot.slane %v6060, 2
  %v6429 = vsel %vm1062, %v6428, %v6427
  %v6430 = vrot.slane %v6061, 1
  %v6431 = vsel %vm1065, %v6430, %v6429
  %v6432 = vrot.slane %v6063, 7
  %v6433 = vsel %vm1047, %v6432, %v6062
  %v6434 = vrot.slane %v6064, 6
  %v6435 = vsel %vm1050, %v6434, %v6433
  %v6436 = vrot.slane %v6065, 5
  %v6437 = vsel %vm1053, %v6436, %v6435
  %v6438 = vrot.slane %v6066, 4
  %v6439 = vsel %vm1056, %v6438, %v6437
  %v6440 = vrot.slane %v6067, 3
  %v6441 = vsel %vm1059, %v6440, %v6439
  %v6442 = vrot.slane %v6068, 2
  %v6443 = vsel %vm1062, %v6442, %v6441
  %v6444 = vrot.slane %v6069, 1
  %v6445 = vsel %vm1065, %v6444, %v6443
  %v6446 = vrot.slane %v6071, 7
  %v6447 = vsel %vm1047, %v6446, %v6070
  %v6448 = vrot.slane %v6072, 6
  %v6449 = vsel %vm1050, %v6448, %v6447
  %v6450 = vrot.slane %v6073, 5
  %v6451 = vsel %vm1053, %v6450, %v6449
  %v6452 = vrot.slane %v6074, 4
  %v6453 = vsel %vm1056, %v6452, %v6451
  %v6454 = vrot.slane %v6075, 3
  %v6455 = vsel %vm1059, %v6454, %v6453
  %v6456 = vrot.slane %v6076, 2
  %v6457 = vsel %vm1062, %v6456, %v6455
  %v6458 = vrot.slane %v6077, 1
  %v6459 = vsel %vm1065, %v6458, %v6457
  %v6460 = vrot.slane %v6079, 7
  %v6461 = vsel %vm1047, %v6460, %v6078
  %v6462 = vrot.slane %v6080, 6
  %v6463 = vsel %vm1050, %v6462, %v6461
  %v6464 = vrot.slane %v6081, 5
  %v6465 = vsel %vm1053, %v6464, %v6463
  %v6466 = vrot.slane %v6082, 4
  %v6467 = vsel %vm1056, %v6466, %v6465
  %v6468 = vrot.slane %v6083, 3
  %v6469 = vsel %vm1059, %v6468, %v6467
  %v6470 = vrot.slane %v6084, 2
  %v6471 = vsel %vm1062, %v6470, %v6469
  %v6472 = vrot.slane %v6085, 1
  %v6473 = vsel %vm1065, %v6472, %v6471
  %v6474 = vrot.slane %v6087, 7
  %v6475 = vsel %vm1047, %v6474, %v6086
  %v6476 = vrot.slane %v6088, 6
  %v6477 = vsel %vm1050, %v6476, %v6475
  %v6478 = vrot.slane %v6089, 5
  %v6479 = vsel %vm1053, %v6478, %v6477
  %v6480 = vrot.slane %v6090, 4
  %v6481 = vsel %vm1056, %v6480, %v6479
  %v6482 = vrot.slane %v6091, 3
  %v6483 = vsel %vm1059, %v6482, %v6481
  %v6484 = vrot.slane %v6092, 2
  %v6485 = vsel %vm1062, %v6484, %v6483
  %v6486 = vrot.slane %v6093, 1
  %v6487 = vsel %vm1065, %v6486, %v6485
  %v6488 = vrot.slane %v6095, 7
  %v6489 = vsel %vm1047, %v6488, %v6094
  %v6490 = vrot.slane %v6096, 6
  %v6491 = vsel %vm1050, %v6490, %v6489
  %v6492 = vrot.slane %v6097, 5
  %v6493 = vsel %vm1053, %v6492, %v6491
  %v6494 = vrot.slane %v6098, 4
  %v6495 = vsel %vm1056, %v6494, %v6493
  %v6496 = vrot.slane %v6099, 3
  %v6497 = vsel %vm1059, %v6496, %v6495
  %v6498 = vrot.slane %v6100, 2
  %v6499 = vsel %vm1062, %v6498, %v6497
  %v6500 = vrot.slane %v6101, 1
  %v6501 = vsel %vm1065, %v6500, %v6499
  %v6502 = vrot.slane %v6103, 7
  %v6503 = vsel %vm1047, %v6502, %v6102
  %v6504 = vrot.slane %v6104, 6
  %v6505 = vsel %vm1050, %v6504, %v6503
  %v6506 = vrot.slane %v6105, 5
  %v6507 = vsel %vm1053, %v6506, %v6505
  %v6508 = vrot.slane %v6106, 4
  %v6509 = vsel %vm1056, %v6508, %v6507
  %v6510 = vrot.slane %v6107, 3
  %v6511 = vsel %vm1059, %v6510, %v6509
  %v6512 = vrot.slane %v6108, 2
  %v6513 = vsel %vm1062, %v6512, %v6511
  %v6514 = vrot.slane %v6109, 1
  %v6515 = vsel %vm1065, %v6514, %v6513
  %v6516 = vrot.slane %v6111, 7
  %v6517 = vsel %vm1047, %v6516, %v6110
  %v6518 = vrot.slane %v6112, 6
  %v6519 = vsel %vm1050, %v6518, %v6517
  %v6520 = vrot.slane %v6113, 5
  %v6521 = vsel %vm1053, %v6520, %v6519
  %v6522 = vrot.slane %v6114, 4
  %v6523 = vsel %vm1056, %v6522, %v6521
  %v6524 = vrot.slane %v6115, 3
  %v6525 = vsel %vm1059, %v6524, %v6523
  %v6526 = vrot.slane %v6116, 2
  %v6527 = vsel %vm1062, %v6526, %v6525
  %v6528 = vrot.slane %v6117, 1
  %v6529 = vsel %vm1065, %v6528, %v6527
  %v6530 = vrot.slane %v6119, 7
  %v6531 = vsel %vm1047, %v6530, %v6118
  %v6532 = vrot.slane %v6120, 6
  %v6533 = vsel %vm1050, %v6532, %v6531
  %v6534 = vrot.slane %v6121, 5
  %v6535 = vsel %vm1053, %v6534, %v6533
  %v6536 = vrot.slane %v6122, 4
  %v6537 = vsel %vm1056, %v6536, %v6535
  %v6538 = vrot.slane %v6123, 3
  %v6539 = vsel %vm1059, %v6538, %v6537
  %v6540 = vrot.slane %v6124, 2
  %v6541 = vsel %vm1062, %v6540, %v6539
  %v6542 = vrot.slane %v6125, 1
  %v6543 = vsel %vm1065, %v6542, %v6541
  %v6544 = vrot.slane %v6127, 7
  %v6545 = vsel %vm1047, %v6544, %v6126
  %v6546 = vrot.slane %v6128, 6
  %v6547 = vsel %vm1050, %v6546, %v6545
  %v6548 = vrot.slane %v6129, 5
  %v6549 = vsel %vm1053, %v6548, %v6547
  %v6550 = vrot.slane %v6130, 4
  %v6551 = vsel %vm1056, %v6550, %v6549
  %v6552 = vrot.slane %v6131, 3
  %v6553 = vsel %vm1059, %v6552, %v6551
  %v6554 = vrot.slane %v6132, 2
  %v6555 = vsel %vm1062, %v6554, %v6553
  %v6556 = vrot.slane %v6133, 1
  %v6557 = vsel %vm1065, %v6556, %v6555
  %v6558 = vrot.slane %v6135, 7
  %v6559 = vsel %vm1047, %v6558, %v6134
  %v6560 = vrot.slane %v6136, 6
  %v6561 = vsel %vm1050, %v6560, %v6559
  %v6562 = vrot.slane %v6137, 5
  %v6563 = vsel %vm1053, %v6562, %v6561
  %v6564 = vrot.slane %v6138, 4
  %v6565 = vsel %vm1056, %v6564, %v6563
  %v6566 = vrot.slane %v6139, 3
  %v6567 = vsel %vm1059, %v6566, %v6565
  %v6568 = vrot.slane %v6140, 2
  %v6569 = vsel %vm1062, %v6568, %v6567
  %v6570 = vrot.slane %v6141, 1
  %v6571 = vsel %vm1065, %v6570, %v6569
  %v6572 = vrot.slane %v6143, 7
  %v6573 = vsel %vm1047, %v6572, %v6142
  %v6574 = vrot.slane %v6144, 6
  %v6575 = vsel %vm1050, %v6574, %v6573
  %v6576 = vrot.slane %v6145, 5
  %v6577 = vsel %vm1053, %v6576, %v6575
  %v6578 = vrot.slane %v6146, 4
  %v6579 = vsel %vm1056, %v6578, %v6577
  %v6580 = vrot.slane %v6147, 3
  %v6581 = vsel %vm1059, %v6580, %v6579
  %v6582 = vrot.slane %v6148, 2
  %v6583 = vsel %vm1062, %v6582, %v6581
  %v6584 = vrot.slane %v6149, 1
  %v6585 = vsel %vm1065, %v6584, %v6583
  %v6586 = vrot.slane %v6151, 7
  %v6587 = vsel %vm1047, %v6586, %v6150
  %v6588 = vrot.slane %v6152, 6
  %v6589 = vsel %vm1050, %v6588, %v6587
  %v6590 = vrot.slane %v6153, 5
  %v6591 = vsel %vm1053, %v6590, %v6589
  %v6592 = vrot.slane %v6154, 4
  %v6593 = vsel %vm1056, %v6592, %v6591
  %v6594 = vrot.slane %v6155, 3
  %v6595 = vsel %vm1059, %v6594, %v6593
  %v6596 = vrot.slane %v6156, 2
  %v6597 = vsel %vm1062, %v6596, %v6595
  %v6598 = vrot.slane %v6157, 1
  %v6599 = vsel %vm1065, %v6598, %v6597
  %v6600 = vrot.slane %v6159, 7
  %v6601 = vsel %vm1047, %v6600, %v6158
  %v6602 = vrot.slane %v6160, 6
  %v6603 = vsel %vm1050, %v6602, %v6601
  %v6604 = vrot.slane %v6161, 5
  %v6605 = vsel %vm1053, %v6604, %v6603
  %v6606 = vrot.slane %v6162, 4
  %v6607 = vsel %vm1056, %v6606, %v6605
  %v6608 = vrot.slane %v6163, 3
  %v6609 = vsel %vm1059, %v6608, %v6607
  %v6610 = vrot.slane %v6164, 2
  %v6611 = vsel %vm1062, %v6610, %v6609
  %v6612 = vrot.slane %v6165, 1
  %v6613 = vsel %vm1065, %v6612, %v6611
  %v6614 = vpack.c.b16 %v6193, %v6179
  %v6615 = vpack.c.b16 %v6221, %v6207
  %v6616 = vpack.c.b16 %v6249, %v6235
  %v6617 = vpack.c.b16 %v6277, %v6263
  %v6618 = vpack.c.b16 %v6305, %v6291
  %v6619 = vpack.c.b16 %v6333, %v6319
  %v6620 = vpack.c.b16 %v6361, %v6347
  %v6621 = vpack.c.b16 %v6389, %v6375
  %v6622 = vpack.c.b16 %v6417, %v6403
  %v6623 = vpack.c.b16 %v6445, %v6431
  %v6624 = vpack.c.b16 %v6473, %v6459
  %v6625 = vpack.c.b16 %v6501, %v6487
  %v6626 = vpack.c.b16 %v6529, %v6515
  %v6627 = vpack.c.b16 %v6557, %v6543
  %v6628 = vpack.c.b16 %v6585, %v6571
  %v6629 = vpack.c.b16 %v6613, %v6599
  %v6631 = vsel %vm1517, %v6614, 0
  %v6634 = vsel %vm1517, %v6615, 0
  %v6637 = vsel %vm1517, %v6616, 0
  %v6640 = vsel %vm1517, %v6617, 0
  %v6643 = vsel %vm1517, %v6618, 0
  %v6646 = vsel %vm1517, %v6619, 0
  %v6649 = vsel %vm1517, %v6620, 0
  %v6652 = vsel %vm1517, %v6621, 0
  %v6655 = vsel %vm1517, %v6622, 0
  %v6658 = vsel %vm1517, %v6623, 0
  %v6661 = vsel %vm1517, %v6624, 0
  %v6664 = vsel %vm1517, %v6625, 0
  %v6667 = vsel %vm1517, %v6626, 0
  %v6670 = vsel %vm1517, %v6627, 0
  %v6673 = vsel %vm1517, %v6628, 0
  %v6676 = vsel %vm1517, %v6629, 0
  %6678 = vmatprep.subr.bf16.mxu0 0
  %6679 = vmatpush1.bf16.msra.mxu0 %v5652
  %6680 = vmatprep.subr.bf16.mxu0 0
  %6681 = vmatpush1.bf16.msra.mxu0 %v5653
  %6682 = vmatprep.subr.bf16.mxu0 0
  %6683 = vmatpush1.bf16.msra.mxu0 0
  %6684 = vmatprep.subr.bf16.mxu0 0
  %6685 = vmatpush1.bf16.msra.mxu0 0
  %6686 = vmatprep.subr.bf16.mxu0 0
  %6687 = vmatpush1.bf16.msra.mxu0 0
  %6688 = vmatprep.subr.bf16.mxu0 0
  %6689 = vmatpush1.bf16.msra.mxu0 0
  %6690 = vmatprep.subr.bf16.mxu0 0
  %6691 = vmatpush1.bf16.msra.mxu0 0
  %6692 = vmatprep.subr.bf16.mxu0 0
  %6693 = vmatpush1.bf16.msra.mxu0 0
  %6694 = vmatprep.subr.bf16.mxu0 0
  %6695 = vmatpush1.bf16.msra.mxu0 0
  %6696 = vmatprep.subr.bf16.mxu0 0
  %6697 = vmatpush1.bf16.msra.mxu0 0
  %6698 = vmatprep.subr.bf16.mxu0 0
  %6699 = vmatpush1.bf16.msra.mxu0 0
  %6700 = vmatprep.subr.bf16.mxu0 0
  %6701 = vmatpush1.bf16.msra.mxu0 0
  %6702 = vmatprep.subr.bf16.mxu0 0
  %6703 = vmatpush1.bf16.msra.mxu0 0
  %6704 = vmatprep.subr.bf16.mxu0 0
  %6705 = vmatpush1.bf16.msra.mxu0 0
  %6706 = vmatprep.subr.bf16.mxu0 0
  %6707 = vmatpush1.bf16.msra.mxu0 0
  %6708 = vmatprep.subr.bf16.mxu0 0
  %6709 = vmatpush1.bf16.msra.mxu0 0
  %6710 = vmatprep.mubr.bf16.mxu0 0
  %6711 = vmatmul.mubr.bf16.gmra.mrb[0].mxu0 %v6631
  %v6712 = vpop.f32.mrb[0].mxu0
  %v6713 = vadd.f32 0.0, %v6712
  %v6714 = vpop.f32.mrb[0].mxu0
  %v6715 = vpop.f32.mrb[0].mxu0
  %v6716 = vadd.f32 0.0, %v6715
  %v6717 = vpop.f32.mrb[0].mxu0
  %6718 = vmatprep.mubr.bf16.mxu0 0
  %6719 = vmatmul.mubr.bf16.gmra.mrb[0].mxu0 %v6634
  %v6720 = vpop.f32.mrb[0].mxu0
  %v6721 = vadd.f32 0.0, %v6720
  %v6722 = vpop.f32.mrb[0].mxu0
  %v6723 = vpop.f32.mrb[0].mxu0
  %v6724 = vadd.f32 0.0, %v6723
  %v6725 = vpop.f32.mrb[0].mxu0
  %6726 = vmatprep.mubr.bf16.mxu0 0
  %6727 = vmatmul.mubr.bf16.gmra.mrb[0].mxu0 %v6637
  %v6728 = vpop.f32.mrb[0].mxu0
  %v6729 = vadd.f32 0.0, %v6728
  %v6730 = vpop.f32.mrb[0].mxu0
  %v6731 = vpop.f32.mrb[0].mxu0
  %v6732 = vadd.f32 0.0, %v6731
  %v6733 = vpop.f32.mrb[0].mxu0
  %6734 = vmatprep.mubr.bf16.mxu0 0
  %6735 = vmatmul.mubr.bf16.gmra.mrb[0].mxu0 %v6640
  %v6736 = vpop.f32.mrb[0].mxu0
  %v6737 = vadd.f32 0.0, %v6736
  %v6738 = vpop.f32.mrb[0].mxu0
  %v6739 = vpop.f32.mrb[0].mxu0
  %v6740 = vadd.f32 0.0, %v6739
  %v6741 = vpop.f32.mrb[0].mxu0
  %6742 = vmatprep.mubr.bf16.mxu0 0
  %6743 = vmatmul.mubr.bf16.gmra.mrb[0].mxu0 %v6643
  %v6744 = vpop.f32.mrb[0].mxu0
  %v6745 = vadd.f32 0.0, %v6744
  %v6746 = vpop.f32.mrb[0].mxu0
  %v6747 = vpop.f32.mrb[0].mxu0
  %v6748 = vadd.f32 0.0, %v6747
  %v6749 = vpop.f32.mrb[0].mxu0
  %6750 = vmatprep.mubr.bf16.mxu0 0
  %6751 = vmatmul.mubr.bf16.gmra.mrb[0].mxu0 %v6646
  %v6752 = vpop.f32.mrb[0].mxu0
  %v6753 = vadd.f32 0.0, %v6752
  %v6754 = vpop.f32.mrb[0].mxu0
  %v6755 = vpop.f32.mrb[0].mxu0
  %v6756 = vadd.f32 0.0, %v6755
  %v6757 = vpop.f32.mrb[0].mxu0
  %6758 = vmatprep.mubr.bf16.mxu0 0
  %6759 = vmatmul.mubr.bf16.gmra.mrb[0].mxu0 %v6649
  %v6760 = vpop.f32.mrb[0].mxu0
  %v6761 = vadd.f32 0.0, %v6760
  %v6762 = vpop.f32.mrb[0].mxu0
  %v6763 = vpop.f32.mrb[0].mxu0
  %v6764 = vadd.f32 0.0, %v6763
  %v6765 = vpop.f32.mrb[0].mxu0
  %6766 = vmatprep.mubr.bf16.mxu0 0
  %6767 = vmatmul.mubr.bf16.gmra.mrb[0].mxu0 %v6652
  %v6768 = vpop.f32.mrb[0].mxu0
  %v6769 = vadd.f32 0.0, %v6768
  %v6770 = vpop.f32.mrb[0].mxu0
  %v6771 = vpop.f32.mrb[0].mxu0
  %v6772 = vadd.f32 0.0, %v6771
  %v6773 = vpop.f32.mrb[0].mxu0
  %6774 = vmatprep.mubr.bf16.mxu0 0
  %6775 = vmatmul.mubr.bf16.gmra.mrb[0].mxu0 %v6655
  %v6776 = vpop.f32.mrb[0].mxu0
  %v6777 = vadd.f32 0.0, %v6776
  %v6778 = vpop.f32.mrb[0].mxu0
  %v6779 = vpop.f32.mrb[0].mxu0
  %v6780 = vadd.f32 0.0, %v6779
  %v6781 = vpop.f32.mrb[0].mxu0
  %6782 = vmatprep.mubr.bf16.mxu0 0
  %6783 = vmatmul.mubr.bf16.gmra.mrb[0].mxu0 %v6658
  %v6784 = vpop.f32.mrb[0].mxu0
  %v6785 = vadd.f32 0.0, %v6784
  %v6786 = vpop.f32.mrb[0].mxu0
  %v6787 = vpop.f32.mrb[0].mxu0
  %v6788 = vadd.f32 0.0, %v6787
  %v6789 = vpop.f32.mrb[0].mxu0
  %6790 = vmatprep.mubr.bf16.mxu0 0
  %6791 = vmatmul.mubr.bf16.gmra.mrb[0].mxu0 %v6661
  %v6792 = vpop.f32.mrb[0].mxu0
  %v6793 = vadd.f32 0.0, %v6792
  %v6794 = vpop.f32.mrb[0].mxu0
  %v6795 = vpop.f32.mrb[0].mxu0
  %v6796 = vadd.f32 0.0, %v6795
  %v6797 = vpop.f32.mrb[0].mxu0
  %6798 = vmatprep.mubr.bf16.mxu0 0
  %6799 = vmatmul.mubr.bf16.gmra.mrb[0].mxu0 %v6664
  %v6800 = vpop.f32.mrb[0].mxu0
  %v6801 = vadd.f32 0.0, %v6800
  %v6802 = vpop.f32.mrb[0].mxu0
  %v6803 = vpop.f32.mrb[0].mxu0
  %v6804 = vadd.f32 0.0, %v6803
  %v6805 = vpop.f32.mrb[0].mxu0
  %6806 = vmatprep.mubr.bf16.mxu0 0
  %6807 = vmatmul.mubr.bf16.gmra.mrb[0].mxu0 %v6667
  %v6808 = vpop.f32.mrb[0].mxu0
  %v6809 = vadd.f32 0.0, %v6808
  %v6810 = vpop.f32.mrb[0].mxu0
  %v6811 = vpop.f32.mrb[0].mxu0
  %v6812 = vadd.f32 0.0, %v6811
  %v6813 = vpop.f32.mrb[0].mxu0
  %6814 = vmatprep.mubr.bf16.mxu0 0
  %6815 = vmatmul.mubr.bf16.gmra.mrb[0].mxu0 %v6670
  %v6816 = vpop.f32.mrb[0].mxu0
  %v6817 = vadd.f32 0.0, %v6816
  %v6818 = vpop.f32.mrb[0].mxu0
  %v6819 = vpop.f32.mrb[0].mxu0
  %v6820 = vadd.f32 0.0, %v6819
  %v6821 = vpop.f32.mrb[0].mxu0
  %6822 = vmatprep.mubr.bf16.mxu0 0
  %6823 = vmatmul.mubr.bf16.gmra.mrb[0].mxu0 %v6673
  %v6824 = vpop.f32.mrb[0].mxu0
  %v6825 = vadd.f32 0.0, %v6824
  %v6826 = vpop.f32.mrb[0].mxu0
  %v6827 = vpop.f32.mrb[0].mxu0
  %v6828 = vadd.f32 0.0, %v6827
  %v6829 = vpop.f32.mrb[0].mxu0
  %6830 = vmatprep.mubr.bf16.mxu0 0
  %6831 = vmatmul.mubr.bf16.gmra.mrb[0].mxu0 %v6676
  %v6832 = vpop.f32.mrb[0].mxu0
  %v6833 = vadd.f32 0.0, %v6832
  %v6834 = vpop.f32.mrb[0].mxu0
  %v6835 = vpop.f32.mrb[0].mxu0
  %v6836 = vadd.f32 0.0, %v6835
  %v6837 = vpop.f32.mrb[0].mxu0
  %6838 = vdwg.mxu0
  %6871 = vrot.lane.b32.xlu0 %v3305, 16
  %v6872 = vpop.permute.xlu0 %6871
  %6873 = vrot.lane.b32.xlu0 %v3308, 16
  %v6874 = vpop.permute.xlu0 %6873
  %6875 = vrot.lane.b32.xlu0 %v3313, 16
  %v6876 = vpop.permute.xlu0 %6875
  %6877 = vrot.lane.b32.xlu0 %v3316, 16
  %v6878 = vpop.permute.xlu0 %6877
  %6879 = vrot.lane.b32.xlu0 %v3321, 16
  %v6880 = vpop.permute.xlu0 %6879
  %6881 = vrot.lane.b32.xlu0 %v3324, 16
  %v6882 = vpop.permute.xlu0 %6881
  %6883 = vrot.lane.b32.xlu0 %v3329, 16
  %v6884 = vpop.permute.xlu0 %6883
  %6885 = vrot.lane.b32.xlu0 %v3332, 16
  %v6886 = vpop.permute.xlu0 %6885
  %6887 = vrot.lane.b32.xlu0 %v3337, 16
  %v6888 = vpop.permute.xlu0 %6887
  %6889 = vrot.lane.b32.xlu0 %v3340, 16
  %v6890 = vpop.permute.xlu0 %6889
  %6891 = vrot.lane.b32.xlu0 %v3345, 16
  %v6892 = vpop.permute.xlu0 %6891
  %6893 = vrot.lane.b32.xlu0 %v3348, 16
  %v6894 = vpop.permute.xlu0 %6893
  %6895 = vrot.lane.b32.xlu0 %v3353, 16
  %v6896 = vpop.permute.xlu0 %6895
  %6897 = vrot.lane.b32.xlu0 %v3356, 16
  %v6898 = vpop.permute.xlu0 %6897
  %6899 = vrot.lane.b32.xlu0 %v3361, 16
  %v6900 = vpop.permute.xlu0 %6899
  %6901 = vrot.lane.b32.xlu0 %v3364, 16
  %v6902 = vpop.permute.xlu0 %6901
  %6903 = vrot.lane.b32.xlu0 %v3369, 16
  %v6904 = vpop.permute.xlu0 %6903
  %6905 = vrot.lane.b32.xlu0 %v3372, 16
  %v6906 = vpop.permute.xlu0 %6905
  %6907 = vrot.lane.b32.xlu0 %v3377, 16
  %v6908 = vpop.permute.xlu0 %6907
  %6909 = vrot.lane.b32.xlu0 %v3380, 16
  %v6910 = vpop.permute.xlu0 %6909
  %6911 = vrot.lane.b32.xlu0 %v3385, 16
  %v6912 = vpop.permute.xlu0 %6911
  %6913 = vrot.lane.b32.xlu0 %v3388, 16
  %v6914 = vpop.permute.xlu0 %6913
  %6915 = vrot.lane.b32.xlu0 %v3393, 16
  %v6916 = vpop.permute.xlu0 %6915
  %6917 = vrot.lane.b32.xlu0 %v3396, 16
  %v6918 = vpop.permute.xlu0 %6917
  %6919 = vrot.lane.b32.xlu0 %v3401, 16
  %v6920 = vpop.permute.xlu0 %6919
  %6921 = vrot.lane.b32.xlu0 %v3404, 16
  %v6922 = vpop.permute.xlu0 %6921
  %6923 = vrot.lane.b32.xlu0 %v3409, 16
  %v6924 = vpop.permute.xlu0 %6923
  %6925 = vrot.lane.b32.xlu0 %v3412, 16
  %v6926 = vpop.permute.xlu0 %6925
  %6927 = vrot.lane.b32.xlu0 %v3417, 16
  %v6928 = vpop.permute.xlu0 %6927
  %6929 = vrot.lane.b32.xlu0 %v3420, 16
  %v6930 = vpop.permute.xlu0 %6929
  %6931 = vrot.lane.b32.xlu0 %v3425, 16
  %v6932 = vpop.permute.xlu0 %6931
  %6933 = vrot.lane.b32.xlu0 %v3428, 16
  %v6934 = vpop.permute.xlu0 %6933
  %6999 = vrot.lane.b32.xlu0 %v5009, 32
  %v7000 = vpop.permute.xlu0 %6999
  %7001 = vrot.lane.b32.xlu0 %v5012, 32
  %v7002 = vpop.permute.xlu0 %7001
  %7003 = vrot.lane.b32.xlu0 %v5017, 32
  %v7004 = vpop.permute.xlu0 %7003
  %7005 = vrot.lane.b32.xlu0 %v5020, 32
  %v7006 = vpop.permute.xlu0 %7005
  %7007 = vrot.lane.b32.xlu0 %v5025, 32
  %v7008 = vpop.permute.xlu0 %7007
  %7009 = vrot.lane.b32.xlu0 %v5028, 32
  %v7010 = vpop.permute.xlu0 %7009
  %7011 = vrot.lane.b32.xlu0 %v5033, 32
  %v7012 = vpop.permute.xlu0 %7011
  %7013 = vrot.lane.b32.xlu0 %v5036, 32
  %v7014 = vpop.permute.xlu0 %7013
  %7015 = vrot.lane.b32.xlu0 %v5041, 32
  %v7016 = vpop.permute.xlu0 %7015
  %7017 = vrot.lane.b32.xlu0 %v5044, 32
  %v7018 = vpop.permute.xlu0 %7017
  %7019 = vrot.lane.b32.xlu0 %v5049, 32
  %v7020 = vpop.permute.xlu0 %7019
  %7021 = vrot.lane.b32.xlu0 %v5052, 32
  %v7022 = vpop.permute.xlu0 %7021
  %7023 = vrot.lane.b32.xlu0 %v5057, 32
  %v7024 = vpop.permute.xlu0 %7023
  %7025 = vrot.lane.b32.xlu0 %v5060, 32
  %v7026 = vpop.permute.xlu0 %7025
  %7027 = vrot.lane.b32.xlu0 %v5065, 32
  %v7028 = vpop.permute.xlu0 %7027
  %7029 = vrot.lane.b32.xlu0 %v5068, 32
  %v7030 = vpop.permute.xlu0 %7029
  %7031 = vrot.lane.b32.xlu0 %v5073, 32
  %v7032 = vpop.permute.xlu0 %7031
  %7033 = vrot.lane.b32.xlu0 %v5076, 32
  %v7034 = vpop.permute.xlu0 %7033
  %7035 = vrot.lane.b32.xlu0 %v5081, 32
  %v7036 = vpop.permute.xlu0 %7035
  %7037 = vrot.lane.b32.xlu0 %v5084, 32
  %v7038 = vpop.permute.xlu0 %7037
  %7039 = vrot.lane.b32.xlu0 %v5089, 32
  %v7040 = vpop.permute.xlu0 %7039
  %7041 = vrot.lane.b32.xlu0 %v5092, 32
  %v7042 = vpop.permute.xlu0 %7041
  %7043 = vrot.lane.b32.xlu0 %v5097, 32
  %v7044 = vpop.permute.xlu0 %7043
  %7045 = vrot.lane.b32.xlu0 %v5100, 32
  %v7046 = vpop.permute.xlu0 %7045
  %7047 = vrot.lane.b32.xlu0 %v5105, 32
  %v7048 = vpop.permute.xlu0 %7047
  %7049 = vrot.lane.b32.xlu0 %v5108, 32
  %v7050 = vpop.permute.xlu0 %7049
  %7051 = vrot.lane.b32.xlu0 %v5113, 32
  %v7052 = vpop.permute.xlu0 %7051
  %7053 = vrot.lane.b32.xlu0 %v5116, 32
  %v7054 = vpop.permute.xlu0 %7053
  %7055 = vrot.lane.b32.xlu0 %v5121, 32
  %v7056 = vpop.permute.xlu0 %7055
  %7057 = vrot.lane.b32.xlu0 %v5124, 32
  %v7058 = vpop.permute.xlu0 %7057
  %7059 = vrot.lane.b32.xlu0 %v5129, 32
  %v7060 = vpop.permute.xlu0 %7059
  %7061 = vrot.lane.b32.xlu0 %v5132, 32
  %v7062 = vpop.permute.xlu0 %7061
  %7127 = vrot.lane.b32.xlu0 %v6713, 48
  %v7128 = vpop.permute.xlu0 %7127
  %7129 = vrot.lane.b32.xlu0 %v6716, 48
  %v7130 = vpop.permute.xlu0 %7129
  %7131 = vrot.lane.b32.xlu0 %v6721, 48
  %v7132 = vpop.permute.xlu0 %7131
  %7133 = vrot.lane.b32.xlu0 %v6724, 48
  %v7134 = vpop.permute.xlu0 %7133
  %7135 = vrot.lane.b32.xlu0 %v6729, 48
  %v7136 = vpop.permute.xlu0 %7135
  %7137 = vrot.lane.b32.xlu0 %v6732, 48
  %v7138 = vpop.permute.xlu0 %7137
  %7139 = vrot.lane.b32.xlu0 %v6737, 48
  %v7140 = vpop.permute.xlu0 %7139
  %7141 = vrot.lane.b32.xlu0 %v6740, 48
  %v7142 = vpop.permute.xlu0 %7141
  %7143 = vrot.lane.b32.xlu0 %v6745, 48
  %v7144 = vpop.permute.xlu0 %7143
  %7145 = vrot.lane.b32.xlu0 %v6748, 48
  %v7146 = vpop.permute.xlu0 %7145
  %7147 = vrot.lane.b32.xlu0 %v6753, 48
  %v7148 = vpop.permute.xlu0 %7147
  %7149 = vrot.lane.b32.xlu0 %v6756, 48
  %v7150 = vpop.permute.xlu0 %7149
  %7151 = vrot.lane.b32.xlu0 %v6761, 48
  %v7152 = vpop.permute.xlu0 %7151
  %7153 = vrot.lane.b32.xlu0 %v6764, 48
  %v7154 = vpop.permute.xlu0 %7153
  %7155 = vrot.lane.b32.xlu0 %v6769, 48
  %v7156 = vpop.permute.xlu0 %7155
  %7157 = vrot.lane.b32.xlu0 %v6772, 48
  %v7158 = vpop.permute.xlu0 %7157
  %7159 = vrot.lane.b32.xlu0 %v6777, 48
  %v7160 = vpop.permute.xlu0 %7159
  %7161 = vrot.lane.b32.xlu0 %v6780, 48
  %v7162 = vpop.permute.xlu0 %7161
  %7163 = vrot.lane.b32.xlu0 %v6785, 48
  %v7164 = vpop.permute.xlu0 %7163
  %7165 = vrot.lane.b32.xlu0 %v6788, 48
  %v7166 = vpop.permute.xlu0 %7165
  %7167 = vrot.lane.b32.xlu0 %v6793, 48
  %v7168 = vpop.permute.xlu0 %7167
  %7169 = vrot.lane.b32.xlu0 %v6796, 48
  %v7170 = vpop.permute.xlu0 %7169
  %7171 = vrot.lane.b32.xlu0 %v6801, 48
  %v7172 = vpop.permute.xlu0 %7171
  %7173 = vrot.lane.b32.xlu0 %v6804, 48
  %v7174 = vpop.permute.xlu0 %7173
  %7175 = vrot.lane.b32.xlu0 %v6809, 48
  %v7176 = vpop.permute.xlu0 %7175
  %7177 = vrot.lane.b32.xlu0 %v6812, 48
  %v7178 = vpop.permute.xlu0 %7177
  %7179 = vrot.lane.b32.xlu0 %v6817, 48
  %v7180 = vpop.permute.xlu0 %7179
  %7181 = vrot.lane.b32.xlu0 %v6820, 48
  %v7182 = vpop.permute.xlu0 %7181
  %7183 = vrot.lane.b32.xlu0 %v6825, 48
  %v7184 = vpop.permute.xlu0 %7183
  %7185 = vrot.lane.b32.xlu0 %v6828, 48
  %v7186 = vpop.permute.xlu0 %7185
  %7187 = vrot.lane.b32.xlu0 %v6833, 48
  %v7188 = vpop.permute.xlu0 %7187
  %7189 = vrot.lane.b32.xlu0 %v6836, 48
  %v7190 = vpop.permute.xlu0 %7189
  %vm7223 = vcmask 130048
  %v7224 = vsel %vm7223, %v1601, %v6872
  %v7225 = vsel %vm7223, %v1604, %v6874
  %v7226 = vsel %vm7223, %v1609, %v6876
  %v7227 = vsel %vm7223, %v1612, %v6878
  %v7228 = vsel %vm7223, %v1617, %v6880
  %v7229 = vsel %vm7223, %v1620, %v6882
  %v7230 = vsel %vm7223, %v1625, %v6884
  %v7231 = vsel %vm7223, %v1628, %v6886
  %v7232 = vsel %vm7223, %v1633, %v6888
  %v7233 = vsel %vm7223, %v1636, %v6890
  %v7234 = vsel %vm7223, %v1641, %v6892
  %v7235 = vsel %vm7223, %v1644, %v6894
  %v7236 = vsel %vm7223, %v1649, %v6896
  %v7237 = vsel %vm7223, %v1652, %v6898
  %v7238 = vsel %vm7223, %v1657, %v6900
  %v7239 = vsel %vm7223, %v1660, %v6902
  %v7240 = vsel %vm7223, %v1665, %v6904
  %v7241 = vsel %vm7223, %v1668, %v6906
  %v7242 = vsel %vm7223, %v1673, %v6908
  %v7243 = vsel %vm7223, %v1676, %v6910
  %v7244 = vsel %vm7223, %v1681, %v6912
  %v7245 = vsel %vm7223, %v1684, %v6914
  %v7246 = vsel %vm7223, %v1689, %v6916
  %v7247 = vsel %vm7223, %v1692, %v6918
  %v7248 = vsel %vm7223, %v1697, %v6920
  %v7249 = vsel %vm7223, %v1700, %v6922
  %v7250 = vsel %vm7223, %v1705, %v6924
  %v7251 = vsel %vm7223, %v1708, %v6926
  %v7252 = vsel %vm7223, %v1713, %v6928
  %v7253 = vsel %vm7223, %v1716, %v6930
  %v7254 = vsel %vm7223, %v1721, %v6932
  %v7255 = vsel %vm7223, %v1724, %v6934
  %v7256 = vsel %vm1517, %v7224, %v7000
  %v7257 = vsel %vm1517, %v7225, %v7002
  %v7258 = vsel %vm1517, %v7226, %v7004
  %v7259 = vsel %vm1517, %v7227, %v7006
  %v7260 = vsel %vm1517, %v7228, %v7008
  %v7261 = vsel %vm1517, %v7229, %v7010
  %v7262 = vsel %vm1517, %v7230, %v7012
  %v7263 = vsel %vm1517, %v7231, %v7014
  %v7264 = vsel %vm1517, %v7232, %v7016
  %v7265 = vsel %vm1517, %v7233, %v7018
  %v7266 = vsel %vm1517, %v7234, %v7020
  %v7267 = vsel %vm1517, %v7235, %v7022
  %v7268 = vsel %vm1517, %v7236, %v7024
  %v7269 = vsel %vm1517, %v7237, %v7026
  %v7270 = vsel %vm1517, %v7238, %v7028
  %v7271 = vsel %vm1517, %v7239, %v7030
  %v7272 = vsel %vm1517, %v7240, %v7032
  %v7273 = vsel %vm1517, %v7241, %v7034
  %v7274 = vsel %vm1517, %v7242, %v7036
  %v7275 = vsel %vm1517, %v7243, %v7038
  %v7276 = vsel %vm1517, %v7244, %v7040
  %v7277 = vsel %vm1517, %v7245, %v7042
  %v7278 = vsel %vm1517, %v7246, %v7044
  %v7279 = vsel %vm1517, %v7247, %v7046
  %v7280 = vsel %vm1517, %v7248, %v7048
  %v7281 = vsel %vm1517, %v7249, %v7050
  %v7282 = vsel %vm1517, %v7250, %v7052
  %v7283 = vsel %vm1517, %v7251, %v7054
  %v7284 = vsel %vm1517, %v7252, %v7056
  %v7285 = vsel %vm1517, %v7253, %v7058
  %v7286 = vsel %vm1517, %v7254, %v7060
  %v7287 = vsel %vm1517, %v7255, %v7062
  %vm7288 = vcmask 392192
  %v7289 = vsel %vm7288, %v7256, %v7128
  %v7290 = vsel %vm7288, %v7257, %v7130
  %v7291 = vsel %vm7288, %v7258, %v7132
  %v7292 = vsel %vm7288, %v7259, %v7134
  %v7293 = vsel %vm7288, %v7260, %v7136
  %v7294 = vsel %vm7288, %v7261, %v7138
  %v7295 = vsel %vm7288, %v7262, %v7140
  %v7296 = vsel %vm7288, %v7263, %v7142
  %v7297 = vsel %vm7288, %v7264, %v7144
  %v7298 = vsel %vm7288, %v7265, %v7146
  %v7299 = vsel %vm7288, %v7266, %v7148
  %v7300 = vsel %vm7288, %v7267, %v7150
  %v7301 = vsel %vm7288, %v7268, %v7152
  %v7302 = vsel %vm7288, %v7269, %v7154
  %v7303 = vsel %vm7288, %v7270, %v7156
  %v7304 = vsel %vm7288, %v7271, %v7158
  %v7305 = vsel %vm7288, %v7272, %v7160
  %v7306 = vsel %vm7288, %v7273, %v7162
  %v7307 = vsel %vm7288, %v7274, %v7164
  %v7308 = vsel %vm7288, %v7275, %v7166
  %v7309 = vsel %vm7288, %v7276, %v7168
  %v7310 = vsel %vm7288, %v7277, %v7170
  %v7311 = vsel %vm7288, %v7278, %v7172
  %v7312 = vsel %vm7288, %v7279, %v7174
  %v7313 = vsel %vm7288, %v7280, %v7176
  %v7314 = vsel %vm7288, %v7281, %v7178
  %v7315 = vsel %vm7288, %v7282, %v7180
  %v7316 = vsel %vm7288, %v7283, %v7182
  %v7317 = vsel %vm7288, %v7284, %v7184
  %v7318 = vsel %vm7288, %v7285, %v7186
  %v7319 = vsel %vm7288, %v7286, %v7188
  %v7320 = vsel %vm7288, %v7287, %v7190
  %v7322 = vlaneseq
  %v7323 = vshrl.u32 %v7322, 7
  %v7324 = vsub.s32 0, %v7323
  %v7325 = vrot.slane %v15, %v7324
  %v7327 = vadd.f32 %v7289, %v7325
  %v7328 = vadd.f32 %v7290, %v7325
  %v7329 = vadd.f32 %v7291, %v7325
  %v7330 = vadd.f32 %v7292, %v7325
  %v7331 = vadd.f32 %v7293, %v7325
  %v7332 = vadd.f32 %v7294, %v7325
  %v7333 = vadd.f32 %v7295, %v7325
  %v7334 = vadd.f32 %v7296, %v7325
  %v7335 = vadd.f32 %v7297, %v7325
  %v7336 = vadd.f32 %v7298, %v7325
  %v7337 = vadd.f32 %v7299, %v7325
  %v7338 = vadd.f32 %v7300, %v7325
  %v7339 = vadd.f32 %v7301, %v7325
  %v7340 = vadd.f32 %v7302, %v7325
  %v7341 = vadd.f32 %v7303, %v7325
  %v7342 = vadd.f32 %v7304, %v7325
  %v7343 = vadd.f32 %v7305, %v7325
  %v7344 = vadd.f32 %v7306, %v7325
  %v7345 = vadd.f32 %v7307, %v7325
  %v7346 = vadd.f32 %v7308, %v7325
  %v7347 = vadd.f32 %v7309, %v7325
  %v7348 = vadd.f32 %v7310, %v7325
  %v7349 = vadd.f32 %v7311, %v7325
  %v7350 = vadd.f32 %v7312, %v7325
  %v7351 = vadd.f32 %v7313, %v7325
  %v7352 = vadd.f32 %v7314, %v7325
  %v7353 = vadd.f32 %v7315, %v7325
  %v7354 = vadd.f32 %v7316, %v7325
  %v7355 = vadd.f32 %v7317, %v7325
  %v7356 = vadd.f32 %v7318, %v7325
  %v7357 = vadd.f32 %v7319, %v7325
  %v7358 = vadd.f32 %v7320, %v7325
  %vm7359 = vcmask 523264
  %7360 = vst.msk [vmem:[%s3] sm:$0xff] %vm7359, %v7327
  %7361 = vst.msk [vmem:[%s3 + $0x8] sm:$0xff] %vm7359, %v7328
  %7362 = vst.msk [vmem:[%s3 + $0x10] sm:$0xff] %vm7359, %v7329
  %7363 = vst.msk [vmem:[%s3 + $0x18] sm:$0xff] %vm7359, %v7330
  %7364 = vst.msk [vmem:[%s3 + $0x20] sm:$0xff] %vm7359, %v7331
  %7365 = vst.msk [vmem:[%s3 + $0x28] sm:$0xff] %vm7359, %v7332
  %7366 = vst.msk [vmem:[%s3 + $0x30] sm:$0xff] %vm7359, %v7333
  %7367 = vst.msk [vmem:[%s3 + $0x38] sm:$0xff] %vm7359, %v7334
  %7368 = vst.msk [vmem:[%s3 + $0x40] sm:$0xff] %vm7359, %v7335
  %7369 = vst.msk [vmem:[%s3 + $0x48] sm:$0xff] %vm7359, %v7336
  %7370 = vst.msk [vmem:[%s3 + $0x50] sm:$0xff] %vm7359, %v7337
  %7371 = vst.msk [vmem:[%s3 + $0x58] sm:$0xff] %vm7359, %v7338
  %7372 = vst.msk [vmem:[%s3 + $0x60] sm:$0xff] %vm7359, %v7339
  %7373 = vst.msk [vmem:[%s3 + $0x68] sm:$0xff] %vm7359, %v7340
  %7374 = vst.msk [vmem:[%s3 + $0x70] sm:$0xff] %vm7359, %v7341
  %7375 = vst.msk [vmem:[%s3 + $0x78] sm:$0xff] %vm7359, %v7342
  %7376 = vst.msk [vmem:[%s3 + $0x80] sm:$0xff] %vm7359, %v7343
  %7377 = vst.msk [vmem:[%s3 + $0x88] sm:$0xff] %vm7359, %v7344
  %7378 = vst.msk [vmem:[%s3 + $0x90] sm:$0xff] %vm7359, %v7345
  %7379 = vst.msk [vmem:[%s3 + $0x98] sm:$0xff] %vm7359, %v7346
  %7380 = vst.msk [vmem:[%s3 + $0xa0] sm:$0xff] %vm7359, %v7347
  %7381 = vst.msk [vmem:[%s3 + $0xa8] sm:$0xff] %vm7359, %v7348
  %7382 = vst.msk [vmem:[%s3 + $0xb0] sm:$0xff] %vm7359, %v7349
  %7383 = vst.msk [vmem:[%s3 + $0xb8] sm:$0xff] %vm7359, %v7350
  %7384 = vst.msk [vmem:[%s3 + $0xc0] sm:$0xff] %vm7359, %v7351
  %7385 = vst.msk [vmem:[%s3 + $0xc8] sm:$0xff] %vm7359, %v7352
  %7386 = vst.msk [vmem:[%s3 + $0xd0] sm:$0xff] %vm7359, %v7353
  %7387 = vst.msk [vmem:[%s3 + $0xd8] sm:$0xff] %vm7359, %v7354
  %7388 = vst.msk [vmem:[%s3 + $0xe0] sm:$0xff] %vm7359, %v7355
  %7389 = vst.msk [vmem:[%s3 + $0xe8] sm:$0xff] %vm7359, %v7356
  %7390 = vst.msk [vmem:[%s3 + $0xf0] sm:$0xff] %vm7359, %v7357
  %7391 = vst.msk [vmem:[%s3 + $0xf8] sm:$0xff] %vm7359, %v7358
  // Predicated region
  $region14: #{tpu_custom_call.1} parent=0 // pred_check
    _
  $region15: #{tpu_custom_call.1} parent=0 // pred_check_branch
    %7393 = sbr.rel (0) target = $region17
  $region16: #{tpu_custom_call.1} parent=0 // pred_region
    _
  $region17: #{tpu_custom_call.1} parent=0 // pred_fallthru
    _
  // Predicated region
  $region18: #{tpu_custom_call.1} parent=0 // pred_check
    _
  $region19: #{tpu_custom_call.1} parent=0 // pred_check_branch
    %7395 = sbr.rel (0) target = $region21
  $region20: #{tpu_custom_call.1} parent=0 // pred_region
    _
  $region21: #{tpu_custom_call.1} parent=0 // pred_fallthru
    _

</llo_original>
